<compile_context>
chip_gen: v7x
topology: tpu7x:2x2x1
jax: 0.10.0
libtpu: 0.0.40
codegen_flags: <defaults>
</compile_context>

<pallas_src>
import functools

import jax
import jax.numpy as jnp
from jax import lax
from jax.experimental import pallas as pl
from jax.experimental.pallas import tpu as pltpu

# 32 MiB scoped-VMEM request: plenty for the <2 MiB working set and safe on
# every generation (v7x has only 64 MiB physical VMEM per TensorCore).
_VMEM_LIMIT = 32 * 1024 * 1024


def _round_up(x, m):
    return ((x + m - 1) // m) * m


# ---------------------------------------------------------------------------
# One-time weight preparation (outside the jitted forward)
# ---------------------------------------------------------------------------
def _merged_conv_band(w, W):
    """(3,3,Cin,Cout) conv weight -> (3*W*Cin, W*Cout) merged banded matrix.

    For an H-zero-padded image x_pad (H+2, W*Cin), the 3x3 SAME conv is the
    single matmul  out[i] = concat(x_pad[i], x_pad[i+1], x_pad[i+2]) @ band
    (the zero padding along W is absorbed into the band's structural zeros).
    """
    kh, kw, Cin, Cout = w.shape
    assert kh == 3 and kw == 3, "encoder assumes 3x3 SAME convs"
    segs = []
    for di in range(kh):
        seg = jnp.zeros((W * Cin, W * Cout), w.dtype)
        for dj in range(kw):
            # S[jj, j] = 1 iff jj == j + dj - 1 (valid column taps only)
            shift = jnp.eye(W, W, k=1 - dj, dtype=w.dtype)
            seg = seg + jnp.kron(shift, w[di, dj])
        segs.append(seg)
    return jnp.concatenate(segs, axis=0)


def _tiled_bias(b, W):
    Cout = b.shape[0]
    return jnp.tile(b.reshape(1, 1, Cout),
                    (1, W, 1)).reshape(1, W * Cout).astype(jnp.float32)


def prepare_kernel_params(raw, x_dim, a_dim):
    """Convert raw params into kernel operands once: merged banded conv
    weights, lane-padded (multiple-of-128) fc/fm weights, bf16 casts."""
    _, _, W = x_dim

    def prep_encoder(e):
        z_dim = e['fc_w'].shape[1]
        Zp = _round_up(z_dim, 128)
        return {
            'band1': _merged_conv_band(e['conv1_w'], W).astype(jnp.bfloat16),
            'b1': _tiled_bias(e['conv1_b'], W),
            'band2': _merged_conv_band(e['conv2_w'], W).astype(jnp.bfloat16),
            'b2': _tiled_bias(e['conv2_b'], W),
            'fc_w': jnp.pad(e['fc_w'].astype(jnp.bfloat16),
                            ((0, 0), (0, Zp - z_dim))),
            'fc_b': jnp.pad(e['fc_b'].reshape(1, -1).astype(jnp.float32),
                            ((0, 0), (0, Zp - z_dim))),
        }

    fm = raw['fm']
    z_dim = fm['fm2_w'].shape[1]
    h_dim = fm['fm1_w'].shape[1]
    Zp = _round_up(z_dim, 128)
    Hp = _round_up(h_dim, 128)
    Ap = _round_up(a_dim, 128)
    w1 = fm['fm1_w'].astype(jnp.bfloat16)
    fm_k = {
        # fm1 rows split so the kernel never needs a concat([z, a]) in HBM.
        'w1z': jnp.pad(w1[:z_dim], ((0, Zp - z_dim), (0, Hp - h_dim))),
        'w1a': jnp.pad(w1[z_dim:], ((0, Ap - a_dim), (0, Hp - h_dim))),
        'b1': jnp.pad(fm['fm1_b'].reshape(1, -1).astype(jnp.float32),
                      ((0, 0), (0, Hp - h_dim))),
        'w2': jnp.pad(fm['fm2_w'].astype(jnp.bfloat16),
                      ((0, Hp - h_dim), (0, Zp - z_dim))),
        'b2': jnp.pad(fm['fm2_b'].reshape(1, -1).astype(jnp.float32),
                      ((0, 0), (0, Zp - z_dim))),
    }
    return {'enc': prep_encoder(raw['encoder']),
            'tgt': prep_encoder(raw['target_encoder']),
            'fm': fm_k}


# ---------------------------------------------------------------------------
# Kernel 1: fused conv1(3x3 SAME)+ReLU -> conv2(3x3 SAME)+ReLU, batch in M
# ---------------------------------------------------------------------------
def _encoder_conv_kernel(lhs1_ref, band1_ref, b1_ref, band2_ref, b2_ref,
                         h2_ref, *, H):
    # conv1: one MXU matmul for the whole batch (M = Bt*H rows).
    h1 = jnp.dot(lhs1_ref[...], band1_ref[...],
                 preferred_element_type=jnp.float32)
    h1 = jnp.maximum(h1 + b1_ref[...], 0.0).astype(jnp.bfloat16)

    # Build conv2's operand in-register: lane-concat of the +/-1-row-shifted
    # h1 slabs, zeroed at each image's top/bottom row (SAME padding in H).
    M = h1.shape[0]
    zero_row = jnp.zeros((1, h1.shape[1]), h1.dtype)
    up = jnp.concatenate([zero_row, h1[:-1, :]], axis=0)   # row r -> h1[r-1]
    dn = jnp.concatenate([h1[1:, :], zero_row], axis=0)    # row r -> h1[r+1]
    local = lax.broadcasted_iota(jnp.int32, (M, 1), 0) % H
    seg0 = jnp.where(local == 0, jnp.zeros_like(up), up)
    seg2 = jnp.where(local == H - 1, jnp.zeros_like(dn), dn)
    lhs2 = jnp.concatenate([seg0, h1, seg2], axis=-1)       # (M, 3*W*c1)

    h2 = jnp.dot(lhs2, band2_ref[...], preferred_element_type=jnp.float32)
    h2 = jnp.maximum(h2 + b2_ref[...], 0.0)
    h2_ref[...] = h2.astype(h2_ref.dtype)


def encoder_conv_apply(ep, x_nchw):
    """NCHW images -> (Bt, H*W*c2) bf16 conv activations in one pallas_call."""
    Bt, C, H, W = x_nchw.shape
    c2 = ep['band2'].shape[1] // W

    x = jnp.transpose(x_nchw, (0, 2, 3, 1)).reshape(Bt, H, W * C)
    xp = jnp.pad(x, ((0, 0), (1, 1), (0, 0)))               # pad H only
    lhs1 = jnp.concatenate([xp[:, 0:H], xp[:, 1:H + 1], xp[:, 2:H + 2]],
                           axis=-1)                          # (Bt, H, 3*W*C)
    M = Bt * H
    Mp = _round_up(M, 8)
    lhs1 = lhs1.reshape(M, 3 * W * C).astype(jnp.bfloat16)
    if Mp != M:
        lhs1 = jnp.pad(lhs1, ((0, Mp - M), (0, 0)))

    args = (lhs1, ep['band1'], ep['b1'], ep['band2'], ep['b2'])
    h2 = pl.pallas_call(
        functools.partial(_encoder_conv_kernel, H=H),
        out_shape=jax.ShapeDtypeStruct((Mp, W * c2), jnp.bfloat16),
        grid=(1,),
        in_specs=[pl.BlockSpec(a.shape, lambda i: (0, 0)) for a in args],
        out_specs=pl.BlockSpec((Mp, W * c2), lambda i: (0, 0)),
        compiler_params=pltpu.CompilerParams(
            dimension_semantics=("arbitrary",),
            vmem_limit_bytes=_VMEM_LIMIT),
    )(*args)

    # (H, W, C)-order flatten per image (see header note on fc-row ordering).
    return h2[:M].reshape(Bt, H * W * c2)


# ---------------------------------------------------------------------------
# Kernel 2 ("head"): fc (encoder + target) + forward model + losses, fused
# ---------------------------------------------------------------------------
def _head_kernel(h2a_ref, h2t_ref, fcw_ref, fcb_ref, fctw_ref, fctb_ref,
                 a_ref, w1z_ref, w1a_ref, fb1_ref, w2_ref, fb2_ref,
                 ltr_ref, loss_ref, lns_ref, *, B, hinge):
    # encoder fc for [x_t ; memories], target-encoder fc for x_tp1
    z_all = jnp.dot(h2a_ref[...], fcw_ref[...],
                    preferred_element_type=jnp.float32) + fcb_ref[...]
    z_tp1 = jnp.dot(h2t_ref[...], fctw_ref[...],
                    preferred_element_type=jnp.float32) + fctb_ref[...]
    z_t = z_all[:B]                  # (B, Zp)   padded cols are exact zeros
    z_neg = z_all[B:]                # (N, Zp)

    # forward model: z_diff = fm2(relu(fm1([z_t, a_t])))  (fm1 rows pre-split)
    h = (jnp.dot(z_t.astype(jnp.bfloat16), w1z_ref[...],
                 preferred_element_type=jnp.float32)
         + jnp.dot(a_ref[...], w1a_ref[...],
                   preferred_element_type=jnp.float32)
         + fb1_ref[...])
    h = jnp.maximum(h, 0.0).astype(jnp.bfloat16)
    z_diff = jnp.dot(h, w2_ref[...],
                     preferred_element_type=jnp.float32) + fb2_ref[...]

    # transition loss: MSE(z_t + z_diff, z_tp1), reduction='none', sum over z
    d = z_t + z_diff - z_tp1
    loss_trans = jnp.sum(d * d, axis=1, keepdims=True)               # (B,1)
    ltr_ref[...] = loss_trans

    # hinge energy via ||a-b||^2 = ||a||^2 + ||b||^2 - 2 a.b   (MXU)
    dnums = (((1,), (1,)), ((), ()))
    cross = lax.dot_general(z_t, z_neg, dnums,
                            preferred_element_type=jnp.float32)      # (B,N)
    zt_sq = jnp.sum(z_t * z_t, axis=1, keepdims=True)                # (B,1)
    ones = jnp.ones((1, z_t.shape[1]), jnp.float32)
    zn_sq = lax.dot_general(ones, z_neg * z_neg, dnums,
                            preferred_element_type=jnp.float32)      # (1,N)
    energy = zt_sq + zn_sq - 2.0 * cross                             # (B,N)
    hinge_l = jnp.mean(jnp.maximum(hinge - energy, 0.0),
                       axis=1, keepdims=True)                        # (B,1)

    # positive-example term (pos_examples_z = z_tp1, one example per z)
    pd = z_t - z_tp1
    pos_l = jnp.maximum(jnp.sum(pd * pd, axis=1, keepdims=True) - hinge, 0.0)

    loss_ns = jnp.mean(hinge_l + pos_l, keepdims=True)               # (1,1)
    lns_ref[...] = loss_ns
    loss_ref[...] = jnp.mean(loss_trans + loss_ns, keepdims=True)    # (1,1)


def head_apply(kp, h2_all, h2_tp1, a_t, B, hinge):
    enc, tgt, fm = kp['enc'], kp['tgt'], kp['fm']
    Ap = fm['w1a'].shape[0]
    a_p = jnp.pad(a_t.astype(jnp.bfloat16),
                  ((0, 0), (0, Ap - a_t.shape[1])))

    args = (h2_all, h2_tp1, enc['fc_w'], enc['fc_b'],
            tgt['fc_w'], tgt['fc_b'], a_p,
            fm['w1z'], fm['w1a'], fm['b1'], fm['w2'], fm['b2'])
    # TODO(synk): once B / n_neg grow, add a leading "parallel" batch grid
    # axis so v7x's second TensorCore shares this kernel's work.
    return pl.pallas_call(
        functools.partial(_head_kernel, B=B, hinge=float(hinge)),
        out_shape=(
            jax.ShapeDtypeStruct((B, 1), jnp.float32),
            jax.ShapeDtypeStruct((1, 1), jnp.float32),
            jax.ShapeDtypeStruct((1, 1), jnp.float32),
        ),
        grid=(1,),
        in_specs=[pl.BlockSpec(a.shape, lambda i: (0, 0)) for a in args],
        out_specs=(
            pl.BlockSpec((B, 1), lambda i: (0, 0)),
            pl.BlockSpec((1, 1), lambda i: (0, 0)),
            pl.BlockSpec((1, 1), lambda i: (0, 0)),
        ),
        compiler_params=pltpu.CompilerParams(
            dimension_semantics=("arbitrary",),
            vmem_limit_bytes=_VMEM_LIMIT),
    )(*args)


# ---------------------------------------------------------------------------
# Full forward (mirrors forward() with eval=False, neg_samples > 0)
# ---------------------------------------------------------------------------
def dcefm_forward(kparams, x_t, a_t, x_tp1, memories, hinge):
    B = x_t.shape[0]
    # x_t and the negative samples share encoder weights -> one fused pass.
    h2_all = encoder_conv_apply(kparams['enc'],
                                jnp.concatenate([x_t, memories], axis=0))
    # target encoder (deepcopy of encoder at init; logically separate weights)
    h2_tp1 = encoder_conv_apply(kparams['tgt'], x_tp1)

    lt2d, loss11, lns11 = head_apply(kparams, h2_all, h2_tp1, a_t, B, hinge)
    loss_trans = lt2d[:, 0]
    loss = loss11[0, 0]
    loss_ns = lns11[0, 0]

    # TODO(synk): train_steps counter and target-encoder soft/hard update are
    # parameter-mutation training side effects, not forward math; omitted.
    loss_dict = {
        'wm_loss': loss,
        'wm_trans_loss': jnp.mean(loss_trans),
        'wm_ns_loss': loss_ns,
    }
    return loss_trans, loss, loss_dict


# ---------------------------------------------------------------------------
# Deterministic parameter init (fresh weights, like the PyTorch module)
# ---------------------------------------------------------------------------
def init_params(key, x_dim, a_dim, z_dim, conv_channels, h_dim):
    C, H, W = x_dim
    c1, c2 = conv_channels
    ks = jax.random.split(key, 5)

    def w(k, shape, scale=0.1):
        return (scale * jax.random.normal(k, shape)).astype(jnp.float32)

    enc = {
        'conv1_w': w(ks[0], (3, 3, C, c1)),
        'conv1_b': jnp.zeros((c1,), jnp.float32),
        'conv2_w': w(ks[1], (3, 3, c1, c2)),
        'conv2_b': jnp.zeros((c2,), jnp.float32),
        'fc_w': w(ks[2], (H * W * c2, z_dim), scale=0.02),   # (H,W,C) flatten
        'fc_b': jnp.zeros((z_dim,), jnp.float32),
    }
    fm = {
        'fm1_w': w(ks[3], (z_dim + a_dim, h_dim)),
        'fm1_b': jnp.zeros((h_dim,), jnp.float32),
        'fm2_w': w(ks[4], (h_dim, z_dim)),
        'fm2_b': jnp.zeros((z_dim,), jnp.float32),
    }
    target_enc = jax.tree_util.tree_map(lambda t: t, enc)    # deepcopy at init
    return {'encoder': enc, 'target_encoder': target_enc, 'fm': fm}


# ---------------------------------------------------------------------------
# Pure-JAX f32 reference (same math / flatten convention) for a sanity check
# ---------------------------------------------------------------------------
def _reference_forward(raw, x_t, a_t, x_tp1, memories, hinge):
    def enc(p, x_nchw):
        x = jnp.transpose(x_nchw, (0, 2, 3, 1))
        dn = ('NHWC', 'HWIO', 'NHWC')
        h1 = jax.nn.relu(lax.conv_general_dilated(
            x, p['conv1_w'], (1, 1), 'SAME', dimension_numbers=dn)
            + p['conv1_b'])
        h2 = jax.nn.relu(lax.conv_general_dilated(
            h1, p['conv2_w'], (1, 1), 'SAME', dimension_numbers=dn)
            + p['conv2_b'])
        return h2.reshape(h2.shape[0], -1) @ p['fc_w'] + p['fc_b']

    B = x_t.shape[0]
    z_all = enc(raw['encoder'], jnp.concatenate([x_t, memories], axis=0))
    z_t, z_neg = z_all[:B], z_all[B:]
    z_tp1 = enc(raw['target_encoder'], x_tp1)
    fm = raw['fm']
    h = jax.nn.relu(jnp.concatenate([z_t, a_t], axis=1) @ fm['fm1_w']
                    + fm['fm1_b'])
    z_diff = h @ fm['fm2_w'] + fm['fm2_b']

    loss_trans = jnp.sum((z_t + z_diff - z_tp1) ** 2, axis=1)
    diff = z_t[:, None, :] - z_neg[None, :, :]
    energy = jnp.sum(diff ** 2, axis=2)
    hinge_l = jnp.mean(jnp.maximum(hinge - energy, 0.0), axis=1)
    pos_l = jnp.maximum(jnp.sum((z_t - z_tp1) ** 2, axis=1) - hinge, 0.0)
    loss_ns = jnp.mean(hinge_l + pos_l)
    loss = jnp.mean(loss_trans + loss_ns)
    return loss_trans, loss, loss_ns


if __name__ == "__main__":
    key = jax.random.PRNGKey(0)
    B, C, H, W = 2, 4, 16, 16
    a_dim, z_dim, h_dim, n_neg = 4, 32, 32, 8
    conv_channels = (8, 8)
    hinge = 1.0

    k1, k2, k3, k4, kp = jax.random.split(key, 5)
    x_t = jax.random.normal(k1, (B, C, H, W), jnp.float32)     # NCHW like PyTorch
    x_tp1 = jax.random.normal(k2, (B, C, H, W), jnp.float32)
    a_t = jax.random.normal(k3, (B, a_dim), jnp.float32)
    memories = jax.random.normal(k4, (n_neg, C, H, W), jnp.float32)

    raw = init_params(kp, (C, H, W), a_dim, z_dim, conv_channels, h_dim)
    kparams = prepare_kernel_params(raw, (C, H, W), a_dim)

    fwd = jax.jit(dcefm_forward, static_argnames=('hinge',))
    loss_trans, loss, loss_dict = fwd(kparams, x_t, a_t, x_tp1, memories,
                                      hinge=hinge)
    jax.block_until_ready((loss_trans, loss, loss_dict))

    # sanity check against the pure-JAX f32 reference (loose tol for bf16 MXU)
    ref_lt, ref_loss, ref_lns = _reference_forward(raw, x_t, a_t, x_tp1,
                                                   memories, hinge)

    def _close(a, b, rtol=0.12, atol=0.05):
        return bool(jnp.all(jnp.abs(a - b) <= atol + rtol * jnp.abs(b)))

    assert loss_trans.shape == (B,)
    assert bool(jnp.isfinite(loss))
    assert _close(loss_trans, ref_lt), (loss_trans, ref_lt)
    assert _close(loss, ref_loss), (loss, ref_loss)
    assert _close(loss_dict['wm_ns_loss'], ref_lns), (loss_dict['wm_ns_loss'],
                                                      ref_lns)
    print("KERNEL_OK")
</pallas_src>

<mosaic_0001>
module attributes {stable_mosaic.version = 11 : i64} {
  func.func @_encoder_conv_kernel(%arg0: i32, %arg1: memref<32x192xbf16, #tpu.memory_space<vmem>>, %arg2: memref<192x128xbf16, #tpu.memory_space<vmem>>, %arg3: memref<1x128xf32, #tpu.memory_space<vmem>>, %arg4: memref<384x128xbf16, #tpu.memory_space<vmem>>, %arg5: memref<1x128xf32, #tpu.memory_space<vmem>>, %arg6: memref<32x128xbf16, #tpu.memory_space<vmem>>) attributes {dimension_semantics = [#tpu.dimension_semantics<arbitrary>], iteration_bounds = array<i64: 1>, scalar_prefetch = 0 : i64, scratch_operands = 0 : i64, tpu.core_type = #tpu.core_type<tc>, window_params = [{pipeline_mode = #tpu.pipeline_mode<synchronous>, transform_indices = @transform_0, window_bounds = array<i64: 32, 192>}, {pipeline_mode = #tpu.pipeline_mode<synchronous>, transform_indices = @transform_1, window_bounds = array<i64: 192, 128>}, {pipeline_mode = #tpu.pipeline_mode<synchronous>, transform_indices = @transform_2, window_bounds = array<i64: 1, 128>}, {pipeline_mode = #tpu.pipeline_mode<synchronous>, transform_indices = @transform_3, window_bounds = array<i64: 384, 128>}, {pipeline_mode = #tpu.pipeline_mode<synchronous>, transform_indices = @transform_4, window_bounds = array<i64: 1, 128>}, {pipeline_mode = #tpu.pipeline_mode<synchronous>, transform_indices = @transform_5, window_bounds = array<i64: 32, 128>}]} {
    %c0 = arith.constant 0 : index
    %c0_0 = arith.constant 0 : index
    %0 = vector.load %arg1[%c0, %c0_0] : memref<32x192xbf16, #tpu.memory_space<vmem>>, vector<32x192xbf16>
    %c0_1 = arith.constant 0 : index
    %c0_2 = arith.constant 0 : index
    %1 = vector.load %arg2[%c0_1, %c0_2] : memref<192x128xbf16, #tpu.memory_space<vmem>>, vector<192x128xbf16>
    %cst = arith.constant dense<0.000000e+00> : vector<32x128xf32>
    %2 = tpu.matmul %0, %1, %cst {dimension_numbers = #tpu.dot_dimension_numbers<[1], [0], [0], [1], [0, 0, 1, 1], [], []>} : vector<32x192xbf16>, vector<192x128xbf16>, vector<32x128xf32> -> vector<32x128xf32>
    %c0_3 = arith.constant 0 : index
    %c0_4 = arith.constant 0 : index
    %3 = vector.load %arg3[%c0_3, %c0_4] : memref<1x128xf32, #tpu.memory_space<vmem>>, vector<1x128xf32>
    %4 = vector.broadcast %3 : vector<1x128xf32> to vector<32x128xf32>
    %5 = arith.addf %2, %4 : vector<32x128xf32>
    %cst_5 = arith.constant 0.000000e+00 : f32
    %6 = vector.broadcast %cst_5 : f32 to vector<32x128xf32>
    %7 = arith.maximumf %5, %6 : vector<32x128xf32>
    %8 = arith.truncf %7 : vector<32x128xf32> to vector<32x128xbf16>
    %cst_6 = arith.constant 0.000000e+00 : bf16
    %9 = vector.broadcast %cst_6 : bf16 to vector<1x128xbf16>
    %10 = vector.extract_strided_slice %8 {offsets = [0, 0], sizes = [31, 128], strides = [1, 1]} : vector<32x128xbf16> to vector<31x128xbf16>
    %11 = tpu.concatenate %9, %10 in 0 : vector<1x128xbf16>, vector<31x128xbf16> -> vector<32x128xbf16>
    %12 = vector.extract_strided_slice %8 {offsets = [1, 0], sizes = [31, 128], strides = [1, 1]} : vector<32x128xbf16> to vector<31x128xbf16>
    %13 = tpu.concatenate %12, %9 in 0 : vector<31x128xbf16>, vector<1x128xbf16> -> vector<32x128xbf16>
    %14 = tpu.iota {dimensions = array<i32: 0>} : vector<32x1xi32>
    %c16_i32 = arith.constant 16 : i32
    %c0_i32 = arith.constant 0 : i32
    %15 = arith.cmpi eq, %c16_i32, %c0_i32 : i32
    %c1_i32 = arith.constant 1 : i32
    %16 = arith.select %15, %c1_i32, %c16_i32 : i32
    %17 = vector.broadcast %16 : i32 to vector<32x1xi32>
    %18 = arith.remsi %14, %17 : vector<32x1xi32>
    %c0_i32_7 = arith.constant 0 : i32
    %19 = vector.broadcast %c0_i32_7 : i32 to vector<32x1xi32>
    %20 = arith.cmpi ne, %18, %19 : vector<32x1xi32>
    %c0_i32_8 = arith.constant 0 : i32
    %21 = vector.broadcast %c0_i32_8 : i32 to vector<32x1xi32>
    %22 = arith.cmpi slt, %18, %21 : vector<32x1xi32>
    %c0_i32_9 = arith.constant 0 : i32
    %23 = arith.cmpi slt, %16, %c0_i32_9 : i32
    %24 = vector.broadcast %23 : i1 to vector<32x1xi1>
    %25 = vector.broadcast %24 : vector<32x1xi1> to vector<32x1xi1>
    %26 = arith.xori %22, %25 : vector<32x1xi1>
    %27 = arith.andi %26, %20 : vector<32x1xi1>
    %28 = vector.broadcast %16 : i32 to vector<32x1xi32>
    %29 = arith.addi %18, %28 : vector<32x1xi32>
    %30 = arith.select %27, %29, %18 : vector<32x1xi1>, vector<32x1xi32>
    %c0_i32_10 = arith.constant 0 : i32
    %31 = vector.broadcast %c0_i32_10 : i32 to vector<32x1xi32>
    %32 = arith.cmpi eq, %30, %31 : vector<32x1xi32>
    %cst_11 = arith.constant 0.000000e+00 : bf16
    %33 = vector.broadcast %cst_11 : bf16 to vector<32x128xbf16>
    %34 = vector.shape_cast %32 : vector<32x1xi1> to vector<32x1xi1>
    %35 = vector.broadcast %34 : vector<32x1xi1> to vector<32x128xi1>
    %36 = arith.select %35, %33, %11 : vector<32x128xi1>, vector<32x128xbf16>
    %c15_i32 = arith.constant 15 : i32
    %37 = vector.broadcast %c15_i32 : i32 to vector<32x1xi32>
    %38 = arith.cmpi eq, %30, %37 : vector<32x1xi32>
    %cst_12 = arith.constant 0.000000e+00 : bf16
    %39 = vector.broadcast %cst_12 : bf16 to vector<32x128xbf16>
    %40 = vector.shape_cast %38 : vector<32x1xi1> to vector<32x1xi1>
    %41 = vector.broadcast %40 : vector<32x1xi1> to vector<32x128xi1>
    %42 = arith.select %41, %39, %13 : vector<32x128xi1>, vector<32x128xbf16>
    %43 = tpu.concatenate %36, %8, %42 in 1 : vector<32x128xbf16>, vector<32x128xbf16>, vector<32x128xbf16> -> vector<32x384xbf16>
    %c0_13 = arith.constant 0 : index
    %c0_14 = arith.constant 0 : index
    %44 = vector.load %arg4[%c0_13, %c0_14] : memref<384x128xbf16, #tpu.memory_space<vmem>>, vector<384x128xbf16>
    %cst_15 = arith.constant dense<0.000000e+00> : vector<32x128xf32>
    %45 = tpu.matmul %43, %44, %cst_15 {dimension_numbers = #tpu.dot_dimension_numbers<[1], [0], [0], [1], [0, 0, 1, 1], [], []>} : vector<32x384xbf16>, vector<384x128xbf16>, vector<32x128xf32> -> vector<32x128xf32>
    %c0_16 = arith.constant 0 : index
    %c0_17 = arith.constant 0 : index
    %46 = vector.load %arg5[%c0_16, %c0_17] : memref<1x128xf32, #tpu.memory_space<vmem>>, vector<1x128xf32>
    %47 = vector.broadcast %46 : vector<1x128xf32> to vector<32x128xf32>
    %48 = arith.addf %45, %47 : vector<32x128xf32>
    %cst_18 = arith.constant 0.000000e+00 : f32
    %49 = vector.broadcast %cst_18 : f32 to vector<32x128xf32>
    %50 = arith.maximumf %48, %49 : vector<32x128xf32>
    %51 = arith.truncf %50 : vector<32x128xf32> to vector<32x128xbf16>
    %c0_19 = arith.constant 0 : index
    %c0_20 = arith.constant 0 : index
    %52 = vector.load %arg6[%c0_19, %c0_20] : memref<32x128xbf16, #tpu.memory_space<vmem>>, vector<32x128xbf16>
    tpu.vector_store %arg6[%c0_19, %c0_20], %51 {strides = array<i32>} : memref<32x128xbf16, #tpu.memory_space<vmem>>, vector<32x128xbf16>,
    return
  }
  func.func @transform_0(%arg0: i32) -> (i32, i32) {
    %c0_i32 = arith.constant 0 : i32
    %c0_i32_0 = arith.constant 0 : i32
    %c0_i32_1 = arith.constant 0 : i32
    return %c0_i32, %c0_i32_0 : i32, i32
  }
  func.func @transform_1(%arg0: i32) -> (i32, i32) {
    %c0_i32 = arith.constant 0 : i32
    %c0_i32_0 = arith.constant 0 : i32
    %c0_i32_1 = arith.constant 0 : i32
    return %c0_i32, %c0_i32_0 : i32, i32
  }
  func.func @transform_2(%arg0: i32) -> (i32, i32) {
    %c0_i32 = arith.constant 0 : i32
    %c0_i32_0 = arith.constant 0 : i32
    %c0_i32_1 = arith.constant 0 : i32
    return %c0_i32, %c0_i32_0 : i32, i32
  }
  func.func @transform_3(%arg0: i32) -> (i32, i32) {
    %c0_i32 = arith.constant 0 : i32
    %c0_i32_0 = arith.constant 0 : i32
    %c0_i32_1 = arith.constant 0 : i32
    return %c0_i32, %c0_i32_0 : i32, i32
  }
  func.func @transform_4(%arg0: i32) -> (i32, i32) {
    %c0_i32 = arith.constant 0 : i32
    %c0_i32_0 = arith.constant 0 : i32
    %c0_i32_1 = arith.constant 0 : i32
    return %c0_i32, %c0_i32_0 : i32, i32
  }
  func.func @transform_5(%arg0: i32) -> (i32, i32) {
    %c0_i32 = arith.constant 0 : i32
    %c0_i32_0 = arith.constant 0 : i32
    %c0_i32_1 = arith.constant 0 : i32
    return %c0_i32, %c0_i32_0 : i32, i32
  }
}

module attributes {stable_mosaic.version = 11 : i64} {
  func.func @_encoder_conv_kernel(%arg0: i32, %arg1: memref<160x192xbf16, #tpu.memory_space<vmem>>, %arg2: memref<192x128xbf16, #tpu.memory_space<vmem>>, %arg3: memref<1x128xf32, #tpu.memory_space<vmem>>, %arg4: memref<384x128xbf16, #tpu.memory_space<vmem>>, %arg5: memref<1x128xf32, #tpu.memory_space<vmem>>, %arg6: memref<160x128xbf16, #tpu.memory_space<vmem>>) attributes {dimension_semantics = [#tpu.dimension_semantics<arbitrary>], iteration_bounds = array<i64: 1>, scalar_prefetch = 0 : i64, scratch_operands = 0 : i64, tpu.core_type = #tpu.core_type<tc>, window_params = [{pipeline_mode = #tpu.pipeline_mode<synchronous>, transform_indices = @transform_0, window_bounds = array<i64: 160, 192>}, {pipeline_mode = #tpu.pipeline_mode<synchronous>, transform_indices = @transform_1, window_bounds = array<i64: 192, 128>}, {pipeline_mode = #tpu.pipeline_mode<synchronous>, transform_indices = @transform_2, window_bounds = array<i64: 1, 128>}, {pipeline_mode = #tpu.pipeline_mode<synchronous>, transform_indices = @transform_3, window_bounds = array<i64: 384, 128>}, {pipeline_mode = #tpu.pipeline_mode<synchronous>, transform_indices = @transform_4, window_bounds = array<i64: 1, 128>}, {pipeline_mode = #tpu.pipeline_mode<synchronous>, transform_indices = @transform_5, window_bounds = array<i64: 160, 128>}]} {
    %c0 = arith.constant 0 : index
    %c0_0 = arith.constant 0 : index
    %0 = vector.load %arg1[%c0, %c0_0] : memref<160x192xbf16, #tpu.memory_space<vmem>>, vector<160x192xbf16>
    %c0_1 = arith.constant 0 : index
    %c0_2 = arith.constant 0 : index
    %1 = vector.load %arg2[%c0_1, %c0_2] : memref<192x128xbf16, #tpu.memory_space<vmem>>, vector<192x128xbf16>
    %cst = arith.constant dense<0.000000e+00> : vector<160x128xf32>
    %2 = tpu.matmul %0, %1, %cst {dimension_numbers = #tpu.dot_dimension_numbers<[1], [0], [0], [1], [0, 0, 1, 1], [], []>} : vector<160x192xbf16>, vector<192x128xbf16>, vector<160x128xf32> -> vector<160x128xf32>
    %c0_3 = arith.constant 0 : index
    %c0_4 = arith.constant 0 : index
    %3 = vector.load %arg3[%c0_3, %c0_4] : memref<1x128xf32, #tpu.memory_space<vmem>>, vector<1x128xf32>
    %4 = vector.broadcast %3 : vector<1x128xf32> to vector<160x128xf32>
    %5 = arith.addf %2, %4 : vector<160x128xf32>
    %cst_5 = arith.constant 0.000000e+00 : f32
    %6 = vector.broadcast %cst_5 : f32 to vector<160x128xf32>
    %7 = arith.maximumf %5, %6 : vector<160x128xf32>
    %8 = arith.truncf %7 : vector<160x128xf32> to vector<160x128xbf16>
    %cst_6 = arith.constant 0.000000e+00 : bf16
    %9 = vector.broadcast %cst_6 : bf16 to vector<1x128xbf16>
    %10 = vector.extract_strided_slice %8 {offsets = [0, 0], sizes = [159, 128], strides = [1, 1]} : vector<160x128xbf16> to vector<159x128xbf16>
    %11 = tpu.concatenate %9, %10 in 0 : vector<1x128xbf16>, vector<159x128xbf16> -> vector<160x128xbf16>
    %12 = vector.extract_strided_slice %8 {offsets = [1, 0], sizes = [159, 128], strides = [1, 1]} : vector<160x128xbf16> to vector<159x128xbf16>
    %13 = tpu.concatenate %12, %9 in 0 : vector<159x128xbf16>, vector<1x128xbf16> -> vector<160x128xbf16>
    %14 = tpu.iota {dimensions = array<i32: 0>} : vector<160x1xi32>
    %c16_i32 = arith.constant 16 : i32
    %c0_i32 = arith.constant 0 : i32
    %15 = arith.cmpi eq, %c16_i32, %c0_i32 : i32
    %c1_i32 = arith.constant 1 : i32
    %16 = arith.select %15, %c1_i32, %c16_i32 : i32
    %17 = vector.broadcast %16 : i32 to vector<160x1xi32>
    %18 = arith.remsi %14, %17 : vector<160x1xi32>
    %c0_i32_7 = arith.constant 0 : i32
    %19 = vector.broadcast %c0_i32_7 : i32 to vector<160x1xi32>
    %20 = arith.cmpi ne, %18, %19 : vector<160x1xi32>
    %c0_i32_8 = arith.constant 0 : i32
    %21 = vector.broadcast %c0_i32_8 : i32 to vector<160x1xi32>
    %22 = arith.cmpi slt, %18, %21 : vector<160x1xi32>
    %c0_i32_9 = arith.constant 0 : i32
    %23 = arith.cmpi slt, %16, %c0_i32_9 : i32
    %24 = vector.broadcast %23 : i1 to vector<160x1xi1>
    %25 = vector.broadcast %24 : vector<160x1xi1> to vector<160x1xi1>
    %26 = arith.xori %22, %25 : vector<160x1xi1>
    %27 = arith.andi %26, %20 : vector<160x1xi1>
    %28 = vector.broadcast %16 : i32 to vector<160x1xi32>
    %29 = arith.addi %18, %28 : vector<160x1xi32>
    %30 = arith.select %27, %29, %18 : vector<160x1xi1>, vector<160x1xi32>
    %c0_i32_10 = arith.constant 0 : i32
    %31 = vector.broadcast %c0_i32_10 : i32 to vector<160x1xi32>
    %32 = arith.cmpi eq, %30, %31 : vector<160x1xi32>
    %cst_11 = arith.constant 0.000000e+00 : bf16
    %33 = vector.broadcast %cst_11 : bf16 to vector<160x128xbf16>
    %34 = vector.shape_cast %32 : vector<160x1xi1> to vector<160x1xi1>
    %35 = vector.broadcast %34 : vector<160x1xi1> to vector<160x128xi1>
    %36 = arith.select %35, %33, %11 : vector<160x128xi1>, vector<160x128xbf16>
    %c15_i32 = arith.constant 15 : i32
    %37 = vector.broadcast %c15_i32 : i32 to vector<160x1xi32>
    %38 = arith.cmpi eq, %30, %37 : vector<160x1xi32>
    %cst_12 = arith.constant 0.000000e+00 : bf16
    %39 = vector.broadcast %cst_12 : bf16 to vector<160x128xbf16>
    %40 = vector.shape_cast %38 : vector<160x1xi1> to vector<160x1xi1>
    %41 = vector.broadcast %40 : vector<160x1xi1> to vector<160x128xi1>
    %42 = arith.select %41, %39, %13 : vector<160x128xi1>, vector<160x128xbf16>
    %43 = tpu.concatenate %36, %8, %42 in 1 : vector<160x128xbf16>, vector<160x128xbf16>, vector<160x128xbf16> -> vector<160x384xbf16>
    %c0_13 = arith.constant 0 : index
    %c0_14 = arith.constant 0 : index
    %44 = vector.load %arg4[%c0_13, %c0_14] : memref<384x128xbf16, #tpu.memory_space<vmem>>, vector<384x128xbf16>
    %cst_15 = arith.constant dense<0.000000e+00> : vector<160x128xf32>
    %45 = tpu.matmul %43, %44, %cst_15 {dimension_numbers = #tpu.dot_dimension_numbers<[1], [0], [0], [1], [0, 0, 1, 1], [], []>} : vector<160x384xbf16>, vector<384x128xbf16>, vector<160x128xf32> -> vector<160x128xf32>
    %c0_16 = arith.constant 0 : index
    %c0_17 = arith.constant 0 : index
    %46 = vector.load %arg5[%c0_16, %c0_17] : memref<1x128xf32, #tpu.memory_space<vmem>>, vector<1x128xf32>
    %47 = vector.broadcast %46 : vector<1x128xf32> to vector<160x128xf32>
    %48 = arith.addf %45, %47 : vector<160x128xf32>
    %cst_18 = arith.constant 0.000000e+00 : f32
    %49 = vector.broadcast %cst_18 : f32 to vector<160x128xf32>
    %50 = arith.maximumf %48, %49 : vector<160x128xf32>
    %51 = arith.truncf %50 : vector<160x128xf32> to vector<160x128xbf16>
    %c0_19 = arith.constant 0 : index
    %c0_20 = arith.constant 0 : index
    %52 = vector.load %arg6[%c0_19, %c0_20] : memref<160x128xbf16, #tpu.memory_space<vmem>>, vector<160x128xbf16>
    tpu.vector_store %arg6[%c0_19, %c0_20], %51 {strides = array<i32>} : memref<160x128xbf16, #tpu.memory_space<vmem>>, vector<160x128xbf16>,
    return
  }
  func.func @transform_0(%arg0: i32) -> (i32, i32) {
    %c0_i32 = arith.constant 0 : i32
    %c0_i32_0 = arith.constant 0 : i32
    %c0_i32_1 = arith.constant 0 : i32
    return %c0_i32, %c0_i32_0 : i32, i32
  }
  func.func @transform_1(%arg0: i32) -> (i32, i32) {
    %c0_i32 = arith.constant 0 : i32
    %c0_i32_0 = arith.constant 0 : i32
    %c0_i32_1 = arith.constant 0 : i32
    return %c0_i32, %c0_i32_0 : i32, i32
  }
  func.func @transform_2(%arg0: i32) -> (i32, i32) {
    %c0_i32 = arith.constant 0 : i32
    %c0_i32_0 = arith.constant 0 : i32
    %c0_i32_1 = arith.constant 0 : i32
    return %c0_i32, %c0_i32_0 : i32, i32
  }
  func.func @transform_3(%arg0: i32) -> (i32, i32) {
    %c0_i32 = arith.constant 0 : i32
    %c0_i32_0 = arith.constant 0 : i32
    %c0_i32_1 = arith.constant 0 : i32
    return %c0_i32, %c0_i32_0 : i32, i32
  }
  func.func @transform_4(%arg0: i32) -> (i32, i32) {
    %c0_i32 = arith.constant 0 : i32
    %c0_i32_0 = arith.constant 0 : i32
    %c0_i32_1 = arith.constant 0 : i32
    return %c0_i32, %c0_i32_0 : i32, i32
  }
  func.func @transform_5(%arg0: i32) -> (i32, i32) {
    %c0_i32 = arith.constant 0 : i32
    %c0_i32_0 = arith.constant 0 : i32
    %c0_i32_1 = arith.constant 0 : i32
    return %c0_i32, %c0_i32_0 : i32, i32
  }
}

module attributes {stable_mosaic.version = 11 : i64} {
  func.func @_head_kernel(%arg0: i32, %arg1: memref<10x2048xbf16, #tpu.memory_space<vmem>>, %arg2: memref<2x2048xbf16, #tpu.memory_space<vmem>>, %arg3: memref<2048x128xbf16, #tpu.memory_space<vmem>>, %arg4: memref<1x128xf32, #tpu.memory_space<vmem>>, %arg5: memref<2048x128xbf16, #tpu.memory_space<vmem>>, %arg6: memref<1x128xf32, #tpu.memory_space<vmem>>, %arg7: memref<2x128xbf16, #tpu.memory_space<vmem>>, %arg8: memref<128x128xbf16, #tpu.memory_space<vmem>>, %arg9: memref<128x128xbf16, #tpu.memory_space<vmem>>, %arg10: memref<1x128xf32, #tpu.memory_space<vmem>>, %arg11: memref<128x128xbf16, #tpu.memory_space<vmem>>, %arg12: memref<1x128xf32, #tpu.memory_space<vmem>>, %arg13: memref<2x1xf32, #tpu.memory_space<vmem>>, %arg14: memref<1x1xf32, #tpu.memory_space<vmem>>, %arg15: memref<1x1xf32, #tpu.memory_space<vmem>>) attributes {dimension_semantics = [#tpu.dimension_semantics<arbitrary>], iteration_bounds = array<i64: 1>, scalar_prefetch = 0 : i64, scratch_operands = 0 : i64, tpu.core_type = #tpu.core_type<tc>, window_params = [{pipeline_mode = #tpu.pipeline_mode<synchronous>, transform_indices = @transform_0, window_bounds = array<i64: 10, 2048>}, {pipeline_mode = #tpu.pipeline_mode<synchronous>, transform_indices = @transform_1, window_bounds = array<i64: 2, 2048>}, {pipeline_mode = #tpu.pipeline_mode<synchronous>, transform_indices = @transform_2, window_bounds = array<i64: 2048, 128>}, {pipeline_mode = #tpu.pipeline_mode<synchronous>, transform_indices = @transform_3, window_bounds = array<i64: 1, 128>}, {pipeline_mode = #tpu.pipeline_mode<synchronous>, transform_indices = @transform_4, window_bounds = array<i64: 2048, 128>}, {pipeline_mode = #tpu.pipeline_mode<synchronous>, transform_indices = @transform_5, window_bounds = array<i64: 1, 128>}, {pipeline_mode = #tpu.pipeline_mode<synchronous>, transform_indices = @transform_6, window_bounds = array<i64: 2, 128>}, {pipeline_mode = #tpu.pipeline_mode<synchronous>, transform_indices = @transform_7, window_bounds = array<i64: 128, 128>}, {pipeline_mode = #tpu.pipeline_mode<synchronous>, transform_indices = @transform_8, window_bounds = array<i64: 128, 128>}, {pipeline_mode = #tpu.pipeline_mode<synchronous>, transform_indices = @transform_9, window_bounds = array<i64: 1, 128>}, {pipeline_mode = #tpu.pipeline_mode<synchronous>, transform_indices = @transform_10, window_bounds = array<i64: 128, 128>}, {pipeline_mode = #tpu.pipeline_mode<synchronous>, transform_indices = @transform_11, window_bounds = array<i64: 1, 128>}, {pipeline_mode = #tpu.pipeline_mode<synchronous>, transform_indices = @transform_12, window_bounds = array<i64: 2, 1>}, {pipeline_mode = #tpu.pipeline_mode<synchronous>, transform_indices = @transform_13, window_bounds = array<i64: 1, 1>}, {pipeline_mode = #tpu.pipeline_mode<synchronous>, transform_indices = @transform_14, window_bounds = array<i64: 1, 1>}]} {
    %c0 = arith.constant 0 : index
    %c0_0 = arith.constant 0 : index
    %0 = vector.load %arg1[%c0, %c0_0] : memref<10x2048xbf16, #tpu.memory_space<vmem>>, vector<10x2048xbf16>
    %c0_1 = arith.constant 0 : index
    %c0_2 = arith.constant 0 : index
    %1 = vector.load %arg3[%c0_1, %c0_2] : memref<2048x128xbf16, #tpu.memory_space<vmem>>, vector<2048x128xbf16>
    %cst = arith.constant dense<0.000000e+00> : vector<10x128xf32>
    %2 = tpu.matmul %0, %1, %cst {dimension_numbers = #tpu.dot_dimension_numbers<[1], [0], [0], [1], [0, 0, 1, 1], [], []>} : vector<10x2048xbf16>, vector<2048x128xbf16>, vector<10x128xf32> -> vector<10x128xf32>
    %c0_3 = arith.constant 0 : index
    %c0_4 = arith.constant 0 : index
    %3 = vector.load %arg4[%c0_3, %c0_4] : memref<1x128xf32, #tpu.memory_space<vmem>>, vector<1x128xf32>
    %4 = vector.broadcast %3 : vector<1x128xf32> to vector<10x128xf32>
    %5 = arith.addf %2, %4 : vector<10x128xf32>
    %c0_5 = arith.constant 0 : index
    %c0_6 = arith.constant 0 : index
    %6 = vector.load %arg2[%c0_5, %c0_6] : memref<2x2048xbf16, #tpu.memory_space<vmem>>, vector<2x2048xbf16>
    %c0_7 = arith.constant 0 : index
    %c0_8 = arith.constant 0 : index
    %7 = vector.load %arg5[%c0_7, %c0_8] : memref<2048x128xbf16, #tpu.memory_space<vmem>>, vector<2048x128xbf16>
    %cst_9 = arith.constant dense<0.000000e+00> : vector<2x128xf32>
    %8 = tpu.matmul %6, %7, %cst_9 {dimension_numbers = #tpu.dot_dimension_numbers<[1], [0], [0], [1], [0, 0, 1, 1], [], []>} : vector<2x2048xbf16>, vector<2048x128xbf16>, vector<2x128xf32> -> vector<2x128xf32>
    %c0_10 = arith.constant 0 : index
    %c0_11 = arith.constant 0 : index
    %9 = vector.load %arg6[%c0_10, %c0_11] : memref<1x128xf32, #tpu.memory_space<vmem>>, vector<1x128xf32>
    %10 = vector.broadcast %9 : vector<1x128xf32> to vector<2x128xf32>
    %11 = arith.addf %8, %10 : vector<2x128xf32>
    %12 = vector.extract_strided_slice %5 {offsets = [0, 0], sizes = [2, 128], strides = [1, 1]} : vector<10x128xf32> to vector<2x128xf32>
    %13 = vector.extract_strided_slice %5 {offsets = [2, 0], sizes = [8, 128], strides = [1, 1]} : vector<10x128xf32> to vector<8x128xf32>
    %14 = arith.truncf %12 : vector<2x128xf32> to vector<2x128xbf16>
    %c0_12 = arith.constant 0 : index
    %c0_13 = arith.constant 0 : index
    %15 = vector.load %arg8[%c0_12, %c0_13] : memref<128x128xbf16, #tpu.memory_space<vmem>>, vector<128x128xbf16>
    %cst_14 = arith.constant dense<0.000000e+00> : vector<2x128xf32>
    %16 = tpu.matmul %14, %15, %cst_14 {dimension_numbers = #tpu.dot_dimension_numbers<[1], [0], [0], [1], [0, 0, 1, 1], [], []>} : vector<2x128xbf16>, vector<128x128xbf16>, vector<2x128xf32> -> vector<2x128xf32>
    %c0_15 = arith.constant 0 : index
    %c0_16 = arith.constant 0 : index
    %17 = vector.load %arg7[%c0_15, %c0_16] : memref<2x128xbf16, #tpu.memory_space<vmem>>, vector<2x128xbf16>
    %c0_17 = arith.constant 0 : index
    %c0_18 = arith.constant 0 : index
    %18 = vector.load %arg9[%c0_17, %c0_18] : memref<128x128xbf16, #tpu.memory_space<vmem>>, vector<128x128xbf16>
    %cst_19 = arith.constant dense<0.000000e+00> : vector<2x128xf32>
    %19 = tpu.matmul %17, %18, %cst_19 {dimension_numbers = #tpu.dot_dimension_numbers<[1], [0], [0], [1], [0, 0, 1, 1], [], []>} : vector<2x128xbf16>, vector<128x128xbf16>, vector<2x128xf32> -> vector<2x128xf32>
    %20 = arith.addf %16, %19 : vector<2x128xf32>
    %c0_20 = arith.constant 0 : index
    %c0_21 = arith.constant 0 : index
    %21 = vector.load %arg10[%c0_20, %c0_21] : memref<1x128xf32, #tpu.memory_space<vmem>>, vector<1x128xf32>
    %22 = vector.broadcast %21 : vector<1x128xf32> to vector<2x128xf32>
    %23 = arith.addf %20, %22 : vector<2x128xf32>
    %cst_22 = arith.constant 0.000000e+00 : f32
    %24 = vector.broadcast %cst_22 : f32 to vector<2x128xf32>
    %25 = arith.maximumf %23, %24 : vector<2x128xf32>
    %26 = arith.truncf %25 : vector<2x128xf32> to vector<2x128xbf16>
    %c0_23 = arith.constant 0 : index
    %c0_24 = arith.constant 0 : index
    %27 = vector.load %arg11[%c0_23, %c0_24] : memref<128x128xbf16, #tpu.memory_space<vmem>>, vector<128x128xbf16>
    %cst_25 = arith.constant dense<0.000000e+00> : vector<2x128xf32>
    %28 = tpu.matmul %26, %27, %cst_25 {dimension_numbers = #tpu.dot_dimension_numbers<[1], [0], [0], [1], [0, 0, 1, 1], [], []>} : vector<2x128xbf16>, vector<128x128xbf16>, vector<2x128xf32> -> vector<2x128xf32>
    %c0_26 = arith.constant 0 : index
    %c0_27 = arith.constant 0 : index
    %29 = vector.load %arg12[%c0_26, %c0_27] : memref<1x128xf32, #tpu.memory_space<vmem>>, vector<1x128xf32>
    %30 = vector.broadcast %29 : vector<1x128xf32> to vector<2x128xf32>
    %31 = arith.addf %28, %30 : vector<2x128xf32>
    %32 = arith.addf %12, %31 : vector<2x128xf32>
    %33 = arith.subf %32, %11 : vector<2x128xf32>
    %34 = arith.mulf %33, %33 : vector<2x128xf32>
    %cst_28 = arith.constant dense<0.000000e+00> : vector<2xf32>
    %35 = vector.multi_reduction <add>, %34, %cst_28 [1] : vector<2x128xf32> to vector<2xf32>
    %36 = vector.shape_cast %35 : vector<2xf32> to vector<2x1xf32>
    %c0_29 = arith.constant 0 : index
    %c0_30 = arith.constant 0 : index
    %37 = vector.load %arg13[%c0_29, %c0_30] : memref<2x1xf32, #tpu.memory_space<vmem>>, vector<2x1xf32>
    tpu.vector_store %arg13[%c0_29, %c0_30], %36 {strides = array<i32>} : memref<2x1xf32, #tpu.memory_space<vmem>>, vector<2x1xf32>,
    %cst_31 = arith.constant dense<0.000000e+00> : vector<2x8xf32>
    %38 = tpu.matmul %12, %13, %cst_31 {dimension_numbers = #tpu.dot_dimension_numbers<[1], [1], [0], [0], [0, 0, 1, 0], [], []>} : vector<2x128xf32>, vector<8x128xf32>, vector<2x8xf32> -> vector<2x8xf32>
    %39 = arith.mulf %12, %12 : vector<2x128xf32>
    %cst_32 = arith.constant dense<0.000000e+00> : vector<2xf32>
    %40 = vector.multi_reduction <add>, %39, %cst_32 [1] : vector<2x128xf32> to vector<2xf32>
    %41 = vector.shape_cast %40 : vector<2xf32> to vector<2x1xf32>
    %cst_33 = arith.constant 1.000000e+00 : f32
    %42 = vector.broadcast %cst_33 : f32 to vector<1x128xf32>
    %43 = arith.mulf %13, %13 : vector<8x128xf32>
    %cst_34 = arith.constant dense<0.000000e+00> : vector<1x8xf32>
    %44 = tpu.matmul %42, %43, %cst_34 {dimension_numbers = #tpu.dot_dimension_numbers<[1], [1], [0], [0], [0, 0, 1, 0], [], []>} : vector<1x128xf32>, vector<8x128xf32>, vector<1x8xf32> -> vector<1x8xf32>
    %45 = vector.broadcast %41 : vector<2x1xf32> to vector<2x8xf32>
    %46 = vector.broadcast %44 : vector<1x8xf32> to vector<2x8xf32>
    %47 = arith.addf %45, %46 : vector<2x8xf32>
    %cst_35 = arith.constant 2.000000e+00 : f32
    %48 = vector.broadcast %cst_35 : f32 to vector<2x8xf32>
    %49 = arith.mulf %48, %38 : vector<2x8xf32>
    %50 = arith.subf %47, %49 : vector<2x8xf32>
    %cst_36 = arith.constant 1.000000e+00 : f32
    %51 = vector.broadcast %cst_36 : f32 to vector<2x8xf32>
    %52 = arith.subf %51, %50 : vector<2x8xf32>
    %cst_37 = arith.constant 0.000000e+00 : f32
    %53 = vector.broadcast %cst_37 : f32 to vector<2x8xf32>
    %54 = arith.maximumf %52, %53 : vector<2x8xf32>
    %cst_38 = arith.constant dense<0.000000e+00> : vector<2xf32>
    %55 = vector.multi_reduction <add>, %54, %cst_38 [1] : vector<2x8xf32> to vector<2xf32>
    %56 = vector.shape_cast %55 : vector<2xf32> to vector<2x1xf32>
    %cst_39 = arith.constant 8.000000e+00 : f32
    %57 = vector.broadcast %cst_39 : f32 to vector<2x1xf32>
    %58 = arith.divf %56, %57 : vector<2x1xf32>
    %59 = arith.subf %12, %11 : vector<2x128xf32>
    %60 = arith.mulf %59, %59 : vector<2x128xf32>
    %cst_40 = arith.constant dense<0.000000e+00> : vector<2xf32>
    %61 = vector.multi_reduction <add>, %60, %cst_40 [1] : vector<2x128xf32> to vector<2xf32>
    %62 = vector.shape_cast %61 : vector<2xf32> to vector<2x1xf32>
    %cst_41 = arith.constant 1.000000e+00 : f32
    %63 = vector.broadcast %cst_41 : f32 to vector<2x1xf32>
    %64 = arith.subf %62, %63 : vector<2x1xf32>
    %cst_42 = arith.constant 0.000000e+00 : f32
    %65 = vector.broadcast %cst_42 : f32 to vector<2x1xf32>
    %66 = arith.maximumf %64, %65 : vector<2x1xf32>
    %67 = arith.addf %58, %66 : vector<2x1xf32>
    %68 = vector.shape_cast %67 : vector<2x1xf32> to vector<1x2x1xf32>
    %cst_43 = arith.constant dense<0.000000e+00> : vector<1xf32>
    %69 = vector.multi_reduction <add>, %68, %cst_43 [1, 2] : vector<1x2x1xf32> to vector<1xf32>
    %70 = vector.shape_cast %69 : vector<1xf32> to vector<1x1x1xf32>
    %71 = vector.extract %70[0, 0, 0] : f32 from vector<1x1x1xf32>
    %72 = vector.broadcast %71 : f32 to vector<1x1xf32>
    %cst_44 = arith.constant 2.000000e+00 : f32
    %73 = vector.broadcast %cst_44 : f32 to vector<1x1xf32>
    %74 = arith.divf %72, %73 : vector<1x1xf32>
    %c0_45 = arith.constant 0 : index
    %c0_46 = arith.constant 0 : index
    %75 = vector.load %arg15[%c0_45, %c0_46] : memref<1x1xf32, #tpu.memory_space<vmem>>, vector<1x1xf32>
    tpu.vector_store %arg15[%c0_45, %c0_46], %74 {strides = array<i32>} : memref<1x1xf32, #tpu.memory_space<vmem>>, vector<1x1xf32>,
    %76 = vector.broadcast %74 : vector<1x1xf32> to vector<2x1xf32>
    %77 = arith.addf %36, %76 : vector<2x1xf32>
    %78 = vector.shape_cast %77 : vector<2x1xf32> to vector<1x2x1xf32>
    %cst_47 = arith.constant dense<0.000000e+00> : vector<1xf32>
    %79 = vector.multi_reduction <add>, %78, %cst_47 [1, 2] : vector<1x2x1xf32> to vector<1xf32>
    %80 = vector.shape_cast %79 : vector<1xf32> to vector<1x1x1xf32>
    %81 = vector.extract %80[0, 0, 0] : f32 from vector<1x1x1xf32>
    %82 = vector.broadcast %81 : f32 to vector<1x1xf32>
    %cst_48 = arith.constant 2.000000e+00 : f32
    %83 = vector.broadcast %cst_48 : f32 to vector<1x1xf32>
    %84 = arith.divf %82, %83 : vector<1x1xf32>
    %c0_49 = arith.constant 0 : index
    %c0_50 = arith.constant 0 : index
    %85 = vector.load %arg14[%c0_49, %c0_50] : memref<1x1xf32, #tpu.memory_space<vmem>>, vector<1x1xf32>
    tpu.vector_store %arg14[%c0_49, %c0_50], %84 {strides = array<i32>} : memref<1x1xf32, #tpu.memory_space<vmem>>, vector<1x1xf32>,
    return
  }
  func.func @transform_0(%arg0: i32) -> (i32, i32) {
    %c0_i32 = arith.constant 0 : i32
    %c0_i32_0 = arith.constant 0 : i32
    %c0_i32_1 = arith.constant 0 : i32
    return %c0_i32, %c0_i32_0 : i32, i32
  }
  func.func @transform_1(%arg0: i32) -> (i32, i32) {
    %c0_i32 = arith.constant 0 : i32
    %c0_i32_0 = arith.constant 0 : i32
    %c0_i32_1 = arith.constant 0 : i32
    return %c0_i32, %c0_i32_0 : i32, i32
  }
  func.func @transform_2(%arg0: i32) -> (i32, i32) {
    %c0_i32 = arith.constant 0 : i32
    %c0_i32_0 = arith.constant 0 : i32
    %c0_i32_1 = arith.constant 0 : i32
    return %c0_i32, %c0_i32_0 : i32, i32
  }
  func.func @transform_3(%arg0: i32) -> (i32, i32) {
    %c0_i32 = arith.constant 0 : i32
    %c0_i32_0 = arith.constant 0 : i32
    %c0_i32_1 = arith.constant 0 : i32
    return %c0_i32, %c0_i32_0 : i32, i32
  }
  func.func @transform_4(%arg0: i32) -> (i32, i32) {
    %c0_i32 = arith.constant 0 : i32
    %c0_i32_0 = arith.constant 0 : i32
    %c0_i32_1 = arith.constant 0 : i32
    return %c0_i32, %c0_i32_0 : i32, i32
  }
  func.func @transform_5(%arg0: i32) -> (i32, i32) {
    %c0_i32 = arith.constant 0 : i32
    %c0_i32_0 = arith.constant 0 : i32
    %c0_i32_1 = arith.constant 0 : i32
    return %c0_i32, %c0_i32_0 : i32, i32
  }
  func.func @transform_6(%arg0: i32) -> (i32, i32) {
    %c0_i32 = arith.constant 0 : i32
    %c0_i32_0 = arith.constant 0 : i32
    %c0_i32_1 = arith.constant 0 : i32
    return %c0_i32, %c0_i32_0 : i32, i32
  }
  func.func @transform_7(%arg0: i32) -> (i32, i32) {
    %c0_i32 = arith.constant 0 : i32
    %c0_i32_0 = arith.constant 0 : i32
    %c0_i32_1 = arith.constant 0 : i32
    return %c0_i32, %c0_i32_0 : i32, i32
  }
  func.func @transform_8(%arg0: i32) -> (i32, i32) {
    %c0_i32 = arith.constant 0 : i32
    %c0_i32_0 = arith.constant 0 : i32
    %c0_i32_1 = arith.constant 0 : i32
    return %c0_i32, %c0_i32_0 : i32, i32
  }
  func.func @transform_9(%arg0: i32) -> (i32, i32) {
    %c0_i32 = arith.constant 0 : i32
    %c0_i32_0 = arith.constant 0 : i32
    %c0_i32_1 = arith.constant 0 : i32
    return %c0_i32, %c0_i32_0 : i32, i32
  }
  func.func @transform_10(%arg0: i32) -> (i32, i32) {
    %c0_i32 = arith.constant 0 : i32
    %c0_i32_0 = arith.constant 0 : i32
    %c0_i32_1 = arith.constant 0 : i32
    return %c0_i32, %c0_i32_0 : i32, i32
  }
  func.func @transform_11(%arg0: i32) -> (i32, i32) {
    %c0_i32 = arith.constant 0 : i32
    %c0_i32_0 = arith.constant 0 : i32
    %c0_i32_1 = arith.constant 0 : i32
    return %c0_i32, %c0_i32_0 : i32, i32
  }
  func.func @transform_12(%arg0: i32) -> (i32, i32) {
    %c0_i32 = arith.constant 0 : i32
    %c0_i32_0 = arith.constant 0 : i32
    %c0_i32_1 = arith.constant 0 : i32
    return %c0_i32, %c0_i32_0 : i32, i32
  }
  func.func @transform_13(%arg0: i32) -> (i32, i32) {
    %c0_i32 = arith.constant 0 : i32
    %c0_i32_0 = arith.constant 0 : i32
    %c0_i32_1 = arith.constant 0 : i32
    return %c0_i32, %c0_i32_0 : i32, i32
  }
  func.func @transform_14(%arg0: i32) -> (i32, i32) {
    %c0_i32 = arith.constant 0 : i32
    %c0_i32_0 = arith.constant 0 : i32
    %c0_i32_1 = arith.constant 0 : i32
    return %c0_i32, %c0_i32_0 : i32, i32
  }
}

</mosaic_0001>

<llo_original>
// kernel: dcefm_forward.4
$region0: #{dcefm_forward.4}
  #allocation0 [shape = 'u32[]', space=smem, size = 0x4, offset = 0x4, fixed_abs, tag = 'smem constant byte address 0x4 - core index']
  #allocation1 [shape = 'u32[144,128]{1,0:T(1,128)}', space=vmem, size = 0x12000, scoped, tag = 'internal scratch']
  %s0 = inlined_call_operand.vmem [shape: bf16[32,192], index: 0, kind: input, shape index: {}]
  %s1 = inlined_call_operand.vmem [shape: bf16[192,128], index: 1, kind: input, shape index: {}]
  %s2 = inlined_call_operand.vmem [shape: f32[1,128], index: 2, kind: input, shape index: {}]
  %s3 = inlined_call_operand.vmem [shape: bf16[384,128], index: 3, kind: input, shape index: {}]
  %s4 = inlined_call_operand.vmem [shape: f32[1,128], index: 4, kind: input, shape index: {}]
  %s5 = inlined_call_operand.vmem [shape: bf16[32,128], index: 5, kind: output, shape index: {}]
  %s6 = sld [smem:[#allocation0]]
  $region30: #{dcefm_forward.4} parent=0
    _
  %s8 = ssub.s32 1, %s6
  %s9 = scalar_select 0, %s8, %s6
  // Predicated region
  $region2: #{dcefm_forward.4} parent=0 // pred_check
    _
  $region3: #{dcefm_forward.4} parent=0 // pred_check_branch
    %11 = sbr.rel (0) target = $region5
  $region4: #{dcefm_forward.4} parent=0 // pred_region
    _
  $region5: #{dcefm_forward.4} parent=0 // pred_fallthru
    _
  // Predicated region
  $region6: #{dcefm_forward.4} parent=0 // pred_check
    _
  $region7: #{dcefm_forward.4} parent=0 // pred_check_branch
    %13 = sbr.rel (0) target = $region9
  $region8: #{dcefm_forward.4} parent=0 // pred_region
    _
  $region9: #{dcefm_forward.4} parent=0 // pred_fallthru
    _
  // Predicated region
  $region10: #{dcefm_forward.4} parent=0 // pred_check
    _
  $region11: #{dcefm_forward.4} parent=0 // pred_check_branch
    %15 = sbr.rel (0) target = $region13
  $region12: #{dcefm_forward.4} parent=0 // pred_region
    _
  $region13: #{dcefm_forward.4} parent=0 // pred_fallthru
    _
  // Predicated region
  $region14: #{dcefm_forward.4} parent=0 // pred_check
    _
  $region15: #{dcefm_forward.4} parent=0 // pred_check_branch
    %17 = sbr.rel (0) target = $region17
  $region16: #{dcefm_forward.4} parent=0 // pred_region
    _
  $region17: #{dcefm_forward.4} parent=0 // pred_fallthru
    _
  // Predicated region
  $region18: #{dcefm_forward.4} parent=0 // pred_check
    _
  $region19: #{dcefm_forward.4} parent=0 // pred_check_branch
    %19 = sbr.rel (0) target = $region21
  $region20: #{dcefm_forward.4} parent=0 // pred_region
    _
  $region21: #{dcefm_forward.4} parent=0 // pred_fallthru
    _
  %v23 = vld [vmem:[%s0] sm:$0xff]
  %v24 = vld [vmem:[%s0 + $0x8] sm:$0xff]
  %v25 = vld [vmem:[%s0 + $0x10] sm:$0xff]
  %v26 = vld [vmem:[%s0 + $0x18] sm:$0xff]
  %v27 = vld [vmem:[%s1] sm:$0xf]
  %v28 = vld [vmem:[%s1 + $0x4] sm:$0xf]
  %v29 = vld [vmem:[%s1 + $0x8] sm:$0xf]
  %v30 = vld [vmem:[%s1 + $0xc] sm:$0xf]
  %v31 = vld [vmem:[%s1 + $0x10] sm:$0xf]
  %v32 = vld [vmem:[%s1 + $0x14] sm:$0xf]
  %v33 = vld [vmem:[%s1 + $0x18] sm:$0xf]
  %v34 = vld [vmem:[%s1 + $0x1c] sm:$0xf]
  %v35 = vld [vmem:[%s1 + $0x20] sm:$0xf]
  %v36 = vld [vmem:[%s1 + $0x24] sm:$0xf]
  %v37 = vld [vmem:[%s1 + $0x28] sm:$0xf]
  %v38 = vld [vmem:[%s1 + $0x2c] sm:$0xf]
  %v39 = vld [vmem:[%s1 + $0x30] sm:$0xf]
  %v40 = vld [vmem:[%s1 + $0x34] sm:$0xf]
  %v41 = vld [vmem:[%s1 + $0x38] sm:$0xf]
  %v42 = vld [vmem:[%s1 + $0x3c] sm:$0xf]
  %v43 = vld [vmem:[%s1 + $0x40] sm:$0xf]
  %v44 = vld [vmem:[%s1 + $0x44] sm:$0xf]
  %v45 = vld [vmem:[%s1 + $0x48] sm:$0xf]
  %v46 = vld [vmem:[%s1 + $0x4c] sm:$0xf]
  %v47 = vld [vmem:[%s1 + $0x50] sm:$0xf]
  %v48 = vld [vmem:[%s1 + $0x54] sm:$0xf]
  %v49 = vld [vmem:[%s1 + $0x58] sm:$0xf]
  %v50 = vld [vmem:[%s1 + $0x5c] sm:$0xf]
  %v51 = vld [vmem:[%s2] sm:$0x1]
  %v53 = vlaneseq
  %v54 = vshrl.u32 %v53, 7
  %v55 = vsub.s32 0, %v54
  %v56 = vrot.slane %v51, %v55
  %v62 = vunpack.c.l.b16 %v23
  %v63 = vunpack.c.h.b16 %v23
  %v64 = vunpack.c.l.b16 %v24
  %v65 = vunpack.c.h.b16 %v24
  %v66 = vunpack.c.l.b16 %v25
  %v67 = vunpack.c.h.b16 %v25
  %v68 = vunpack.c.l.b16 %v26
  %v69 = vunpack.c.h.b16 %v26
  %v70 = vpack.c.b16 %v64, %v62
  %v71 = vpack.c.b16 %v65, %v63
  %v72 = vpack.c.b16 %v68, %v66
  %v73 = vpack.c.b16 %v69, %v67
  %v100 = vunpack.c.l.b16 %v27
  %v101 = vunpack.c.l.b16 %v28
  %v102 = vunpack.c.l.b16 %v29
  %v103 = vunpack.c.l.b16 %v30
  %v104 = vunpack.c.l.b16 %v31
  %v105 = vunpack.c.l.b16 %v32
  %v106 = vunpack.c.l.b16 %v33
  %v107 = vunpack.c.l.b16 %v34
  %v108 = vunpack.c.l.b16 %v35
  %v109 = vunpack.c.l.b16 %v36
  %v110 = vunpack.c.l.b16 %v37
  %v111 = vunpack.c.l.b16 %v38
  %v112 = vunpack.c.l.b16 %v39
  %v113 = vunpack.c.l.b16 %v40
  %v114 = vunpack.c.l.b16 %v41
  %v115 = vunpack.c.l.b16 %v42
  %v116 = vunpack.c.l.b16 %v43
  %v117 = vunpack.c.l.b16 %v44
  %v118 = vunpack.c.l.b16 %v45
  %v119 = vunpack.c.l.b16 %v46
  %v120 = vunpack.c.l.b16 %v47
  %v121 = vunpack.c.l.b16 %v48
  %v122 = vunpack.c.l.b16 %v49
  %v123 = vunpack.c.l.b16 %v50
  %v124 = vpack.c.b16 %v101, %v100
  %v125 = vpack.c.b16 %v103, %v102
  %v126 = vpack.c.b16 %v105, %v104
  %v127 = vpack.c.b16 %v107, %v106
  %v128 = vpack.c.b16 %v109, %v108
  %v129 = vpack.c.b16 %v111, %v110
  %v130 = vpack.c.b16 %v113, %v112
  %v131 = vpack.c.b16 %v115, %v114
  %v132 = vpack.c.b16 %v117, %v116
  %v133 = vpack.c.b16 %v119, %v118
  %v134 = vpack.c.b16 %v121, %v120
  %v135 = vpack.c.b16 %v123, %v122
  %vm148 = vcmask 523264
  %v150 = vsel %vm148, %v71, 0
  %v153 = vsel %vm148, %v73, 0
  %155 = vmatprep.subr.bf16.mxu0 0
  %156 = vmatpush1.bf16.msra.mxu0 %v124
  %157 = vmatprep.subr.bf16.mxu0 0
  %158 = vmatpush1.bf16.msra.mxu0 %v125
  %159 = vmatprep.subr.bf16.mxu0 0
  %160 = vmatpush1.bf16.msra.mxu0 %v126
  %161 = vmatprep.subr.bf16.mxu0 0
  %162 = vmatpush1.bf16.msra.mxu0 %v127
  %163 = vmatprep.subr.bf16.mxu0 0
  %164 = vmatpush1.bf16.msra.mxu0 %v128
  %165 = vmatprep.subr.bf16.mxu0 0
  %166 = vmatpush1.bf16.msra.mxu0 %v129
  %167 = vmatprep.subr.bf16.mxu0 0
  %168 = vmatpush1.bf16.msra.mxu0 %v130
  %169 = vmatprep.subr.bf16.mxu0 0
  %170 = vmatpush1.bf16.msra.mxu0 %v131
  %171 = vmatprep.subr.bf16.mxu0 0
  %172 = vmatpush1.bf16.msra.mxu0 %v132
  %173 = vmatprep.subr.bf16.mxu0 0
  %174 = vmatpush1.bf16.msra.mxu0 %v133
  %175 = vmatprep.subr.bf16.mxu0 0
  %176 = vmatpush1.bf16.msra.mxu0 %v134
  %177 = vmatprep.subr.bf16.mxu0 0
  %178 = vmatpush1.bf16.msra.mxu0 %v135
  %179 = vmatprep.subr.bf16.mxu0 0
  %180 = vmatpush1.bf16.msra.mxu0 0
  %181 = vmatprep.subr.bf16.mxu0 0
  %182 = vmatpush1.bf16.msra.mxu0 0
  %183 = vmatprep.subr.bf16.mxu0 0
  %184 = vmatpush1.bf16.msra.mxu0 0
  %185 = vmatprep.subr.bf16.mxu0 0
  %186 = vmatpush1.bf16.msra.mxu0 0
  %187 = vmatprep.mubr.bf16.mxu0 %v150
  %188 = vmatmul.mubr.bf16.gmra.mrb[0].mxu0 %v70
  %v189 = vpop.f32.mrb[0].mxu0
  %v190 = vadd.f32 %v56, %v189
  %v191 = vpop.f32.mrb[0].mxu0
  %v192 = vpop.f32.mrb[0].mxu0
  %v193 = vadd.f32 %v56, %v192
  %v194 = vpop.f32.mrb[0].mxu0
  %195 = vmatprep.mubr.bf16.mxu0 %v153
  %196 = vmatmul.mubr.bf16.gmra.mrb[0].mxu0 %v72
  %v197 = vpop.f32.mrb[0].mxu0
  %v198 = vadd.f32 %v56, %v197
  %v199 = vpop.f32.mrb[0].mxu0
  %v200 = vpop.f32.mrb[0].mxu0
  %v201 = vadd.f32 %v56, %v200
  %v202 = vpop.f32.mrb[0].mxu0
  %203 = vdwg.mxu0
  %v204 = vmax.f32 %v190, 0.0
  %v205 = vmax.f32 %v193, 0.0
  %v206 = vmax.f32 %v198, 0.0
  %v207 = vmax.f32 %v201, 0.0
  %v208 = vpack.c.bf16 %v205, %v204
  %v209 = vpack.c.bf16 %v207, %v206
  %vm210 = vsmask.f32 256
  %v212 = vshrl.u32 %v208, 16
  %v214 = vrot.slane %v212, 7
  %v215 = vshll.u32 %v208, 16
  %v217 = vor.u32 %v214, %v215
  %v219 = vshrl.u32 %v209, 16
  %v221 = vrot.slane %v219, 7
  %v222 = vshll.u32 %v209, 16
  %v224 = vor.u32 %v221, %v222
  %v225 = vsel %vm210, %v214, %v224
  %vm228 = vcmask 1040384
  %vm229 = vmand %vm228, %vm210
  %v230 = vsel %vm229, 0, %v217
  %vm231 = vsmask.f32 7424
  %v232 = vrot.slane %v215, 1
  %v233 = vor.u32 %v212, %v232
  %v234 = vrot.slane %v222, 1
  %v235 = vsel %vm231, %v233, %v234
  %v236 = vor.u32 %v219, %v234
  %vm239 = vcmask 1047552
  %vm240 = vmand %vm239, %vm231
  %v241 = vsel %vm240, %v236, 0
  %v242 = vlaneseq
  %v243 = vshrl.u32 %v242, 7
  %v244 = vadd.s32 %v243, 8
  %v245 = vadd.s32 %v243, 16
  %v246 = vadd.s32 %v243, 24
  %vm247 = vcmp.lt.s32.totalorder %v243, 0
  %v248 = vsub.s32 0, %v243
  %v249 = vsel %vm247, %v248, %v243
  %v250 = vshrl.u32 %v249, 4
  %v251 = vand.u32 %v249, 15
  %v252 = vsub.s32 0, %v251
  %v253 = vsel %vm247, %v252, %v251
  %vm254 = vcmp.lt.s32.totalorder %v244, 0
  %v255 = vsub.s32 0, %v244
  %v256 = vsel %vm254, %v255, %v244
  %v257 = vshrl.u32 %v256, 4
  %v258 = vand.u32 %v256, 15
  %v259 = vsub.s32 0, %v258
  %v260 = vsel %vm254, %v259, %v258
  %vm261 = vcmp.lt.s32.totalorder %v245, 0
  %v262 = vsub.s32 0, %v245
  %v263 = vsel %vm261, %v262, %v245
  %v264 = vshrl.u32 %v263, 4
  %v265 = vand.u32 %v263, 15
  %v266 = vsub.s32 0, %v265
  %v267 = vsel %vm261, %v266, %v265
  %vm268 = vcmp.lt.s32.totalorder %v246, 0
  %v269 = vsub.s32 0, %v246
  %v270 = vsel %vm268, %v269, %v246
  %v271 = vshrl.u32 %v270, 4
  %v272 = vand.u32 %v270, 15
  %v273 = vsub.s32 0, %v272
  %v274 = vsel %vm268, %v273, %v272
  %vm275 = vcmp.ne.s32.totalorder %v253, 0
  %vm276 = vcmp.ne.s32.totalorder %v260, 0
  %vm277 = vcmp.ne.s32.totalorder %v267, 0
  %vm278 = vcmp.ne.s32.totalorder %v274, 0
  %vm279 = vcmp.lt.s32.totalorder %v253, 0
  %vm280 = vcmp.lt.s32.totalorder %v260, 0
  %vm281 = vcmp.lt.s32.totalorder %v267, 0
  %vm282 = vcmp.lt.s32.totalorder %v274, 0
  %vm283 = vmand %vm279, %vm275
  %vm284 = vmand %vm280, %vm276
  %vm285 = vmand %vm281, %vm277
  %vm286 = vmand %vm282, %vm278
  %v287 = vadd.s32 %v253, 16
  %v288 = vadd.s32 %v260, 16
  %v289 = vadd.s32 %v267, 16
  %v290 = vadd.s32 %v274, 16
  %v291 = vsel %vm283, %v287, %v253
  %v292 = vsel %vm284, %v288, %v260
  %v293 = vsel %vm285, %v289, %v267
  %v294 = vsel %vm286, %v290, %v274
  %vm295 = vcmp.eq.s32.totalorder %v291, 0
  %vm296 = vcmp.eq.s32.totalorder %v292, 0
  %vm297 = vcmp.eq.s32.totalorder %v293, 0
  %vm298 = vcmp.eq.s32.totalorder %v294, 0
  %v299 = vsel %vm295, 1, 0
  %v300 = vsel %vm296, 1, 0
  %v301 = vsel %vm297, 1, 0
  %v302 = vsel %vm298, 1, 0
  %vm303 = vcmp.eq.s32.totalorder %v299, 1
  %vm304 = vcmp.eq.s32.totalorder %v300, 1
  %vm305 = vcmp.eq.s32.totalorder %v301, 1
  %vm306 = vcmp.eq.s32.totalorder %v302, 1
  %vm307 = vmpackc.low %vm303, %vm303
  %vm308 = vmpackc.low %vm304, %vm304
  %vm309 = vmpackc.low %vm305, %vm305
  %vm310 = vmpackc.low %vm306, %vm306
  %v311 = vsel %vm307, 65537, 0
  %v312 = vsel %vm308, 65537, 0
  %v313 = vsel %vm309, 65537, 0
  %v314 = vsel %vm310, 65537, 0
  %v315 = vunpack.c.l.b16 %v311
  %v316 = vunpack.c.l.b16 %v312
  %v317 = vunpack.c.l.b16 %v313
  %v318 = vunpack.c.l.b16 %v314
  %v319 = vpack.c.b16 %v316, %v315
  %v320 = vpack.c.b16 %v318, %v317
  %vm321 = vcmp.ne.s16.totalorder %v319, 0
  %vm322 = vcmp.ne.s16.totalorder %v320, 0
  %v323 = vsel %vm321, 0, %v230
  %v324 = vsel %vm322, 0, %v225
  %vm325 = vcmp.eq.s32.totalorder %v291, 15
  %vm326 = vcmp.eq.s32.totalorder %v292, 15
  %vm327 = vcmp.eq.s32.totalorder %v293, 15
  %vm328 = vcmp.eq.s32.totalorder %v294, 15
  %v329 = vsel %vm325, 1, 0
  %v330 = vsel %vm326, 1, 0
  %v331 = vsel %vm327, 1, 0
  %v332 = vsel %vm328, 1, 0
  %vm333 = vcmp.eq.s32.totalorder %v329, 1
  %vm334 = vcmp.eq.s32.totalorder %v330, 1
  %vm335 = vcmp.eq.s32.totalorder %v331, 1
  %vm336 = vcmp.eq.s32.totalorder %v332, 1
  %vm337 = vmpackc.low %vm333, %vm333
  %vm338 = vmpackc.low %vm334, %vm334
  %vm339 = vmpackc.low %vm335, %vm335
  %vm340 = vmpackc.low %vm336, %vm336
  %v341 = vsel %vm337, 65537, 0
  %v342 = vsel %vm338, 65537, 0
  %v343 = vsel %vm339, 65537, 0
  %v344 = vsel %vm340, 65537, 0
  %v345 = vunpack.c.l.b16 %v341
  %v346 = vunpack.c.l.b16 %v342
  %v347 = vunpack.c.l.b16 %v343
  %v348 = vunpack.c.l.b16 %v344
  %v349 = vpack.c.b16 %v346, %v345
  %v350 = vpack.c.b16 %v348, %v347
  %vm351 = vcmp.ne.s16.totalorder %v349, 0
  %vm352 = vcmp.ne.s16.totalorder %v350, 0
  %v353 = vsel %vm351, 0, %v235
  %v354 = vsel %vm352, 0, %v241
  %v355 = vld [vmem:[%s3] sm:$0xf]
  %v356 = vld [vmem:[%s3 + $0x4] sm:$0xf]
  %v357 = vld [vmem:[%s3 + $0x8] sm:$0xf]
  %v358 = vld [vmem:[%s3 + $0xc] sm:$0xf]
  %v359 = vld [vmem:[%s3 + $0x10] sm:$0xf]
  %v360 = vld [vmem:[%s3 + $0x14] sm:$0xf]
  %v361 = vld [vmem:[%s3 + $0x18] sm:$0xf]
  %v362 = vld [vmem:[%s3 + $0x1c] sm:$0xf]
  %v363 = vld [vmem:[%s3 + $0x20] sm:$0xf]
  %v364 = vld [vmem:[%s3 + $0x24] sm:$0xf]
  %v365 = vld [vmem:[%s3 + $0x28] sm:$0xf]
  %v366 = vld [vmem:[%s3 + $0x2c] sm:$0xf]
  %v367 = vld [vmem:[%s3 + $0x30] sm:$0xf]
  %v368 = vld [vmem:[%s3 + $0x34] sm:$0xf]
  %v369 = vld [vmem:[%s3 + $0x38] sm:$0xf]
  %v370 = vld [vmem:[%s3 + $0x3c] sm:$0xf]
  %v371 = vld [vmem:[%s3 + $0x40] sm:$0xf]
  %v372 = vld [vmem:[%s3 + $0x44] sm:$0xf]
  %v373 = vld [vmem:[%s3 + $0x48] sm:$0xf]
  %v374 = vld [vmem:[%s3 + $0x4c] sm:$0xf]
  %v375 = vld [vmem:[%s3 + $0x50] sm:$0xf]
  %v376 = vld [vmem:[%s3 + $0x54] sm:$0xf]
  %v377 = vld [vmem:[%s3 + $0x58] sm:$0xf]
  %v378 = vld [vmem:[%s3 + $0x5c] sm:$0xf]
  %v379 = vld [vmem:[%s3 + $0x60] sm:$0xf]
  %v380 = vld [vmem:[%s3 + $0x64] sm:$0xf]
  %v381 = vld [vmem:[%s3 + $0x68] sm:$0xf]
  %v382 = vld [vmem:[%s3 + $0x6c] sm:$0xf]
  %v383 = vld [vmem:[%s3 + $0x70] sm:$0xf]
  %v384 = vld [vmem:[%s3 + $0x74] sm:$0xf]
  %v385 = vld [vmem:[%s3 + $0x78] sm:$0xf]
  %v386 = vld [vmem:[%s3 + $0x7c] sm:$0xf]
  %v387 = vld [vmem:[%s3 + $0x80] sm:$0xf]
  %v388 = vld [vmem:[%s3 + $0x84] sm:$0xf]
  %v389 = vld [vmem:[%s3 + $0x88] sm:$0xf]
  %v390 = vld [vmem:[%s3 + $0x8c] sm:$0xf]
  %v391 = vld [vmem:[%s3 + $0x90] sm:$0xf]
  %v392 = vld [vmem:[%s3 + $0x94] sm:$0xf]
  %v393 = vld [vmem:[%s3 + $0x98] sm:$0xf]
  %v394 = vld [vmem:[%s3 + $0x9c] sm:$0xf]
  %v395 = vld [vmem:[%s3 + $0xa0] sm:$0xf]
  %v396 = vld [vmem:[%s3 + $0xa4] sm:$0xf]
  %v397 = vld [vmem:[%s3 + $0xa8] sm:$0xf]
  %v398 = vld [vmem:[%s3 + $0xac] sm:$0xf]
  %v399 = vld [vmem:[%s3 + $0xb0] sm:$0xf]
  %v400 = vld [vmem:[%s3 + $0xb4] sm:$0xf]
  %v401 = vld [vmem:[%s3 + $0xb8] sm:$0xf]
  %v402 = vld [vmem:[%s3 + $0xbc] sm:$0xf]
  %v403 = vld [vmem:[%s4] sm:$0x1]
  %v405 = vlaneseq
  %v406 = vshrl.u32 %v405, 7
  %v407 = vsub.s32 0, %v406
  %v408 = vrot.slane %v403, %v407
  %v458 = vunpack.c.l.b16 %v355
  %v459 = vunpack.c.l.b16 %v356
  %v460 = vunpack.c.l.b16 %v357
  %v461 = vunpack.c.l.b16 %v358
  %v462 = vunpack.c.l.b16 %v359
  %v463 = vunpack.c.l.b16 %v360
  %v464 = vunpack.c.l.b16 %v361
  %v465 = vunpack.c.l.b16 %v362
  %v466 = vunpack.c.l.b16 %v363
  %v467 = vunpack.c.l.b16 %v364
  %v468 = vunpack.c.l.b16 %v365
  %v469 = vunpack.c.l.b16 %v366
  %v470 = vunpack.c.l.b16 %v367
  %v471 = vunpack.c.l.b16 %v368
  %v472 = vunpack.c.l.b16 %v369
  %v473 = vunpack.c.l.b16 %v370
  %v474 = vunpack.c.l.b16 %v371
  %v475 = vunpack.c.l.b16 %v372
  %v476 = vunpack.c.l.b16 %v373
  %v477 = vunpack.c.l.b16 %v374
  %v478 = vunpack.c.l.b16 %v375
  %v479 = vunpack.c.l.b16 %v376
  %v480 = vunpack.c.l.b16 %v377
  %v481 = vunpack.c.l.b16 %v378
  %v482 = vunpack.c.l.b16 %v379
  %v483 = vunpack.c.l.b16 %v380
  %v484 = vunpack.c.l.b16 %v381
  %v485 = vunpack.c.l.b16 %v382
  %v486 = vunpack.c.l.b16 %v383
  %v487 = vunpack.c.l.b16 %v384
  %v488 = vunpack.c.l.b16 %v385
  %v489 = vunpack.c.l.b16 %v386
  %v490 = vunpack.c.l.b16 %v387
  %v491 = vunpack.c.l.b16 %v388
  %v492 = vunpack.c.l.b16 %v389
  %v493 = vunpack.c.l.b16 %v390
  %v494 = vunpack.c.l.b16 %v391
  %v495 = vunpack.c.l.b16 %v392
  %v496 = vunpack.c.l.b16 %v393
  %v497 = vunpack.c.l.b16 %v394
  %v498 = vunpack.c.l.b16 %v395
  %v499 = vunpack.c.l.b16 %v396
  %v500 = vunpack.c.l.b16 %v397
  %v501 = vunpack.c.l.b16 %v398
  %v502 = vunpack.c.l.b16 %v399
  %v503 = vunpack.c.l.b16 %v400
  %v504 = vunpack.c.l.b16 %v401
  %v505 = vunpack.c.l.b16 %v402
  %v506 = vpack.c.b16 %v459, %v458
  %v507 = vpack.c.b16 %v461, %v460
  %v508 = vpack.c.b16 %v463, %v462
  %v509 = vpack.c.b16 %v465, %v464
  %v510 = vpack.c.b16 %v467, %v466
  %v511 = vpack.c.b16 %v469, %v468
  %v512 = vpack.c.b16 %v471, %v470
  %v513 = vpack.c.b16 %v473, %v472
  %v514 = vpack.c.b16 %v475, %v474
  %v515 = vpack.c.b16 %v477, %v476
  %v516 = vpack.c.b16 %v479, %v478
  %v517 = vpack.c.b16 %v481, %v480
  %v518 = vpack.c.b16 %v483, %v482
  %v519 = vpack.c.b16 %v485, %v484
  %v520 = vpack.c.b16 %v487, %v486
  %v521 = vpack.c.b16 %v489, %v488
  %v522 = vpack.c.b16 %v491, %v490
  %v523 = vpack.c.b16 %v493, %v492
  %v524 = vpack.c.b16 %v495, %v494
  %v525 = vpack.c.b16 %v497, %v496
  %v526 = vpack.c.b16 %v499, %v498
  %v527 = vpack.c.b16 %v501, %v500
  %v528 = vpack.c.b16 %v503, %v502
  %v529 = vpack.c.b16 %v505, %v504
  %554 = vmatprep.subr.bf16.mxu0 0
  %555 = vmatpush1.bf16.msra.mxu0 %v506
  %556 = vmatprep.subr.bf16.mxu0 0
  %557 = vmatpush1.bf16.msra.mxu0 %v507
  %558 = vmatprep.subr.bf16.mxu0 0
  %559 = vmatpush1.bf16.msra.mxu0 %v508
  %560 = vmatprep.subr.bf16.mxu0 0
  %561 = vmatpush1.bf16.msra.mxu0 %v509
  %562 = vmatprep.subr.bf16.mxu0 0
  %563 = vmatpush1.bf16.msra.mxu0 %v510
  %564 = vmatprep.subr.bf16.mxu0 0
  %565 = vmatpush1.bf16.msra.mxu0 %v511
  %566 = vmatprep.subr.bf16.mxu0 0
  %567 = vmatpush1.bf16.msra.mxu0 %v512
  %568 = vmatprep.subr.bf16.mxu0 0
  %569 = vmatpush1.bf16.msra.mxu0 %v513
  %570 = vmatprep.subr.bf16.mxu0 0
  %571 = vmatpush1.bf16.msra.mxu0 %v514
  %572 = vmatprep.subr.bf16.mxu0 0
  %573 = vmatpush1.bf16.msra.mxu0 %v515
  %574 = vmatprep.subr.bf16.mxu0 0
  %575 = vmatpush1.bf16.msra.mxu0 %v516
  %576 = vmatprep.subr.bf16.mxu0 0
  %577 = vmatpush1.bf16.msra.mxu0 %v517
  %578 = vmatprep.subr.bf16.mxu0 0
  %579 = vmatpush1.bf16.msra.mxu0 %v518
  %580 = vmatprep.subr.bf16.mxu0 0
  %581 = vmatpush1.bf16.msra.mxu0 %v519
  %582 = vmatprep.subr.bf16.mxu0 0
  %583 = vmatpush1.bf16.msra.mxu0 %v520
  %584 = vmatprep.subr.bf16.mxu0 0
  %585 = vmatpush1.bf16.msra.mxu0 %v521
  %586 = vmatprep.mubr.bf16.mxu0 %v208
  %587 = vmatmul.mubr.bf16.gmra.mrb[0].mxu0 %v323
  %v588 = vpop.f32.mrb[0].mxu0
  %v589 = vadd.f32 %v408, %v588
  %v590 = vpop.f32.mrb[0].mxu0
  %v591 = vpop.f32.mrb[0].mxu0
  %v592 = vadd.f32 %v408, %v591
  %v593 = vpop.f32.mrb[0].mxu0
  %594 = vmatprep.mubr.bf16.mxu0 %v209
  %595 = vmatmul.mubr.bf16.gmra.mrb[0].mxu0 %v324
  %v596 = vpop.f32.mrb[0].mxu0
  %v597 = vadd.f32 %v408, %v596
  %v598 = vpop.f32.mrb[0].mxu0
  %v599 = vpop.f32.mrb[0].mxu0
  %v600 = vadd.f32 %v408, %v599
  %v601 = vpop.f32.mrb[0].mxu0
  %602 = vdwg.mxu0
  %603 = vmatprep.subr.bf16.mxu0 0
  %604 = vmatpush1.bf16.msra.mxu0 %v522
  %605 = vmatprep.subr.bf16.mxu0 0
  %606 = vmatpush1.bf16.msra.mxu0 %v523
  %607 = vmatprep.subr.bf16.mxu0 0
  %608 = vmatpush1.bf16.msra.mxu0 %v524
  %609 = vmatprep.subr.bf16.mxu0 0
  %610 = vmatpush1.bf16.msra.mxu0 %v525
  %611 = vmatprep.subr.bf16.mxu0 0
  %612 = vmatpush1.bf16.msra.mxu0 %v526
  %613 = vmatprep.subr.bf16.mxu0 0
  %614 = vmatpush1.bf16.msra.mxu0 %v527
  %615 = vmatprep.subr.bf16.mxu0 0
  %616 = vmatpush1.bf16.msra.mxu0 %v528
  %617 = vmatprep.subr.bf16.mxu0 0
  %618 = vmatpush1.bf16.msra.mxu0 %v529
  %619 = vmatprep.subr.bf16.mxu0 0
  %620 = vmatpush1.bf16.msra.mxu0 0
  %621 = vmatprep.subr.bf16.mxu0 0
  %622 = vmatpush1.bf16.msra.mxu0 0
  %623 = vmatprep.subr.bf16.mxu0 0
  %624 = vmatpush1.bf16.msra.mxu0 0
  %625 = vmatprep.subr.bf16.mxu0 0
  %626 = vmatpush1.bf16.msra.mxu0 0
  %627 = vmatprep.subr.bf16.mxu0 0
  %628 = vmatpush1.bf16.msra.mxu0 0
  %629 = vmatprep.subr.bf16.mxu0 0
  %630 = vmatpush1.bf16.msra.mxu0 0
  %631 = vmatprep.subr.bf16.mxu0 0
  %632 = vmatpush1.bf16.msra.mxu0 0
  %633 = vmatprep.subr.bf16.mxu0 0
  %634 = vmatpush1.bf16.msra.mxu0 0
  %635 = vmatprep.mubr.bf16.mxu0 0
  %636 = vmatmul.mubr.bf16.gmra.mrb[0].mxu0 %v353
  %v637 = vpop.f32.mrb[0].mxu0
  %v638 = vadd.f32 %v589, %v637
  %v639 = vpop.f32.mrb[0].mxu0
  %v640 = vpop.f32.mrb[0].mxu0
  %v641 = vadd.f32 %v592, %v640
  %v642 = vpop.f32.mrb[0].mxu0
  %643 = vmatprep.mubr.bf16.mxu0 0
  %644 = vmatmul.mubr.bf16.gmra.mrb[0].mxu0 %v354
  %v645 = vpop.f32.mrb[0].mxu0
  %v646 = vadd.f32 %v597, %v645
  %v647 = vpop.f32.mrb[0].mxu0
  %v648 = vpop.f32.mrb[0].mxu0
  %v649 = vadd.f32 %v600, %v648
  %v650 = vpop.f32.mrb[0].mxu0
  %651 = vdwg.mxu0
  %v652 = vmax.f32 %v638, 0.0
  %v653 = vmax.f32 %v641, 0.0
  %v654 = vmax.f32 %v646, 0.0
  %v655 = vmax.f32 %v649, 0.0
  %v656 = vpack.c.bf16 %v653, %v652
  %v657 = vpack.c.bf16 %v655, %v654
  %v660 = vunpack.c.l.b16 %v656
  %v661 = vunpack.c.h.b16 %v656
  %v662 = vunpack.c.l.b16 %v657
  %v663 = vunpack.c.h.b16 %v657
  %v664 = vpack.c.b16 %v660, %v660
  %v665 = vpack.c.b16 %v661, %v661
  %v666 = vpack.c.b16 %v662, %v662
  %v667 = vpack.c.b16 %v663, %v663
  %672 = vst [vmem:[%s5] sm:$0xf] %v664
  %673 = vst [vmem:[%s5 + $0x4] sm:$0xf] %v665
  %674 = vst [vmem:[%s5 + $0x8] sm:$0xf] %v666
  %675 = vst [vmem:[%s5 + $0xc] sm:$0xf] %v667
  // Predicated region
  $region22: #{dcefm_forward.4} parent=0 // pred_check
    _
  $region23: #{dcefm_forward.4} parent=0 // pred_check_branch
    %677 = sbr.rel (0) target = $region25
  $region24: #{dcefm_forward.4} parent=0 // pred_region
    _
  $region25: #{dcefm_forward.4} parent=0 // pred_fallthru
    _
  // Predicated region
  $region26: #{dcefm_forward.4} parent=0 // pred_check
    _
  $region27: #{dcefm_forward.4} parent=0 // pred_check_branch
    %679 = sbr.rel (0) target = $region29
  $region28: #{dcefm_forward.4} parent=0 // pred_region
    _
  $region29: #{dcefm_forward.4} parent=0 // pred_fallthru
    _

// kernel: dcefm_forward.3
$region0: #{dcefm_forward.3}
  #allocation0 [shape = 'u32[]', space=smem, size = 0x4, offset = 0x4, fixed_abs, tag = 'smem constant byte address 0x4 - core index']
  #allocation1 [shape = 'u32[144,128]{1,0:T(1,128)}', space=vmem, size = 0x12000, scoped, tag = 'internal scratch']
  %s0 = inlined_call_operand.vmem [shape: bf16[160,192], index: 0, kind: input, shape index: {}]
  %s1 = inlined_call_operand.vmem [shape: bf16[192,128], index: 1, kind: input, shape index: {}]
  %s2 = inlined_call_operand.vmem [shape: f32[1,128], index: 2, kind: input, shape index: {}]
  %s3 = inlined_call_operand.vmem [shape: bf16[384,128], index: 3, kind: input, shape index: {}]
  %s4 = inlined_call_operand.vmem [shape: f32[1,128], index: 4, kind: input, shape index: {}]
  %s5 = inlined_call_operand.vmem [shape: bf16[160,128], index: 5, kind: output, shape index: {}]
  %s6 = sld [smem:[#allocation0]]
  $region30: #{dcefm_forward.3} parent=0
    _
  %s8 = ssub.s32 1, %s6
  %s9 = scalar_select 0, %s8, %s6
  // Predicated region
  $region2: #{dcefm_forward.3} parent=0 // pred_check
    _
  $region3: #{dcefm_forward.3} parent=0 // pred_check_branch
    %11 = sbr.rel (0) target = $region5
  $region4: #{dcefm_forward.3} parent=0 // pred_region
    _
  $region5: #{dcefm_forward.3} parent=0 // pred_fallthru
    _
  // Predicated region
  $region6: #{dcefm_forward.3} parent=0 // pred_check
    _
  $region7: #{dcefm_forward.3} parent=0 // pred_check_branch
    %13 = sbr.rel (0) target = $region9
  $region8: #{dcefm_forward.3} parent=0 // pred_region
    _
  $region9: #{dcefm_forward.3} parent=0 // pred_fallthru
    _
  // Predicated region
  $region10: #{dcefm_forward.3} parent=0 // pred_check
    _
  $region11: #{dcefm_forward.3} parent=0 // pred_check_branch
    %15 = sbr.rel (0) target = $region13
  $region12: #{dcefm_forward.3} parent=0 // pred_region
    _
  $region13: #{dcefm_forward.3} parent=0 // pred_fallthru
    _
  // Predicated region
  $region14: #{dcefm_forward.3} parent=0 // pred_check
    _
  $region15: #{dcefm_forward.3} parent=0 // pred_check_branch
    %17 = sbr.rel (0) target = $region17
  $region16: #{dcefm_forward.3} parent=0 // pred_region
    _
  $region17: #{dcefm_forward.3} parent=0 // pred_fallthru
    _
  // Predicated region
  $region18: #{dcefm_forward.3} parent=0 // pred_check
    _
  $region19: #{dcefm_forward.3} parent=0 // pred_check_branch
    %19 = sbr.rel (0) target = $region21
  $region20: #{dcefm_forward.3} parent=0 // pred_region
    _
  $region21: #{dcefm_forward.3} parent=0 // pred_fallthru
    _
  %v23 = vld [vmem:[%s0] sm:$0xff]
  %v24 = vld [vmem:[%s0 + $0x8] sm:$0xff]
  %v25 = vld [vmem:[%s0 + $0x10] sm:$0xff]
  %v26 = vld [vmem:[%s0 + $0x18] sm:$0xff]
  %v27 = vld [vmem:[%s0 + $0x20] sm:$0xff]
  %v28 = vld [vmem:[%s0 + $0x28] sm:$0xff]
  %v29 = vld [vmem:[%s0 + $0x30] sm:$0xff]
  %v30 = vld [vmem:[%s0 + $0x38] sm:$0xff]
  %v31 = vld [vmem:[%s0 + $0x40] sm:$0xff]
  %v32 = vld [vmem:[%s0 + $0x48] sm:$0xff]
  %v33 = vld [vmem:[%s0 + $0x50] sm:$0xff]
  %v34 = vld [vmem:[%s0 + $0x58] sm:$0xff]
  %v35 = vld [vmem:[%s0 + $0x60] sm:$0xff]
  %v36 = vld [vmem:[%s0 + $0x68] sm:$0xff]
  %v37 = vld [vmem:[%s0 + $0x70] sm:$0xff]
  %v38 = vld [vmem:[%s0 + $0x78] sm:$0xff]
  %v39 = vld [vmem:[%s0 + $0x80] sm:$0xff]
  %v40 = vld [vmem:[%s0 + $0x88] sm:$0xff]
  %v41 = vld [vmem:[%s0 + $0x90] sm:$0xff]
  %v42 = vld [vmem:[%s0 + $0x98] sm:$0xff]
  %v43 = vld [vmem:[%s1] sm:$0xf]
  %v44 = vld [vmem:[%s1 + $0x4] sm:$0xf]
  %v45 = vld [vmem:[%s1 + $0x8] sm:$0xf]
  %v46 = vld [vmem:[%s1 + $0xc] sm:$0xf]
  %v47 = vld [vmem:[%s1 + $0x10] sm:$0xf]
  %v48 = vld [vmem:[%s1 + $0x14] sm:$0xf]
  %v49 = vld [vmem:[%s1 + $0x18] sm:$0xf]
  %v50 = vld [vmem:[%s1 + $0x1c] sm:$0xf]
  %v51 = vld [vmem:[%s1 + $0x20] sm:$0xf]
  %v52 = vld [vmem:[%s1 + $0x24] sm:$0xf]
  %v53 = vld [vmem:[%s1 + $0x28] sm:$0xf]
  %v54 = vld [vmem:[%s1 + $0x2c] sm:$0xf]
  %v55 = vld [vmem:[%s1 + $0x30] sm:$0xf]
  %v56 = vld [vmem:[%s1 + $0x34] sm:$0xf]
  %v57 = vld [vmem:[%s1 + $0x38] sm:$0xf]
  %v58 = vld [vmem:[%s1 + $0x3c] sm:$0xf]
  %v59 = vld [vmem:[%s1 + $0x40] sm:$0xf]
  %v60 = vld [vmem:[%s1 + $0x44] sm:$0xf]
  %v61 = vld [vmem:[%s1 + $0x48] sm:$0xf]
  %v62 = vld [vmem:[%s1 + $0x4c] sm:$0xf]
  %v63 = vld [vmem:[%s1 + $0x50] sm:$0xf]
  %v64 = vld [vmem:[%s1 + $0x54] sm:$0xf]
  %v65 = vld [vmem:[%s1 + $0x58] sm:$0xf]
  %v66 = vld [vmem:[%s1 + $0x5c] sm:$0xf]
  %v67 = vld [vmem:[%s2] sm:$0x1]
  %v69 = vlaneseq
  %v70 = vshrl.u32 %v69, 7
  %v71 = vsub.s32 0, %v70
  %v72 = vrot.slane %v67, %v71
  %v94 = vunpack.c.l.b16 %v23
  %v95 = vunpack.c.h.b16 %v23
  %v96 = vunpack.c.l.b16 %v24
  %v97 = vunpack.c.h.b16 %v24
  %v98 = vunpack.c.l.b16 %v25
  %v99 = vunpack.c.h.b16 %v25
  %v100 = vunpack.c.l.b16 %v26
  %v101 = vunpack.c.h.b16 %v26
  %v102 = vunpack.c.l.b16 %v27
  %v103 = vunpack.c.h.b16 %v27
  %v104 = vunpack.c.l.b16 %v28
  %v105 = vunpack.c.h.b16 %v28
  %v106 = vunpack.c.l.b16 %v29
  %v107 = vunpack.c.h.b16 %v29
  %v108 = vunpack.c.l.b16 %v30
  %v109 = vunpack.c.h.b16 %v30
  %v110 = vunpack.c.l.b16 %v31
  %v111 = vunpack.c.h.b16 %v31
  %v112 = vunpack.c.l.b16 %v32
  %v113 = vunpack.c.h.b16 %v32
  %v114 = vunpack.c.l.b16 %v33
  %v115 = vunpack.c.h.b16 %v33
  %v116 = vunpack.c.l.b16 %v34
  %v117 = vunpack.c.h.b16 %v34
  %v118 = vunpack.c.l.b16 %v35
  %v119 = vunpack.c.h.b16 %v35
  %v120 = vunpack.c.l.b16 %v36
  %v121 = vunpack.c.h.b16 %v36
  %v122 = vunpack.c.l.b16 %v37
  %v123 = vunpack.c.h.b16 %v37
  %v124 = vunpack.c.l.b16 %v38
  %v125 = vunpack.c.h.b16 %v38
  %v126 = vunpack.c.l.b16 %v39
  %v127 = vunpack.c.h.b16 %v39
  %v128 = vunpack.c.l.b16 %v40
  %v129 = vunpack.c.h.b16 %v40
  %v130 = vunpack.c.l.b16 %v41
  %v131 = vunpack.c.h.b16 %v41
  %v132 = vunpack.c.l.b16 %v42
  %v133 = vunpack.c.h.b16 %v42
  %v134 = vpack.c.b16 %v96, %v94
  %v135 = vpack.c.b16 %v97, %v95
  %v136 = vpack.c.b16 %v100, %v98
  %v137 = vpack.c.b16 %v101, %v99
  %v138 = vpack.c.b16 %v104, %v102
  %v139 = vpack.c.b16 %v105, %v103
  %v140 = vpack.c.b16 %v108, %v106
  %v141 = vpack.c.b16 %v109, %v107
  %v142 = vpack.c.b16 %v112, %v110
  %v143 = vpack.c.b16 %v113, %v111
  %v144 = vpack.c.b16 %v116, %v114
  %v145 = vpack.c.b16 %v117, %v115
  %v146 = vpack.c.b16 %v120, %v118
  %v147 = vpack.c.b16 %v121, %v119
  %v148 = vpack.c.b16 %v124, %v122
  %v149 = vpack.c.b16 %v125, %v123
  %v150 = vpack.c.b16 %v128, %v126
  %v151 = vpack.c.b16 %v129, %v127
  %v152 = vpack.c.b16 %v132, %v130
  %v153 = vpack.c.b16 %v133, %v131
  %v188 = vunpack.c.l.b16 %v43
  %v189 = vunpack.c.l.b16 %v44
  %v190 = vunpack.c.l.b16 %v45
  %v191 = vunpack.c.l.b16 %v46
  %v192 = vunpack.c.l.b16 %v47
  %v193 = vunpack.c.l.b16 %v48
  %v194 = vunpack.c.l.b16 %v49
  %v195 = vunpack.c.l.b16 %v50
  %v196 = vunpack.c.l.b16 %v51
  %v197 = vunpack.c.l.b16 %v52
  %v198 = vunpack.c.l.b16 %v53
  %v199 = vunpack.c.l.b16 %v54
  %v200 = vunpack.c.l.b16 %v55
  %v201 = vunpack.c.l.b16 %v56
  %v202 = vunpack.c.l.b16 %v57
  %v203 = vunpack.c.l.b16 %v58
  %v204 = vunpack.c.l.b16 %v59
  %v205 = vunpack.c.l.b16 %v60
  %v206 = vunpack.c.l.b16 %v61
  %v207 = vunpack.c.l.b16 %v62
  %v208 = vunpack.c.l.b16 %v63
  %v209 = vunpack.c.l.b16 %v64
  %v210 = vunpack.c.l.b16 %v65
  %v211 = vunpack.c.l.b16 %v66
  %v212 = vpack.c.b16 %v189, %v188
  %v213 = vpack.c.b16 %v191, %v190
  %v214 = vpack.c.b16 %v193, %v192
  %v215 = vpack.c.b16 %v195, %v194
  %v216 = vpack.c.b16 %v197, %v196
  %v217 = vpack.c.b16 %v199, %v198
  %v218 = vpack.c.b16 %v201, %v200
  %v219 = vpack.c.b16 %v203, %v202
  %v220 = vpack.c.b16 %v205, %v204
  %v221 = vpack.c.b16 %v207, %v206
  %v222 = vpack.c.b16 %v209, %v208
  %v223 = vpack.c.b16 %v211, %v210
  %vm236 = vcmask 523264
  %v238 = vsel %vm236, %v135, 0
  %v241 = vsel %vm236, %v137, 0
  %v244 = vsel %vm236, %v139, 0
  %v247 = vsel %vm236, %v141, 0
  %v250 = vsel %vm236, %v143, 0
  %v253 = vsel %vm236, %v145, 0
  %v256 = vsel %vm236, %v147, 0
  %v259 = vsel %vm236, %v149, 0
  %v262 = vsel %vm236, %v151, 0
  %v265 = vsel %vm236, %v153, 0
  %267 = vmatprep.subr.bf16.mxu0 0
  %268 = vmatpush1.bf16.msra.mxu0 %v212
  %269 = vmatprep.subr.bf16.mxu0 0
  %270 = vmatpush1.bf16.msra.mxu0 %v213
  %271 = vmatprep.subr.bf16.mxu0 0
  %272 = vmatpush1.bf16.msra.mxu0 %v214
  %273 = vmatprep.subr.bf16.mxu0 0
  %274 = vmatpush1.bf16.msra.mxu0 %v215
  %275 = vmatprep.subr.bf16.mxu0 0
  %276 = vmatpush1.bf16.msra.mxu0 %v216
  %277 = vmatprep.subr.bf16.mxu0 0
  %278 = vmatpush1.bf16.msra.mxu0 %v217
  %279 = vmatprep.subr.bf16.mxu0 0
  %280 = vmatpush1.bf16.msra.mxu0 %v218
  %281 = vmatprep.subr.bf16.mxu0 0
  %282 = vmatpush1.bf16.msra.mxu0 %v219
  %283 = vmatprep.subr.bf16.mxu0 0
  %284 = vmatpush1.bf16.msra.mxu0 %v220
  %285 = vmatprep.subr.bf16.mxu0 0
  %286 = vmatpush1.bf16.msra.mxu0 %v221
  %287 = vmatprep.subr.bf16.mxu0 0
  %288 = vmatpush1.bf16.msra.mxu0 %v222
  %289 = vmatprep.subr.bf16.mxu0 0
  %290 = vmatpush1.bf16.msra.mxu0 %v223
  %291 = vmatprep.subr.bf16.mxu0 0
  %292 = vmatpush1.bf16.msra.mxu0 0
  %293 = vmatprep.subr.bf16.mxu0 0
  %294 = vmatpush1.bf16.msra.mxu0 0
  %295 = vmatprep.subr.bf16.mxu0 0
  %296 = vmatpush1.bf16.msra.mxu0 0
  %297 = vmatprep.subr.bf16.mxu0 0
  %298 = vmatpush1.bf16.msra.mxu0 0
  %299 = vmatprep.mubr.bf16.mxu0 %v238
  %300 = vmatmul.mubr.bf16.gmra.mrb[0].mxu0 %v134
  %v301 = vpop.f32.mrb[0].mxu0
  %v302 = vadd.f32 %v72, %v301
  %v303 = vpop.f32.mrb[0].mxu0
  %v304 = vpop.f32.mrb[0].mxu0
  %v305 = vadd.f32 %v72, %v304
  %v306 = vpop.f32.mrb[0].mxu0
  %307 = vmatprep.mubr.bf16.mxu0 %v241
  %308 = vmatmul.mubr.bf16.gmra.mrb[0].mxu0 %v136
  %v309 = vpop.f32.mrb[0].mxu0
  %v310 = vadd.f32 %v72, %v309
  %v311 = vpop.f32.mrb[0].mxu0
  %v312 = vpop.f32.mrb[0].mxu0
  %v313 = vadd.f32 %v72, %v312
  %v314 = vpop.f32.mrb[0].mxu0
  %315 = vmatprep.mubr.bf16.mxu0 %v244
  %316 = vmatmul.mubr.bf16.gmra.mrb[0].mxu0 %v138
  %v317 = vpop.f32.mrb[0].mxu0
  %v318 = vadd.f32 %v72, %v317
  %v319 = vpop.f32.mrb[0].mxu0
  %v320 = vpop.f32.mrb[0].mxu0
  %v321 = vadd.f32 %v72, %v320
  %v322 = vpop.f32.mrb[0].mxu0
  %323 = vmatprep.mubr.bf16.mxu0 %v247
  %324 = vmatmul.mubr.bf16.gmra.mrb[0].mxu0 %v140
  %v325 = vpop.f32.mrb[0].mxu0
  %v326 = vadd.f32 %v72, %v325
  %v327 = vpop.f32.mrb[0].mxu0
  %v328 = vpop.f32.mrb[0].mxu0
  %v329 = vadd.f32 %v72, %v328
  %v330 = vpop.f32.mrb[0].mxu0
  %331 = vmatprep.mubr.bf16.mxu0 %v250
  %332 = vmatmul.mubr.bf16.gmra.mrb[0].mxu0 %v142
  %v333 = vpop.f32.mrb[0].mxu0
  %v334 = vadd.f32 %v72, %v333
  %v335 = vpop.f32.mrb[0].mxu0
  %v336 = vpop.f32.mrb[0].mxu0
  %v337 = vadd.f32 %v72, %v336
  %v338 = vpop.f32.mrb[0].mxu0
  %339 = vmatprep.mubr.bf16.mxu0 %v253
  %340 = vmatmul.mubr.bf16.gmra.mrb[0].mxu0 %v144
  %v341 = vpop.f32.mrb[0].mxu0
  %v342 = vadd.f32 %v72, %v341
  %v343 = vpop.f32.mrb[0].mxu0
  %v344 = vpop.f32.mrb[0].mxu0
  %v345 = vadd.f32 %v72, %v344
  %v346 = vpop.f32.mrb[0].mxu0
  %347 = vmatprep.mubr.bf16.mxu0 %v256
  %348 = vmatmul.mubr.bf16.gmra.mrb[0].mxu0 %v146
  %v349 = vpop.f32.mrb[0].mxu0
  %v350 = vadd.f32 %v72, %v349
  %v351 = vpop.f32.mrb[0].mxu0
  %v352 = vpop.f32.mrb[0].mxu0
  %v353 = vadd.f32 %v72, %v352
  %v354 = vpop.f32.mrb[0].mxu0
  %355 = vmatprep.mubr.bf16.mxu0 %v259
  %356 = vmatmul.mubr.bf16.gmra.mrb[0].mxu0 %v148
  %v357 = vpop.f32.mrb[0].mxu0
  %v358 = vadd.f32 %v72, %v357
  %v359 = vpop.f32.mrb[0].mxu0
  %v360 = vpop.f32.mrb[0].mxu0
  %v361 = vadd.f32 %v72, %v360
  %v362 = vpop.f32.mrb[0].mxu0
  %363 = vmatprep.mubr.bf16.mxu0 %v262
  %364 = vmatmul.mubr.bf16.gmra.mrb[0].mxu0 %v150
  %v365 = vpop.f32.mrb[0].mxu0
  %v366 = vadd.f32 %v72, %v365
  %v367 = vpop.f32.mrb[0].mxu0
  %v368 = vpop.f32.mrb[0].mxu0
  %v369 = vadd.f32 %v72, %v368
  %v370 = vpop.f32.mrb[0].mxu0
  %371 = vmatprep.mubr.bf16.mxu0 %v265
  %372 = vmatmul.mubr.bf16.gmra.mrb[0].mxu0 %v152
  %v373 = vpop.f32.mrb[0].mxu0
  %v374 = vadd.f32 %v72, %v373
  %v375 = vpop.f32.mrb[0].mxu0
  %v376 = vpop.f32.mrb[0].mxu0
  %v377 = vadd.f32 %v72, %v376
  %v378 = vpop.f32.mrb[0].mxu0
  %379 = vdwg.mxu0
  %v380 = vmax.f32 %v302, 0.0
  %v381 = vmax.f32 %v305, 0.0
  %v382 = vmax.f32 %v310, 0.0
  %v383 = vmax.f32 %v313, 0.0
  %v384 = vmax.f32 %v318, 0.0
  %v385 = vmax.f32 %v321, 0.0
  %v386 = vmax.f32 %v326, 0.0
  %v387 = vmax.f32 %v329, 0.0
  %v388 = vmax.f32 %v334, 0.0
  %v389 = vmax.f32 %v337, 0.0
  %v390 = vmax.f32 %v342, 0.0
  %v391 = vmax.f32 %v345, 0.0
  %v392 = vmax.f32 %v350, 0.0
  %v393 = vmax.f32 %v353, 0.0
  %v394 = vmax.f32 %v358, 0.0
  %v395 = vmax.f32 %v361, 0.0
  %v396 = vmax.f32 %v366, 0.0
  %v397 = vmax.f32 %v369, 0.0
  %v398 = vmax.f32 %v374, 0.0
  %v399 = vmax.f32 %v377, 0.0
  %v400 = vpack.c.bf16 %v381, %v380
  %v401 = vpack.c.bf16 %v383, %v382
  %v402 = vpack.c.bf16 %v385, %v384
  %v403 = vpack.c.bf16 %v387, %v386
  %v404 = vpack.c.bf16 %v389, %v388
  %v405 = vpack.c.bf16 %v391, %v390
  %v406 = vpack.c.bf16 %v393, %v392
  %v407 = vpack.c.bf16 %v395, %v394
  %v408 = vpack.c.bf16 %v397, %v396
  %v409 = vpack.c.bf16 %v399, %v398
  %vm410 = vsmask.f32 256
  %v412 = vshrl.u32 %v400, 16
  %v414 = vrot.slane %v412, 7
  %v415 = vshll.u32 %v400, 16
  %v417 = vor.u32 %v414, %v415
  %v419 = vshrl.u32 %v401, 16
  %v421 = vrot.slane %v419, 7
  %v422 = vshll.u32 %v401, 16
  %v424 = vor.u32 %v421, %v422
  %v425 = vsel %vm410, %v414, %v424
  %v427 = vshrl.u32 %v402, 16
  %v429 = vrot.slane %v427, 7
  %v430 = vshll.u32 %v402, 16
  %v432 = vor.u32 %v429, %v430
  %v433 = vsel %vm410, %v421, %v432
  %v435 = vshrl.u32 %v403, 16
  %v437 = vrot.slane %v435, 7
  %v438 = vshll.u32 %v403, 16
  %v440 = vor.u32 %v437, %v438
  %v441 = vsel %vm410, %v429, %v440
  %v443 = vshrl.u32 %v404, 16
  %v445 = vrot.slane %v443, 7
  %v446 = vshll.u32 %v404, 16
  %v448 = vor.u32 %v445, %v446
  %v449 = vsel %vm410, %v437, %v448
  %v451 = vshrl.u32 %v405, 16
  %v453 = vrot.slane %v451, 7
  %v454 = vshll.u32 %v405, 16
  %v456 = vor.u32 %v453, %v454
  %v457 = vsel %vm410, %v445, %v456
  %v459 = vshrl.u32 %v406, 16
  %v461 = vrot.slane %v459, 7
  %v462 = vshll.u32 %v406, 16
  %v464 = vor.u32 %v461, %v462
  %v465 = vsel %vm410, %v453, %v464
  %v467 = vshrl.u32 %v407, 16
  %v469 = vrot.slane %v467, 7
  %v470 = vshll.u32 %v407, 16
  %v472 = vor.u32 %v469, %v470
  %v473 = vsel %vm410, %v461, %v472
  %v475 = vshrl.u32 %v408, 16
  %v477 = vrot.slane %v475, 7
  %v478 = vshll.u32 %v408, 16
  %v480 = vor.u32 %v477, %v478
  %v481 = vsel %vm410, %v469, %v480
  %v483 = vshrl.u32 %v409, 16
  %v485 = vrot.slane %v483, 7
  %v486 = vshll.u32 %v409, 16
  %v488 = vor.u32 %v485, %v486
  %v489 = vsel %vm410, %v477, %v488
  %vm500 = vcmask 1040384
  %vm501 = vmand %vm500, %vm410
  %v502 = vsel %vm501, 0, %v417
  %vm503 = vsmask.f32 7424
  %v504 = vrot.slane %v415, 1
  %v505 = vor.u32 %v412, %v504
  %v506 = vrot.slane %v422, 1
  %v507 = vsel %vm503, %v505, %v506
  %v508 = vor.u32 %v419, %v506
  %v509 = vrot.slane %v430, 1
  %v510 = vsel %vm503, %v508, %v509
  %v511 = vor.u32 %v427, %v509
  %v512 = vrot.slane %v438, 1
  %v513 = vsel %vm503, %v511, %v512
  %v514 = vor.u32 %v435, %v512
  %v515 = vrot.slane %v446, 1
  %v516 = vsel %vm503, %v514, %v515
  %v517 = vor.u32 %v443, %v515
  %v518 = vrot.slane %v454, 1
  %v519 = vsel %vm503, %v517, %v518
  %v520 = vor.u32 %v451, %v518
  %v521 = vrot.slane %v462, 1
  %v522 = vsel %vm503, %v520, %v521
  %v523 = vor.u32 %v459, %v521
  %v524 = vrot.slane %v470, 1
  %v525 = vsel %vm503, %v523, %v524
  %v526 = vor.u32 %v467, %v524
  %v527 = vrot.slane %v478, 1
  %v528 = vsel %vm503, %v526, %v527
  %v529 = vor.u32 %v475, %v527
  %v530 = vrot.slane %v486, 1
  %v531 = vsel %vm503, %v529, %v530
  %v532 = vor.u32 %v483, %v530
  %vm543 = vcmask 1047552
  %vm544 = vmand %vm543, %vm503
  %v545 = vsel %vm544, %v532, 0
  %v546 = vlaneseq
  %v547 = vshrl.u32 %v546, 7
  %v548 = vadd.s32 %v547, 8
  %v549 = vadd.s32 %v547, 16
  %v550 = vadd.s32 %v547, 24
  %v551 = vadd.s32 %v547, 32
  %v552 = vadd.s32 %v547, 40
  %v553 = vadd.s32 %v547, 48
  %v554 = vadd.s32 %v547, 56
  %v555 = vadd.s32 %v547, 64
  %v556 = vadd.s32 %v547, 72
  %v557 = vadd.s32 %v547, 80
  %v558 = vadd.s32 %v547, 88
  %v559 = vadd.s32 %v547, 96
  %v560 = vadd.s32 %v547, 104
  %v561 = vadd.s32 %v547, 112
  %v562 = vadd.s32 %v547, 120
  %v563 = vadd.s32 %v547, 128
  %v564 = vadd.s32 %v547, 136
  %v565 = vadd.s32 %v547, 144
  %v566 = vadd.s32 %v547, 152
  %vm567 = vcmp.lt.s32.totalorder %v547, 0
  %v568 = vsub.s32 0, %v547
  %v569 = vsel %vm567, %v568, %v547
  %v570 = vshrl.u32 %v569, 4
  %v571 = vand.u32 %v569, 15
  %v572 = vsub.s32 0, %v571
  %v573 = vsel %vm567, %v572, %v571
  %vm574 = vcmp.lt.s32.totalorder %v548, 0
  %v575 = vsub.s32 0, %v548
  %v576 = vsel %vm574, %v575, %v548
  %v577 = vshrl.u32 %v576, 4
  %v578 = vand.u32 %v576, 15
  %v579 = vsub.s32 0, %v578
  %v580 = vsel %vm574, %v579, %v578
  %vm581 = vcmp.lt.s32.totalorder %v549, 0
  %v582 = vsub.s32 0, %v549
  %v583 = vsel %vm581, %v582, %v549
  %v584 = vshrl.u32 %v583, 4
  %v585 = vand.u32 %v583, 15
  %v586 = vsub.s32 0, %v585
  %v587 = vsel %vm581, %v586, %v585
  %vm588 = vcmp.lt.s32.totalorder %v550, 0
  %v589 = vsub.s32 0, %v550
  %v590 = vsel %vm588, %v589, %v550
  %v591 = vshrl.u32 %v590, 4
  %v592 = vand.u32 %v590, 15
  %v593 = vsub.s32 0, %v592
  %v594 = vsel %vm588, %v593, %v592
  %vm595 = vcmp.lt.s32.totalorder %v551, 0
  %v596 = vsub.s32 0, %v551
  %v597 = vsel %vm595, %v596, %v551
  %v598 = vshrl.u32 %v597, 4
  %v599 = vand.u32 %v597, 15
  %v600 = vsub.s32 0, %v599
  %v601 = vsel %vm595, %v600, %v599
  %vm602 = vcmp.lt.s32.totalorder %v552, 0
  %v603 = vsub.s32 0, %v552
  %v604 = vsel %vm602, %v603, %v552
  %v605 = vshrl.u32 %v604, 4
  %v606 = vand.u32 %v604, 15
  %v607 = vsub.s32 0, %v606
  %v608 = vsel %vm602, %v607, %v606
  %vm609 = vcmp.lt.s32.totalorder %v553, 0
  %v610 = vsub.s32 0, %v553
  %v611 = vsel %vm609, %v610, %v553
  %v612 = vshrl.u32 %v611, 4
  %v613 = vand.u32 %v611, 15
  %v614 = vsub.s32 0, %v613
  %v615 = vsel %vm609, %v614, %v613
  %vm616 = vcmp.lt.s32.totalorder %v554, 0
  %v617 = vsub.s32 0, %v554
  %v618 = vsel %vm616, %v617, %v554
  %v619 = vshrl.u32 %v618, 4
  %v620 = vand.u32 %v618, 15
  %v621 = vsub.s32 0, %v620
  %v622 = vsel %vm616, %v621, %v620
  %vm623 = vcmp.lt.s32.totalorder %v555, 0
  %v624 = vsub.s32 0, %v555
  %v625 = vsel %vm623, %v624, %v555
  %v626 = vshrl.u32 %v625, 4
  %v627 = vand.u32 %v625, 15
  %v628 = vsub.s32 0, %v627
  %v629 = vsel %vm623, %v628, %v627
  %vm630 = vcmp.lt.s32.totalorder %v556, 0
  %v631 = vsub.s32 0, %v556
  %v632 = vsel %vm630, %v631, %v556
  %v633 = vshrl.u32 %v632, 4
  %v634 = vand.u32 %v632, 15
  %v635 = vsub.s32 0, %v634
  %v636 = vsel %vm630, %v635, %v634
  %vm637 = vcmp.lt.s32.totalorder %v557, 0
  %v638 = vsub.s32 0, %v557
  %v639 = vsel %vm637, %v638, %v557
  %v640 = vshrl.u32 %v639, 4
  %v641 = vand.u32 %v639, 15
  %v642 = vsub.s32 0, %v641
  %v643 = vsel %vm637, %v642, %v641
  %vm644 = vcmp.lt.s32.totalorder %v558, 0
  %v645 = vsub.s32 0, %v558
  %v646 = vsel %vm644, %v645, %v558
  %v647 = vshrl.u32 %v646, 4
  %v648 = vand.u32 %v646, 15
  %v649 = vsub.s32 0, %v648
  %v650 = vsel %vm644, %v649, %v648
  %vm651 = vcmp.lt.s32.totalorder %v559, 0
  %v652 = vsub.s32 0, %v559
  %v653 = vsel %vm651, %v652, %v559
  %v654 = vshrl.u32 %v653, 4
  %v655 = vand.u32 %v653, 15
  %v656 = vsub.s32 0, %v655
  %v657 = vsel %vm651, %v656, %v655
  %vm658 = vcmp.lt.s32.totalorder %v560, 0
  %v659 = vsub.s32 0, %v560
  %v660 = vsel %vm658, %v659, %v560
  %v661 = vshrl.u32 %v660, 4
  %v662 = vand.u32 %v660, 15
  %v663 = vsub.s32 0, %v662
  %v664 = vsel %vm658, %v663, %v662
  %vm665 = vcmp.lt.s32.totalorder %v561, 0
  %v666 = vsub.s32 0, %v561
  %v667 = vsel %vm665, %v666, %v561
  %v668 = vshrl.u32 %v667, 4
  %v669 = vand.u32 %v667, 15
  %v670 = vsub.s32 0, %v669
  %v671 = vsel %vm665, %v670, %v669
  %vm672 = vcmp.lt.s32.totalorder %v562, 0
  %v673 = vsub.s32 0, %v562
  %v674 = vsel %vm672, %v673, %v562
  %v675 = vshrl.u32 %v674, 4
  %v676 = vand.u32 %v674, 15
  %v677 = vsub.s32 0, %v676
  %v678 = vsel %vm672, %v677, %v676
  %vm679 = vcmp.lt.s32.totalorder %v563, 0
  %v680 = vsub.s32 0, %v563
  %v681 = vsel %vm679, %v680, %v563
  %v682 = vshrl.u32 %v681, 4
  %v683 = vand.u32 %v681, 15
  %v684 = vsub.s32 0, %v683
  %v685 = vsel %vm679, %v684, %v683
  %vm686 = vcmp.lt.s32.totalorder %v564, 0
  %v687 = vsub.s32 0, %v564
  %v688 = vsel %vm686, %v687, %v564
  %v689 = vshrl.u32 %v688, 4
  %v690 = vand.u32 %v688, 15
  %v691 = vsub.s32 0, %v690
  %v692 = vsel %vm686, %v691, %v690
  %vm693 = vcmp.lt.s32.totalorder %v565, 0
  %v694 = vsub.s32 0, %v565
  %v695 = vsel %vm693, %v694, %v565
  %v696 = vshrl.u32 %v695, 4
  %v697 = vand.u32 %v695, 15
  %v698 = vsub.s32 0, %v697
  %v699 = vsel %vm693, %v698, %v697
  %vm700 = vcmp.lt.s32.totalorder %v566, 0
  %v701 = vsub.s32 0, %v566
  %v702 = vsel %vm700, %v701, %v566
  %v703 = vshrl.u32 %v702, 4
  %v704 = vand.u32 %v702, 15
  %v705 = vsub.s32 0, %v704
  %v706 = vsel %vm700, %v705, %v704
  %vm707 = vcmp.ne.s32.totalorder %v573, 0
  %vm708 = vcmp.ne.s32.totalorder %v580, 0
  %vm709 = vcmp.ne.s32.totalorder %v587, 0
  %vm710 = vcmp.ne.s32.totalorder %v594, 0
  %vm711 = vcmp.ne.s32.totalorder %v601, 0
  %vm712 = vcmp.ne.s32.totalorder %v608, 0
  %vm713 = vcmp.ne.s32.totalorder %v615, 0
  %vm714 = vcmp.ne.s32.totalorder %v622, 0
  %vm715 = vcmp.ne.s32.totalorder %v629, 0
  %vm716 = vcmp.ne.s32.totalorder %v636, 0
  %vm717 = vcmp.ne.s32.totalorder %v643, 0
  %vm718 = vcmp.ne.s32.totalorder %v650, 0
  %vm719 = vcmp.ne.s32.totalorder %v657, 0
  %vm720 = vcmp.ne.s32.totalorder %v664, 0
  %vm721 = vcmp.ne.s32.totalorder %v671, 0
  %vm722 = vcmp.ne.s32.totalorder %v678, 0
  %vm723 = vcmp.ne.s32.totalorder %v685, 0
  %vm724 = vcmp.ne.s32.totalorder %v692, 0
  %vm725 = vcmp.ne.s32.totalorder %v699, 0
  %vm726 = vcmp.ne.s32.totalorder %v706, 0
  %vm727 = vcmp.lt.s32.totalorder %v573, 0
  %vm728 = vcmp.lt.s32.totalorder %v580, 0
  %vm729 = vcmp.lt.s32.totalorder %v587, 0
  %vm730 = vcmp.lt.s32.totalorder %v594, 0
  %vm731 = vcmp.lt.s32.totalorder %v601, 0
  %vm732 = vcmp.lt.s32.totalorder %v608, 0
  %vm733 = vcmp.lt.s32.totalorder %v615, 0
  %vm734 = vcmp.lt.s32.totalorder %v622, 0
  %vm735 = vcmp.lt.s32.totalorder %v629, 0
  %vm736 = vcmp.lt.s32.totalorder %v636, 0
  %vm737 = vcmp.lt.s32.totalorder %v643, 0
  %vm738 = vcmp.lt.s32.totalorder %v650, 0
  %vm739 = vcmp.lt.s32.totalorder %v657, 0
  %vm740 = vcmp.lt.s32.totalorder %v664, 0
  %vm741 = vcmp.lt.s32.totalorder %v671, 0
  %vm742 = vcmp.lt.s32.totalorder %v678, 0
  %vm743 = vcmp.lt.s32.totalorder %v685, 0
  %vm744 = vcmp.lt.s32.totalorder %v692, 0
  %vm745 = vcmp.lt.s32.totalorder %v699, 0
  %vm746 = vcmp.lt.s32.totalorder %v706, 0
  %vm747 = vmand %vm727, %vm707
  %vm748 = vmand %vm728, %vm708
  %vm749 = vmand %vm729, %vm709
  %vm750 = vmand %vm730, %vm710
  %vm751 = vmand %vm731, %vm711
  %vm752 = vmand %vm732, %vm712
  %vm753 = vmand %vm733, %vm713
  %vm754 = vmand %vm734, %vm714
  %vm755 = vmand %vm735, %vm715
  %vm756 = vmand %vm736, %vm716
  %vm757 = vmand %vm737, %vm717
  %vm758 = vmand %vm738, %vm718
  %vm759 = vmand %vm739, %vm719
  %vm760 = vmand %vm740, %vm720
  %vm761 = vmand %vm741, %vm721
  %vm762 = vmand %vm742, %vm722
  %vm763 = vmand %vm743, %vm723
  %vm764 = vmand %vm744, %vm724
  %vm765 = vmand %vm745, %vm725
  %vm766 = vmand %vm746, %vm726
  %v767 = vadd.s32 %v573, 16
  %v768 = vadd.s32 %v580, 16
  %v769 = vadd.s32 %v587, 16
  %v770 = vadd.s32 %v594, 16
  %v771 = vadd.s32 %v601, 16
  %v772 = vadd.s32 %v608, 16
  %v773 = vadd.s32 %v615, 16
  %v774 = vadd.s32 %v622, 16
  %v775 = vadd.s32 %v629, 16
  %v776 = vadd.s32 %v636, 16
  %v777 = vadd.s32 %v643, 16
  %v778 = vadd.s32 %v650, 16
  %v779 = vadd.s32 %v657, 16
  %v780 = vadd.s32 %v664, 16
  %v781 = vadd.s32 %v671, 16
  %v782 = vadd.s32 %v678, 16
  %v783 = vadd.s32 %v685, 16
  %v784 = vadd.s32 %v692, 16
  %v785 = vadd.s32 %v699, 16
  %v786 = vadd.s32 %v706, 16
  %v787 = vsel %vm747, %v767, %v573
  %v788 = vsel %vm748, %v768, %v580
  %v789 = vsel %vm749, %v769, %v587
  %v790 = vsel %vm750, %v770, %v594
  %v791 = vsel %vm751, %v771, %v601
  %v792 = vsel %vm752, %v772, %v608
  %v793 = vsel %vm753, %v773, %v615
  %v794 = vsel %vm754, %v774, %v622
  %v795 = vsel %vm755, %v775, %v629
  %v796 = vsel %vm756, %v776, %v636
  %v797 = vsel %vm757, %v777, %v643
  %v798 = vsel %vm758, %v778, %v650
  %v799 = vsel %vm759, %v779, %v657
  %v800 = vsel %vm760, %v780, %v664
  %v801 = vsel %vm761, %v781, %v671
  %v802 = vsel %vm762, %v782, %v678
  %v803 = vsel %vm763, %v783, %v685
  %v804 = vsel %vm764, %v784, %v692
  %v805 = vsel %vm765, %v785, %v699
  %v806 = vsel %vm766, %v786, %v706
  %vm807 = vcmp.eq.s32.totalorder %v787, 0
  %vm808 = vcmp.eq.s32.totalorder %v788, 0
  %vm809 = vcmp.eq.s32.totalorder %v789, 0
  %vm810 = vcmp.eq.s32.totalorder %v790, 0
  %vm811 = vcmp.eq.s32.totalorder %v791, 0
  %vm812 = vcmp.eq.s32.totalorder %v792, 0
  %vm813 = vcmp.eq.s32.totalorder %v793, 0
  %vm814 = vcmp.eq.s32.totalorder %v794, 0
  %vm815 = vcmp.eq.s32.totalorder %v795, 0
  %vm816 = vcmp.eq.s32.totalorder %v796, 0
  %vm817 = vcmp.eq.s32.totalorder %v797, 0
  %vm818 = vcmp.eq.s32.totalorder %v798, 0
  %vm819 = vcmp.eq.s32.totalorder %v799, 0
  %vm820 = vcmp.eq.s32.totalorder %v800, 0
  %vm821 = vcmp.eq.s32.totalorder %v801, 0
  %vm822 = vcmp.eq.s32.totalorder %v802, 0
  %vm823 = vcmp.eq.s32.totalorder %v803, 0
  %vm824 = vcmp.eq.s32.totalorder %v804, 0
  %vm825 = vcmp.eq.s32.totalorder %v805, 0
  %vm826 = vcmp.eq.s32.totalorder %v806, 0
  %v827 = vsel %vm807, 1, 0
  %v828 = vsel %vm808, 1, 0
  %v829 = vsel %vm809, 1, 0
  %v830 = vsel %vm810, 1, 0
  %v831 = vsel %vm811, 1, 0
  %v832 = vsel %vm812, 1, 0
  %v833 = vsel %vm813, 1, 0
  %v834 = vsel %vm814, 1, 0
  %v835 = vsel %vm815, 1, 0
  %v836 = vsel %vm816, 1, 0
  %v837 = vsel %vm817, 1, 0
  %v838 = vsel %vm818, 1, 0
  %v839 = vsel %vm819, 1, 0
  %v840 = vsel %vm820, 1, 0
  %v841 = vsel %vm821, 1, 0
  %v842 = vsel %vm822, 1, 0
  %v843 = vsel %vm823, 1, 0
  %v844 = vsel %vm824, 1, 0
  %v845 = vsel %vm825, 1, 0
  %v846 = vsel %vm826, 1, 0
  %vm847 = vcmp.eq.s32.totalorder %v827, 1
  %vm848 = vcmp.eq.s32.totalorder %v828, 1
  %vm849 = vcmp.eq.s32.totalorder %v829, 1
  %vm850 = vcmp.eq.s32.totalorder %v830, 1
  %vm851 = vcmp.eq.s32.totalorder %v831, 1
  %vm852 = vcmp.eq.s32.totalorder %v832, 1
  %vm853 = vcmp.eq.s32.totalorder %v833, 1
  %vm854 = vcmp.eq.s32.totalorder %v834, 1
  %vm855 = vcmp.eq.s32.totalorder %v835, 1
  %vm856 = vcmp.eq.s32.totalorder %v836, 1
  %vm857 = vcmp.eq.s32.totalorder %v837, 1
  %vm858 = vcmp.eq.s32.totalorder %v838, 1
  %vm859 = vcmp.eq.s32.totalorder %v839, 1
  %vm860 = vcmp.eq.s32.totalorder %v840, 1
  %vm861 = vcmp.eq.s32.totalorder %v841, 1
  %vm862 = vcmp.eq.s32.totalorder %v842, 1
  %vm863 = vcmp.eq.s32.totalorder %v843, 1
  %vm864 = vcmp.eq.s32.totalorder %v844, 1
  %vm865 = vcmp.eq.s32.totalorder %v845, 1
  %vm866 = vcmp.eq.s32.totalorder %v846, 1
  %vm867 = vmpackc.low %vm847, %vm847
  %vm868 = vmpackc.low %vm848, %vm848
  %vm869 = vmpackc.low %vm849, %vm849
  %vm870 = vmpackc.low %vm850, %vm850
  %vm871 = vmpackc.low %vm851, %vm851
  %vm872 = vmpackc.low %vm852, %vm852
  %vm873 = vmpackc.low %vm853, %vm853
  %vm874 = vmpackc.low %vm854, %vm854
  %vm875 = vmpackc.low %vm855, %vm855
  %vm876 = vmpackc.low %vm856, %vm856
  %vm877 = vmpackc.low %vm857, %vm857
  %vm878 = vmpackc.low %vm858, %vm858
  %vm879 = vmpackc.low %vm859, %vm859
  %vm880 = vmpackc.low %vm860, %vm860
  %vm881 = vmpackc.low %vm861, %vm861
  %vm882 = vmpackc.low %vm862, %vm862
  %vm883 = vmpackc.low %vm863, %vm863
  %vm884 = vmpackc.low %vm864, %vm864
  %vm885 = vmpackc.low %vm865, %vm865
  %vm886 = vmpackc.low %vm866, %vm866
  %v887 = vsel %vm867, 65537, 0
  %v888 = vsel %vm868, 65537, 0
  %v889 = vsel %vm869, 65537, 0
  %v890 = vsel %vm870, 65537, 0
  %v891 = vsel %vm871, 65537, 0
  %v892 = vsel %vm872, 65537, 0
  %v893 = vsel %vm873, 65537, 0
  %v894 = vsel %vm874, 65537, 0
  %v895 = vsel %vm875, 65537, 0
  %v896 = vsel %vm876, 65537, 0
  %v897 = vsel %vm877, 65537, 0
  %v898 = vsel %vm878, 65537, 0
  %v899 = vsel %vm879, 65537, 0
  %v900 = vsel %vm880, 65537, 0
  %v901 = vsel %vm881, 65537, 0
  %v902 = vsel %vm882, 65537, 0
  %v903 = vsel %vm883, 65537, 0
  %v904 = vsel %vm884, 65537, 0
  %v905 = vsel %vm885, 65537, 0
  %v906 = vsel %vm886, 65537, 0
  %v907 = vunpack.c.l.b16 %v887
  %v908 = vunpack.c.l.b16 %v888
  %v909 = vunpack.c.l.b16 %v889
  %v910 = vunpack.c.l.b16 %v890
  %v911 = vunpack.c.l.b16 %v891
  %v912 = vunpack.c.l.b16 %v892
  %v913 = vunpack.c.l.b16 %v893
  %v914 = vunpack.c.l.b16 %v894
  %v915 = vunpack.c.l.b16 %v895
  %v916 = vunpack.c.l.b16 %v896
  %v917 = vunpack.c.l.b16 %v897
  %v918 = vunpack.c.l.b16 %v898
  %v919 = vunpack.c.l.b16 %v899
  %v920 = vunpack.c.l.b16 %v900
  %v921 = vunpack.c.l.b16 %v901
  %v922 = vunpack.c.l.b16 %v902
  %v923 = vunpack.c.l.b16 %v903
  %v924 = vunpack.c.l.b16 %v904
  %v925 = vunpack.c.l.b16 %v905
  %v926 = vunpack.c.l.b16 %v906
  %v927 = vpack.c.b16 %v908, %v907
  %v928 = vpack.c.b16 %v910, %v909
  %v929 = vpack.c.b16 %v912, %v911
  %v930 = vpack.c.b16 %v914, %v913
  %v931 = vpack.c.b16 %v916, %v915
  %v932 = vpack.c.b16 %v918, %v917
  %v933 = vpack.c.b16 %v920, %v919
  %v934 = vpack.c.b16 %v922, %v921
  %v935 = vpack.c.b16 %v924, %v923
  %v936 = vpack.c.b16 %v926, %v925
  %vm937 = vcmp.ne.s16.totalorder %v927, 0
  %vm938 = vcmp.ne.s16.totalorder %v928, 0
  %vm939 = vcmp.ne.s16.totalorder %v929, 0
  %vm940 = vcmp.ne.s16.totalorder %v930, 0
  %vm941 = vcmp.ne.s16.totalorder %v931, 0
  %vm942 = vcmp.ne.s16.totalorder %v932, 0
  %vm943 = vcmp.ne.s16.totalorder %v933, 0
  %vm944 = vcmp.ne.s16.totalorder %v934, 0
  %vm945 = vcmp.ne.s16.totalorder %v935, 0
  %vm946 = vcmp.ne.s16.totalorder %v936, 0
  %v947 = vsel %vm937, 0, %v502
  %v948 = vsel %vm938, 0, %v425
  %v949 = vsel %vm939, 0, %v433
  %v950 = vsel %vm940, 0, %v441
  %v951 = vsel %vm941, 0, %v449
  %v952 = vsel %vm942, 0, %v457
  %v953 = vsel %vm943, 0, %v465
  %v954 = vsel %vm944, 0, %v473
  %v955 = vsel %vm945, 0, %v481
  %v956 = vsel %vm946, 0, %v489
  %vm957 = vcmp.eq.s32.totalorder %v787, 15
  %vm958 = vcmp.eq.s32.totalorder %v788, 15
  %vm959 = vcmp.eq.s32.totalorder %v789, 15
  %vm960 = vcmp.eq.s32.totalorder %v790, 15
  %vm961 = vcmp.eq.s32.totalorder %v791, 15
  %vm962 = vcmp.eq.s32.totalorder %v792, 15
  %vm963 = vcmp.eq.s32.totalorder %v793, 15
  %vm964 = vcmp.eq.s32.totalorder %v794, 15
  %vm965 = vcmp.eq.s32.totalorder %v795, 15
  %vm966 = vcmp.eq.s32.totalorder %v796, 15
  %vm967 = vcmp.eq.s32.totalorder %v797, 15
  %vm968 = vcmp.eq.s32.totalorder %v798, 15
  %vm969 = vcmp.eq.s32.totalorder %v799, 15
  %vm970 = vcmp.eq.s32.totalorder %v800, 15
  %vm971 = vcmp.eq.s32.totalorder %v801, 15
  %vm972 = vcmp.eq.s32.totalorder %v802, 15
  %vm973 = vcmp.eq.s32.totalorder %v803, 15
  %vm974 = vcmp.eq.s32.totalorder %v804, 15
  %vm975 = vcmp.eq.s32.totalorder %v805, 15
  %vm976 = vcmp.eq.s32.totalorder %v806, 15
  %v977 = vsel %vm957, 1, 0
  %v978 = vsel %vm958, 1, 0
  %v979 = vsel %vm959, 1, 0
  %v980 = vsel %vm960, 1, 0
  %v981 = vsel %vm961, 1, 0
  %v982 = vsel %vm962, 1, 0
  %v983 = vsel %vm963, 1, 0
  %v984 = vsel %vm964, 1, 0
  %v985 = vsel %vm965, 1, 0
  %v986 = vsel %vm966, 1, 0
  %v987 = vsel %vm967, 1, 0
  %v988 = vsel %vm968, 1, 0
  %v989 = vsel %vm969, 1, 0
  %v990 = vsel %vm970, 1, 0
  %v991 = vsel %vm971, 1, 0
  %v992 = vsel %vm972, 1, 0
  %v993 = vsel %vm973, 1, 0
  %v994 = vsel %vm974, 1, 0
  %v995 = vsel %vm975, 1, 0
  %v996 = vsel %vm976, 1, 0
  %vm997 = vcmp.eq.s32.totalorder %v977, 1
  %vm998 = vcmp.eq.s32.totalorder %v978, 1
  %vm999 = vcmp.eq.s32.totalorder %v979, 1
  %vm1000 = vcmp.eq.s32.totalorder %v980, 1
  %vm1001 = vcmp.eq.s32.totalorder %v981, 1
  %vm1002 = vcmp.eq.s32.totalorder %v982, 1
  %vm1003 = vcmp.eq.s32.totalorder %v983, 1
  %vm1004 = vcmp.eq.s32.totalorder %v984, 1
  %vm1005 = vcmp.eq.s32.totalorder %v985, 1
  %vm1006 = vcmp.eq.s32.totalorder %v986, 1
  %vm1007 = vcmp.eq.s32.totalorder %v987, 1
  %vm1008 = vcmp.eq.s32.totalorder %v988, 1
  %vm1009 = vcmp.eq.s32.totalorder %v989, 1
  %vm1010 = vcmp.eq.s32.totalorder %v990, 1
  %vm1011 = vcmp.eq.s32.totalorder %v991, 1
  %vm1012 = vcmp.eq.s32.totalorder %v992, 1
  %vm1013 = vcmp.eq.s32.totalorder %v993, 1
  %vm1014 = vcmp.eq.s32.totalorder %v994, 1
  %vm1015 = vcmp.eq.s32.totalorder %v995, 1
  %vm1016 = vcmp.eq.s32.totalorder %v996, 1
  %vm1017 = vmpackc.low %vm997, %vm997
  %vm1018 = vmpackc.low %vm998, %vm998
  %vm1019 = vmpackc.low %vm999, %vm999
  %vm1020 = vmpackc.low %vm1000, %vm1000
  %vm1021 = vmpackc.low %vm1001, %vm1001
  %vm1022 = vmpackc.low %vm1002, %vm1002
  %vm1023 = vmpackc.low %vm1003, %vm1003
  %vm1024 = vmpackc.low %vm1004, %vm1004
  %vm1025 = vmpackc.low %vm1005, %vm1005
  %vm1026 = vmpackc.low %vm1006, %vm1006
  %vm1027 = vmpackc.low %vm1007, %vm1007
  %vm1028 = vmpackc.low %vm1008, %vm1008
  %vm1029 = vmpackc.low %vm1009, %vm1009
  %vm1030 = vmpackc.low %vm1010, %vm1010
  %vm1031 = vmpackc.low %vm1011, %vm1011
  %vm1032 = vmpackc.low %vm1012, %vm1012
  %vm1033 = vmpackc.low %vm1013, %vm1013
  %vm1034 = vmpackc.low %vm1014, %vm1014
  %vm1035 = vmpackc.low %vm1015, %vm1015
  %vm1036 = vmpackc.low %vm1016, %vm1016
  %v1037 = vsel %vm1017, 65537, 0
  %v1038 = vsel %vm1018, 65537, 0
  %v1039 = vsel %vm1019, 65537, 0
  %v1040 = vsel %vm1020, 65537, 0
  %v1041 = vsel %vm1021, 65537, 0
  %v1042 = vsel %vm1022, 65537, 0
  %v1043 = vsel %vm1023, 65537, 0
  %v1044 = vsel %vm1024, 65537, 0
  %v1045 = vsel %vm1025, 65537, 0
  %v1046 = vsel %vm1026, 65537, 0
  %v1047 = vsel %vm1027, 65537, 0
  %v1048 = vsel %vm1028, 65537, 0
  %v1049 = vsel %vm1029, 65537, 0
  %v1050 = vsel %vm1030, 65537, 0
  %v1051 = vsel %vm1031, 65537, 0
  %v1052 = vsel %vm1032, 65537, 0
  %v1053 = vsel %vm1033, 65537, 0
  %v1054 = vsel %vm1034, 65537, 0
  %v1055 = vsel %vm1035, 65537, 0
  %v1056 = vsel %vm1036, 65537, 0
  %v1057 = vunpack.c.l.b16 %v1037
  %v1058 = vunpack.c.l.b16 %v1038
  %v1059 = vunpack.c.l.b16 %v1039
  %v1060 = vunpack.c.l.b16 %v1040
  %v1061 = vunpack.c.l.b16 %v1041
  %v1062 = vunpack.c.l.b16 %v1042
  %v1063 = vunpack.c.l.b16 %v1043
  %v1064 = vunpack.c.l.b16 %v1044
  %v1065 = vunpack.c.l.b16 %v1045
  %v1066 = vunpack.c.l.b16 %v1046
  %v1067 = vunpack.c.l.b16 %v1047
  %v1068 = vunpack.c.l.b16 %v1048
  %v1069 = vunpack.c.l.b16 %v1049
  %v1070 = vunpack.c.l.b16 %v1050
  %v1071 = vunpack.c.l.b16 %v1051
  %v1072 = vunpack.c.l.b16 %v1052
  %v1073 = vunpack.c.l.b16 %v1053
  %v1074 = vunpack.c.l.b16 %v1054
  %v1075 = vunpack.c.l.b16 %v1055
  %v1076 = vunpack.c.l.b16 %v1056
  %v1077 = vpack.c.b16 %v1058, %v1057
  %v1078 = vpack.c.b16 %v1060, %v1059
  %v1079 = vpack.c.b16 %v1062, %v1061
  %v1080 = vpack.c.b16 %v1064, %v1063
  %v1081 = vpack.c.b16 %v1066, %v1065
  %v1082 = vpack.c.b16 %v1068, %v1067
  %v1083 = vpack.c.b16 %v1070, %v1069
  %v1084 = vpack.c.b16 %v1072, %v1071
  %v1085 = vpack.c.b16 %v1074, %v1073
  %v1086 = vpack.c.b16 %v1076, %v1075
  %vm1087 = vcmp.ne.s16.totalorder %v1077, 0
  %vm1088 = vcmp.ne.s16.totalorder %v1078, 0
  %vm1089 = vcmp.ne.s16.totalorder %v1079, 0
  %vm1090 = vcmp.ne.s16.totalorder %v1080, 0
  %vm1091 = vcmp.ne.s16.totalorder %v1081, 0
  %vm1092 = vcmp.ne.s16.totalorder %v1082, 0
  %vm1093 = vcmp.ne.s16.totalorder %v1083, 0
  %vm1094 = vcmp.ne.s16.totalorder %v1084, 0
  %vm1095 = vcmp.ne.s16.totalorder %v1085, 0
  %vm1096 = vcmp.ne.s16.totalorder %v1086, 0
  %v1097 = vsel %vm1087, 0, %v507
  %v1098 = vsel %vm1088, 0, %v510
  %v1099 = vsel %vm1089, 0, %v513
  %v1100 = vsel %vm1090, 0, %v516
  %v1101 = vsel %vm1091, 0, %v519
  %v1102 = vsel %vm1092, 0, %v522
  %v1103 = vsel %vm1093, 0, %v525
  %v1104 = vsel %vm1094, 0, %v528
  %v1105 = vsel %vm1095, 0, %v531
  %v1106 = vsel %vm1096, 0, %v545
  %v1107 = vld [vmem:[%s3] sm:$0xf]
  %v1108 = vld [vmem:[%s3 + $0x4] sm:$0xf]
  %v1109 = vld [vmem:[%s3 + $0x8] sm:$0xf]
  %v1110 = vld [vmem:[%s3 + $0xc] sm:$0xf]
  %v1111 = vld [vmem:[%s3 + $0x10] sm:$0xf]
  %v1112 = vld [vmem:[%s3 + $0x14] sm:$0xf]
  %v1113 = vld [vmem:[%s3 + $0x18] sm:$0xf]
  %v1114 = vld [vmem:[%s3 + $0x1c] sm:$0xf]
  %v1115 = vld [vmem:[%s3 + $0x20] sm:$0xf]
  %v1116 = vld [vmem:[%s3 + $0x24] sm:$0xf]
  %v1117 = vld [vmem:[%s3 + $0x28] sm:$0xf]
  %v1118 = vld [vmem:[%s3 + $0x2c] sm:$0xf]
  %v1119 = vld [vmem:[%s3 + $0x30] sm:$0xf]
  %v1120 = vld [vmem:[%s3 + $0x34] sm:$0xf]
  %v1121 = vld [vmem:[%s3 + $0x38] sm:$0xf]
  %v1122 = vld [vmem:[%s3 + $0x3c] sm:$0xf]
  %v1123 = vld [vmem:[%s3 + $0x40] sm:$0xf]
  %v1124 = vld [vmem:[%s3 + $0x44] sm:$0xf]
  %v1125 = vld [vmem:[%s3 + $0x48] sm:$0xf]
  %v1126 = vld [vmem:[%s3 + $0x4c] sm:$0xf]
  %v1127 = vld [vmem:[%s3 + $0x50] sm:$0xf]
  %v1128 = vld [vmem:[%s3 + $0x54] sm:$0xf]
  %v1129 = vld [vmem:[%s3 + $0x58] sm:$0xf]
  %v1130 = vld [vmem:[%s3 + $0x5c] sm:$0xf]
  %v1131 = vld [vmem:[%s3 + $0x60] sm:$0xf]
  %v1132 = vld [vmem:[%s3 + $0x64] sm:$0xf]
  %v1133 = vld [vmem:[%s3 + $0x68] sm:$0xf]
  %v1134 = vld [vmem:[%s3 + $0x6c] sm:$0xf]
  %v1135 = vld [vmem:[%s3 + $0x70] sm:$0xf]
  %v1136 = vld [vmem:[%s3 + $0x74] sm:$0xf]
  %v1137 = vld [vmem:[%s3 + $0x78] sm:$0xf]
  %v1138 = vld [vmem:[%s3 + $0x7c] sm:$0xf]
  %v1139 = vld [vmem:[%s3 + $0x80] sm:$0xf]
  %v1140 = vld [vmem:[%s3 + $0x84] sm:$0xf]
  %v1141 = vld [vmem:[%s3 + $0x88] sm:$0xf]
  %v1142 = vld [vmem:[%s3 + $0x8c] sm:$0xf]
  %v1143 = vld [vmem:[%s3 + $0x90] sm:$0xf]
  %v1144 = vld [vmem:[%s3 + $0x94] sm:$0xf]
  %v1145 = vld [vmem:[%s3 + $0x98] sm:$0xf]
  %v1146 = vld [vmem:[%s3 + $0x9c] sm:$0xf]
  %v1147 = vld [vmem:[%s3 + $0xa0] sm:$0xf]
  %v1148 = vld [vmem:[%s3 + $0xa4] sm:$0xf]
  %v1149 = vld [vmem:[%s3 + $0xa8] sm:$0xf]
  %v1150 = vld [vmem:[%s3 + $0xac] sm:$0xf]
  %v1151 = vld [vmem:[%s3 + $0xb0] sm:$0xf]
  %v1152 = vld [vmem:[%s3 + $0xb4] sm:$0xf]
  %v1153 = vld [vmem:[%s3 + $0xb8] sm:$0xf]
  %v1154 = vld [vmem:[%s3 + $0xbc] sm:$0xf]
  %v1155 = vld [vmem:[%s4] sm:$0x1]
  %v1157 = vlaneseq
  %v1158 = vshrl.u32 %v1157, 7
  %v1159 = vsub.s32 0, %v1158
  %v1160 = vrot.slane %v1155, %v1159
  %v1210 = vunpack.c.l.b16 %v1107
  %v1211 = vunpack.c.l.b16 %v1108
  %v1212 = vunpack.c.l.b16 %v1109
  %v1213 = vunpack.c.l.b16 %v1110
  %v1214 = vunpack.c.l.b16 %v1111
  %v1215 = vunpack.c.l.b16 %v1112
  %v1216 = vunpack.c.l.b16 %v1113
  %v1217 = vunpack.c.l.b16 %v1114
  %v1218 = vunpack.c.l.b16 %v1115
  %v1219 = vunpack.c.l.b16 %v1116
  %v1220 = vunpack.c.l.b16 %v1117
  %v1221 = vunpack.c.l.b16 %v1118
  %v1222 = vunpack.c.l.b16 %v1119
  %v1223 = vunpack.c.l.b16 %v1120
  %v1224 = vunpack.c.l.b16 %v1121
  %v1225 = vunpack.c.l.b16 %v1122
  %v1226 = vunpack.c.l.b16 %v1123
  %v1227 = vunpack.c.l.b16 %v1124
  %v1228 = vunpack.c.l.b16 %v1125
  %v1229 = vunpack.c.l.b16 %v1126
  %v1230 = vunpack.c.l.b16 %v1127
  %v1231 = vunpack.c.l.b16 %v1128
  %v1232 = vunpack.c.l.b16 %v1129
  %v1233 = vunpack.c.l.b16 %v1130
  %v1234 = vunpack.c.l.b16 %v1131
  %v1235 = vunpack.c.l.b16 %v1132
  %v1236 = vunpack.c.l.b16 %v1133
  %v1237 = vunpack.c.l.b16 %v1134
  %v1238 = vunpack.c.l.b16 %v1135
  %v1239 = vunpack.c.l.b16 %v1136
  %v1240 = vunpack.c.l.b16 %v1137
  %v1241 = vunpack.c.l.b16 %v1138
  %v1242 = vunpack.c.l.b16 %v1139
  %v1243 = vunpack.c.l.b16 %v1140
  %v1244 = vunpack.c.l.b16 %v1141
  %v1245 = vunpack.c.l.b16 %v1142
  %v1246 = vunpack.c.l.b16 %v1143
  %v1247 = vunpack.c.l.b16 %v1144
  %v1248 = vunpack.c.l.b16 %v1145
  %v1249 = vunpack.c.l.b16 %v1146
  %v1250 = vunpack.c.l.b16 %v1147
  %v1251 = vunpack.c.l.b16 %v1148
  %v1252 = vunpack.c.l.b16 %v1149
  %v1253 = vunpack.c.l.b16 %v1150
  %v1254 = vunpack.c.l.b16 %v1151
  %v1255 = vunpack.c.l.b16 %v1152
  %v1256 = vunpack.c.l.b16 %v1153
  %v1257 = vunpack.c.l.b16 %v1154
  %v1258 = vpack.c.b16 %v1211, %v1210
  %v1259 = vpack.c.b16 %v1213, %v1212
  %v1260 = vpack.c.b16 %v1215, %v1214
  %v1261 = vpack.c.b16 %v1217, %v1216
  %v1262 = vpack.c.b16 %v1219, %v1218
  %v1263 = vpack.c.b16 %v1221, %v1220
  %v1264 = vpack.c.b16 %v1223, %v1222
  %v1265 = vpack.c.b16 %v1225, %v1224
  %v1266 = vpack.c.b16 %v1227, %v1226
  %v1267 = vpack.c.b16 %v1229, %v1228
  %v1268 = vpack.c.b16 %v1231, %v1230
  %v1269 = vpack.c.b16 %v1233, %v1232
  %v1270 = vpack.c.b16 %v1235, %v1234
  %v1271 = vpack.c.b16 %v1237, %v1236
  %v1272 = vpack.c.b16 %v1239, %v1238
  %v1273 = vpack.c.b16 %v1241, %v1240
  %v1274 = vpack.c.b16 %v1243, %v1242
  %v1275 = vpack.c.b16 %v1245, %v1244
  %v1276 = vpack.c.b16 %v1247, %v1246
  %v1277 = vpack.c.b16 %v1249, %v1248
  %v1278 = vpack.c.b16 %v1251, %v1250
  %v1279 = vpack.c.b16 %v1253, %v1252
  %v1280 = vpack.c.b16 %v1255, %v1254
  %v1281 = vpack.c.b16 %v1257, %v1256
  %1306 = vmatprep.subr.bf16.mxu0 0
  %1307 = vmatpush1.bf16.msra.mxu0 %v1258
  %1308 = vmatprep.subr.bf16.mxu0 0
  %1309 = vmatpush1.bf16.msra.mxu0 %v1259
  %1310 = vmatprep.subr.bf16.mxu0 0
  %1311 = vmatpush1.bf16.msra.mxu0 %v1260
  %1312 = vmatprep.subr.bf16.mxu0 0
  %1313 = vmatpush1.bf16.msra.mxu0 %v1261
  %1314 = vmatprep.subr.bf16.mxu0 0
  %1315 = vmatpush1.bf16.msra.mxu0 %v1262
  %1316 = vmatprep.subr.bf16.mxu0 0
  %1317 = vmatpush1.bf16.msra.mxu0 %v1263
  %1318 = vmatprep.subr.bf16.mxu0 0
  %1319 = vmatpush1.bf16.msra.mxu0 %v1264
  %1320 = vmatprep.subr.bf16.mxu0 0
  %1321 = vmatpush1.bf16.msra.mxu0 %v1265
  %1322 = vmatprep.subr.bf16.mxu0 0
  %1323 = vmatpush1.bf16.msra.mxu0 %v1266
  %1324 = vmatprep.subr.bf16.mxu0 0
  %1325 = vmatpush1.bf16.msra.mxu0 %v1267
  %1326 = vmatprep.subr.bf16.mxu0 0
  %1327 = vmatpush1.bf16.msra.mxu0 %v1268
  %1328 = vmatprep.subr.bf16.mxu0 0
  %1329 = vmatpush1.bf16.msra.mxu0 %v1269
  %1330 = vmatprep.subr.bf16.mxu0 0
  %1331 = vmatpush1.bf16.msra.mxu0 %v1270
  %1332 = vmatprep.subr.bf16.mxu0 0
  %1333 = vmatpush1.bf16.msra.mxu0 %v1271
  %1334 = vmatprep.subr.bf16.mxu0 0
  %1335 = vmatpush1.bf16.msra.mxu0 %v1272
  %1336 = vmatprep.subr.bf16.mxu0 0
  %1337 = vmatpush1.bf16.msra.mxu0 %v1273
  %1338 = vmatprep.mubr.bf16.mxu0 %v400
  %1339 = vmatmul.mubr.bf16.gmra.mrb[0].mxu0 %v947
  %v1340 = vpop.f32.mrb[0].mxu0
  %v1341 = vadd.f32 %v1160, %v1340
  %v1342 = vpop.f32.mrb[0].mxu0
  %v1343 = vpop.f32.mrb[0].mxu0
  %v1344 = vadd.f32 %v1160, %v1343
  %v1345 = vpop.f32.mrb[0].mxu0
  %1346 = vmatprep.mubr.bf16.mxu0 %v401
  %1347 = vmatmul.mubr.bf16.gmra.mrb[0].mxu0 %v948
  %v1348 = vpop.f32.mrb[0].mxu0
  %v1349 = vadd.f32 %v1160, %v1348
  %v1350 = vpop.f32.mrb[0].mxu0
  %v1351 = vpop.f32.mrb[0].mxu0
  %v1352 = vadd.f32 %v1160, %v1351
  %v1353 = vpop.f32.mrb[0].mxu0
  %1354 = vmatprep.mubr.bf16.mxu0 %v402
  %1355 = vmatmul.mubr.bf16.gmra.mrb[0].mxu0 %v949
  %v1356 = vpop.f32.mrb[0].mxu0
  %v1357 = vadd.f32 %v1160, %v1356
  %v1358 = vpop.f32.mrb[0].mxu0
  %v1359 = vpop.f32.mrb[0].mxu0
  %v1360 = vadd.f32 %v1160, %v1359
  %v1361 = vpop.f32.mrb[0].mxu0
  %1362 = vmatprep.mubr.bf16.mxu0 %v403
  %1363 = vmatmul.mubr.bf16.gmra.mrb[0].mxu0 %v950
  %v1364 = vpop.f32.mrb[0].mxu0
  %v1365 = vadd.f32 %v1160, %v1364
  %v1366 = vpop.f32.mrb[0].mxu0
  %v1367 = vpop.f32.mrb[0].mxu0
  %v1368 = vadd.f32 %v1160, %v1367
  %v1369 = vpop.f32.mrb[0].mxu0
  %1370 = vmatprep.mubr.bf16.mxu0 %v404
  %1371 = vmatmul.mubr.bf16.gmra.mrb[0].mxu0 %v951
  %v1372 = vpop.f32.mrb[0].mxu0
  %v1373 = vadd.f32 %v1160, %v1372
  %v1374 = vpop.f32.mrb[0].mxu0
  %v1375 = vpop.f32.mrb[0].mxu0
  %v1376 = vadd.f32 %v1160, %v1375
  %v1377 = vpop.f32.mrb[0].mxu0
  %1378 = vmatprep.mubr.bf16.mxu0 %v405
  %1379 = vmatmul.mubr.bf16.gmra.mrb[0].mxu0 %v952
  %v1380 = vpop.f32.mrb[0].mxu0
  %v1381 = vadd.f32 %v1160, %v1380
  %v1382 = vpop.f32.mrb[0].mxu0
  %v1383 = vpop.f32.mrb[0].mxu0
  %v1384 = vadd.f32 %v1160, %v1383
  %v1385 = vpop.f32.mrb[0].mxu0
  %1386 = vmatprep.mubr.bf16.mxu0 %v406
  %1387 = vmatmul.mubr.bf16.gmra.mrb[0].mxu0 %v953
  %v1388 = vpop.f32.mrb[0].mxu0
  %v1389 = vadd.f32 %v1160, %v1388
  %v1390 = vpop.f32.mrb[0].mxu0
  %v1391 = vpop.f32.mrb[0].mxu0
  %v1392 = vadd.f32 %v1160, %v1391
  %v1393 = vpop.f32.mrb[0].mxu0
  %1394 = vmatprep.mubr.bf16.mxu0 %v407
  %1395 = vmatmul.mubr.bf16.gmra.mrb[0].mxu0 %v954
  %v1396 = vpop.f32.mrb[0].mxu0
  %v1397 = vadd.f32 %v1160, %v1396
  %v1398 = vpop.f32.mrb[0].mxu0
  %v1399 = vpop.f32.mrb[0].mxu0
  %v1400 = vadd.f32 %v1160, %v1399
  %v1401 = vpop.f32.mrb[0].mxu0
  %1402 = vmatprep.mubr.bf16.mxu0 %v408
  %1403 = vmatmul.mubr.bf16.gmra.mrb[0].mxu0 %v955
  %v1404 = vpop.f32.mrb[0].mxu0
  %v1405 = vadd.f32 %v1160, %v1404
  %v1406 = vpop.f32.mrb[0].mxu0
  %v1407 = vpop.f32.mrb[0].mxu0
  %v1408 = vadd.f32 %v1160, %v1407
  %v1409 = vpop.f32.mrb[0].mxu0
  %1410 = vmatprep.mubr.bf16.mxu0 %v409
  %1411 = vmatmul.mubr.bf16.gmra.mrb[0].mxu0 %v956
  %v1412 = vpop.f32.mrb[0].mxu0
  %v1413 = vadd.f32 %v1160, %v1412
  %v1414 = vpop.f32.mrb[0].mxu0
  %v1415 = vpop.f32.mrb[0].mxu0
  %v1416 = vadd.f32 %v1160, %v1415
  %v1417 = vpop.f32.mrb[0].mxu0
  %1418 = vdwg.mxu0
  %1419 = vmatprep.subr.bf16.mxu0 0
  %1420 = vmatpush1.bf16.msra.mxu0 %v1274
  %1421 = vmatprep.subr.bf16.mxu0 0
  %1422 = vmatpush1.bf16.msra.mxu0 %v1275
  %1423 = vmatprep.subr.bf16.mxu0 0
  %1424 = vmatpush1.bf16.msra.mxu0 %v1276
  %1425 = vmatprep.subr.bf16.mxu0 0
  %1426 = vmatpush1.bf16.msra.mxu0 %v1277
  %1427 = vmatprep.subr.bf16.mxu0 0
  %1428 = vmatpush1.bf16.msra.mxu0 %v1278
  %1429 = vmatprep.subr.bf16.mxu0 0
  %1430 = vmatpush1.bf16.msra.mxu0 %v1279
  %1431 = vmatprep.subr.bf16.mxu0 0
  %1432 = vmatpush1.bf16.msra.mxu0 %v1280
  %1433 = vmatprep.subr.bf16.mxu0 0
  %1434 = vmatpush1.bf16.msra.mxu0 %v1281
  %1435 = vmatprep.subr.bf16.mxu0 0
  %1436 = vmatpush1.bf16.msra.mxu0 0
  %1437 = vmatprep.subr.bf16.mxu0 0
  %1438 = vmatpush1.bf16.msra.mxu0 0
  %1439 = vmatprep.subr.bf16.mxu0 0
  %1440 = vmatpush1.bf16.msra.mxu0 0
  %1441 = vmatprep.subr.bf16.mxu0 0
  %1442 = vmatpush1.bf16.msra.mxu0 0
  %1443 = vmatprep.subr.bf16.mxu0 0
  %1444 = vmatpush1.bf16.msra.mxu0 0
  %1445 = vmatprep.subr.bf16.mxu0 0
  %1446 = vmatpush1.bf16.msra.mxu0 0
  %1447 = vmatprep.subr.bf16.mxu0 0
  %1448 = vmatpush1.bf16.msra.mxu0 0
  %1449 = vmatprep.subr.bf16.mxu0 0
  %1450 = vmatpush1.bf16.msra.mxu0 0
  %1451 = vmatprep.mubr.bf16.mxu0 0
  %1452 = vmatmul.mubr.bf16.gmra.mrb[0].mxu0 %v1097
  %v1453 = vpop.f32.mrb[0].mxu0
  %v1454 = vadd.f32 %v1341, %v1453
  %v1455 = vpop.f32.mrb[0].mxu0
  %v1456 = vpop.f32.mrb[0].mxu0
  %v1457 = vadd.f32 %v1344, %v1456
  %v1458 = vpop.f32.mrb[0].mxu0
  %1459 = vmatprep.mubr.bf16.mxu0 0
  %1460 = vmatmul.mubr.bf16.gmra.mrb[0].mxu0 %v1098
  %v1461 = vpop.f32.mrb[0].mxu0
  %v1462 = vadd.f32 %v1349, %v1461
  %v1463 = vpop.f32.mrb[0].mxu0
  %v1464 = vpop.f32.mrb[0].mxu0
  %v1465 = vadd.f32 %v1352, %v1464
  %v1466 = vpop.f32.mrb[0].mxu0
  %1467 = vmatprep.mubr.bf16.mxu0 0
  %1468 = vmatmul.mubr.bf16.gmra.mrb[0].mxu0 %v1099
  %v1469 = vpop.f32.mrb[0].mxu0
  %v1470 = vadd.f32 %v1357, %v1469
  %v1471 = vpop.f32.mrb[0].mxu0
  %v1472 = vpop.f32.mrb[0].mxu0
  %v1473 = vadd.f32 %v1360, %v1472
  %v1474 = vpop.f32.mrb[0].mxu0
  %1475 = vmatprep.mubr.bf16.mxu0 0
  %1476 = vmatmul.mubr.bf16.gmra.mrb[0].mxu0 %v1100
  %v1477 = vpop.f32.mrb[0].mxu0
  %v1478 = vadd.f32 %v1365, %v1477
  %v1479 = vpop.f32.mrb[0].mxu0
  %v1480 = vpop.f32.mrb[0].mxu0
  %v1481 = vadd.f32 %v1368, %v1480
  %v1482 = vpop.f32.mrb[0].mxu0
  %1483 = vmatprep.mubr.bf16.mxu0 0
  %1484 = vmatmul.mubr.bf16.gmra.mrb[0].mxu0 %v1101
  %v1485 = vpop.f32.mrb[0].mxu0
  %v1486 = vadd.f32 %v1373, %v1485
  %v1487 = vpop.f32.mrb[0].mxu0
  %v1488 = vpop.f32.mrb[0].mxu0
  %v1489 = vadd.f32 %v1376, %v1488
  %v1490 = vpop.f32.mrb[0].mxu0
  %1491 = vmatprep.mubr.bf16.mxu0 0
  %1492 = vmatmul.mubr.bf16.gmra.mrb[0].mxu0 %v1102
  %v1493 = vpop.f32.mrb[0].mxu0
  %v1494 = vadd.f32 %v1381, %v1493
  %v1495 = vpop.f32.mrb[0].mxu0
  %v1496 = vpop.f32.mrb[0].mxu0
  %v1497 = vadd.f32 %v1384, %v1496
  %v1498 = vpop.f32.mrb[0].mxu0
  %1499 = vmatprep.mubr.bf16.mxu0 0
  %1500 = vmatmul.mubr.bf16.gmra.mrb[0].mxu0 %v1103
  %v1501 = vpop.f32.mrb[0].mxu0
  %v1502 = vadd.f32 %v1389, %v1501
  %v1503 = vpop.f32.mrb[0].mxu0
  %v1504 = vpop.f32.mrb[0].mxu0
  %v1505 = vadd.f32 %v1392, %v1504
  %v1506 = vpop.f32.mrb[0].mxu0
  %1507 = vmatprep.mubr.bf16.mxu0 0
  %1508 = vmatmul.mubr.bf16.gmra.mrb[0].mxu0 %v1104
  %v1509 = vpop.f32.mrb[0].mxu0
  %v1510 = vadd.f32 %v1397, %v1509
  %v1511 = vpop.f32.mrb[0].mxu0
  %v1512 = vpop.f32.mrb[0].mxu0
  %v1513 = vadd.f32 %v1400, %v1512
  %v1514 = vpop.f32.mrb[0].mxu0
  %1515 = vmatprep.mubr.bf16.mxu0 0
  %1516 = vmatmul.mubr.bf16.gmra.mrb[0].mxu0 %v1105
  %v1517 = vpop.f32.mrb[0].mxu0
  %v1518 = vadd.f32 %v1405, %v1517
  %v1519 = vpop.f32.mrb[0].mxu0
  %v1520 = vpop.f32.mrb[0].mxu0
  %v1521 = vadd.f32 %v1408, %v1520
  %v1522 = vpop.f32.mrb[0].mxu0
  %1523 = vmatprep.mubr.bf16.mxu0 0
  %1524 = vmatmul.mubr.bf16.gmra.mrb[0].mxu0 %v1106
  %v1525 = vpop.f32.mrb[0].mxu0
  %v1526 = vadd.f32 %v1413, %v1525
  %v1527 = vpop.f32.mrb[0].mxu0
  %v1528 = vpop.f32.mrb[0].mxu0
  %v1529 = vadd.f32 %v1416, %v1528
  %v1530 = vpop.f32.mrb[0].mxu0
  %1531 = vdwg.mxu0
  %v1532 = vmax.f32 %v1454, 0.0
  %v1533 = vmax.f32 %v1457, 0.0
  %v1534 = vmax.f32 %v1462, 0.0
  %v1535 = vmax.f32 %v1465, 0.0
  %v1536 = vmax.f32 %v1470, 0.0
  %v1537 = vmax.f32 %v1473, 0.0
  %v1538 = vmax.f32 %v1478, 0.0
  %v1539 = vmax.f32 %v1481, 0.0
  %v1540 = vmax.f32 %v1486, 0.0
  %v1541 = vmax.f32 %v1489, 0.0
  %v1542 = vmax.f32 %v1494, 0.0
  %v1543 = vmax.f32 %v1497, 0.0
  %v1544 = vmax.f32 %v1502, 0.0
  %v1545 = vmax.f32 %v1505, 0.0
  %v1546 = vmax.f32 %v1510, 0.0
  %v1547 = vmax.f32 %v1513, 0.0
  %v1548 = vmax.f32 %v1518, 0.0
  %v1549 = vmax.f32 %v1521, 0.0
  %v1550 = vmax.f32 %v1526, 0.0
  %v1551 = vmax.f32 %v1529, 0.0
  %v1552 = vpack.c.bf16 %v1533, %v1532
  %v1553 = vpack.c.bf16 %v1535, %v1534
  %v1554 = vpack.c.bf16 %v1537, %v1536
  %v1555 = vpack.c.bf16 %v1539, %v1538
  %v1556 = vpack.c.bf16 %v1541, %v1540
  %v1557 = vpack.c.bf16 %v1543, %v1542
  %v1558 = vpack.c.bf16 %v1545, %v1544
  %v1559 = vpack.c.bf16 %v1547, %v1546
  %v1560 = vpack.c.bf16 %v1549, %v1548
  %v1561 = vpack.c.bf16 %v1551, %v1550
  %v1572 = vunpack.c.l.b16 %v1552
  %v1573 = vunpack.c.h.b16 %v1552
  %v1574 = vunpack.c.l.b16 %v1553
  %v1575 = vunpack.c.h.b16 %v1553
  %v1576 = vunpack.c.l.b16 %v1554
  %v1577 = vunpack.c.h.b16 %v1554
  %v1578 = vunpack.c.l.b16 %v1555
  %v1579 = vunpack.c.h.b16 %v1555
  %v1580 = vunpack.c.l.b16 %v1556
  %v1581 = vunpack.c.h.b16 %v1556
  %v1582 = vunpack.c.l.b16 %v1557
  %v1583 = vunpack.c.h.b16 %v1557
  %v1584 = vunpack.c.l.b16 %v1558
  %v1585 = vunpack.c.h.b16 %v1558
  %v1586 = vunpack.c.l.b16 %v1559
  %v1587 = vunpack.c.h.b16 %v1559
  %v1588 = vunpack.c.l.b16 %v1560
  %v1589 = vunpack.c.h.b16 %v1560
  %v1590 = vunpack.c.l.b16 %v1561
  %v1591 = vunpack.c.h.b16 %v1561
  %v1592 = vpack.c.b16 %v1572, %v1572
  %v1593 = vpack.c.b16 %v1573, %v1573
  %v1594 = vpack.c.b16 %v1574, %v1574
  %v1595 = vpack.c.b16 %v1575, %v1575
  %v1596 = vpack.c.b16 %v1576, %v1576
  %v1597 = vpack.c.b16 %v1577, %v1577
  %v1598 = vpack.c.b16 %v1578, %v1578
  %v1599 = vpack.c.b16 %v1579, %v1579
  %v1600 = vpack.c.b16 %v1580, %v1580
  %v1601 = vpack.c.b16 %v1581, %v1581
  %v1602 = vpack.c.b16 %v1582, %v1582
  %v1603 = vpack.c.b16 %v1583, %v1583
  %v1604 = vpack.c.b16 %v1584, %v1584
  %v1605 = vpack.c.b16 %v1585, %v1585
  %v1606 = vpack.c.b16 %v1586, %v1586
  %v1607 = vpack.c.b16 %v1587, %v1587
  %v1608 = vpack.c.b16 %v1588, %v1588
  %v1609 = vpack.c.b16 %v1589, %v1589
  %v1610 = vpack.c.b16 %v1590, %v1590
  %v1611 = vpack.c.b16 %v1591, %v1591
  %1632 = vst [vmem:[%s5] sm:$0xf] %v1592
  %1633 = vst [vmem:[%s5 + $0x4] sm:$0xf] %v1593
  %1634 = vst [vmem:[%s5 + $0x8] sm:$0xf] %v1594
  %1635 = vst [vmem:[%s5 + $0xc] sm:$0xf] %v1595
  %1636 = vst [vmem:[%s5 + $0x10] sm:$0xf] %v1596
  %1637 = vst [vmem:[%s5 + $0x14] sm:$0xf] %v1597
  %1638 = vst [vmem:[%s5 + $0x18] sm:$0xf] %v1598
  %1639 = vst [vmem:[%s5 + $0x1c] sm:$0xf] %v1599
  %1640 = vst [vmem:[%s5 + $0x20] sm:$0xf] %v1600
  %1641 = vst [vmem:[%s5 + $0x24] sm:$0xf] %v1601
  %1642 = vst [vmem:[%s5 + $0x28] sm:$0xf] %v1602
  %1643 = vst [vmem:[%s5 + $0x2c] sm:$0xf] %v1603
  %1644 = vst [vmem:[%s5 + $0x30] sm:$0xf] %v1604
  %1645 = vst [vmem:[%s5 + $0x34] sm:$0xf] %v1605
  %1646 = vst [vmem:[%s5 + $0x38] sm:$0xf] %v1606
  %1647 = vst [vmem:[%s5 + $0x3c] sm:$0xf] %v1607
  %1648 = vst [vmem:[%s5 + $0x40] sm:$0xf] %v1608
  %1649 = vst [vmem:[%s5 + $0x44] sm:$0xf] %v1609
  %1650 = vst [vmem:[%s5 + $0x48] sm:$0xf] %v1610
  %1651 = vst [vmem:[%s5 + $0x4c] sm:$0xf] %v1611
  // Predicated region
  $region22: #{dcefm_forward.3} parent=0 // pred_check
    _
  $region23: #{dcefm_forward.3} parent=0 // pred_check_branch
    %1653 = sbr.rel (0) target = $region25
  $region24: #{dcefm_forward.3} parent=0 // pred_region
    _
  $region25: #{dcefm_forward.3} parent=0 // pred_fallthru
    _
  // Predicated region
  $region26: #{dcefm_forward.3} parent=0 // pred_check
    _
  $region27: #{dcefm_forward.3} parent=0 // pred_check_branch
    %1655 = sbr.rel (0) target = $region29
  $region28: #{dcefm_forward.3} parent=0 // pred_region
    _
  $region29: #{dcefm_forward.3} parent=0 // pred_fallthru
    _

// kernel: dcefm_forward.5
$region0: #{dcefm_forward.5}
  #allocation0 [shape = 'u32[]', space=smem, size = 0x4, offset = 0x4, fixed_abs, tag = 'smem constant byte address 0x4 - core index']
  #allocation1 [shape = 'u32[144,128]{1,0:T(1,128)}', space=vmem, size = 0x12000, scoped, tag = 'internal scratch']
  %s0 = inlined_call_operand.vmem [shape: bf16[10,2048], index: 0, kind: input, shape index: {}]
  %s1 = inlined_call_operand.vmem [shape: bf16[2,2048], index: 1, kind: input, shape index: {}]
  %s2 = inlined_call_operand.vmem [shape: bf16[2048,128], index: 2, kind: input, shape index: {}]
  %s3 = inlined_call_operand.vmem [shape: f32[1,128], index: 3, kind: input, shape index: {}]
  %s4 = inlined_call_operand.vmem [shape: bf16[2048,128], index: 4, kind: input, shape index: {}]
  %s5 = inlined_call_operand.vmem [shape: f32[1,128], index: 5, kind: input, shape index: {}]
  %s6 = inlined_call_operand.vmem [shape: bf16[2,128], index: 6, kind: input, shape index: {}]
  %s7 = inlined_call_operand.vmem [shape: bf16[128,128], index: 7, kind: input, shape index: {}]
  %s8 = inlined_call_operand.vmem [shape: bf16[128,128], index: 8, kind: input, shape index: {}]
  %s9 = inlined_call_operand.vmem [shape: f32[1,128], index: 9, kind: input, shape index: {}]
  %s10 = inlined_call_operand.vmem [shape: bf16[128,128], index: 10, kind: input, shape index: {}]
  %s11 = inlined_call_operand.vmem [shape: f32[1,128], index: 11, kind: input, shape index: {}]
  %s12 = inlined_call_operand.vmem [shape: f32[2,1], index: 12, kind: output, shape index: {0}]
  %s13 = inlined_call_operand.hbm [shape: f32[1,1], index: 13, kind: output, shape index: {1}]
  %s14 = inlined_call_operand.hbm [shape: f32[1,1], index: 14, kind: output, shape index: {2}]
  %15 = xla_tuple %s12, %s13, %s14
  %s16 = sld [smem:[#allocation0]]
  $region74: #{dcefm_forward.5} parent=0
    _
  %s18 = ssub.s32 1, %s16
  %s19 = scalar_select 0, %s18, %s16
  $region1: #{dcefm_forward.5} parent=0
    #allocation2 [shape = 'u8[512]{0}', space=vmem, size = 0x400, scoped, tag = 'output window, operand 1, single buffered']
    #allocation3 [shape = 's32[1]{0}', space=sflag, size = 0x4, scoped, tag = 'scoped memory for dcefm_forward.5']
    #allocation4 [shape = 'u8[512]{0}', space=vmem, size = 0x400, scoped, tag = 'output window, operand 2, single buffered']
    #allocation5 [shape = 's32[1]{0}', space=sflag, size = 0x4, scoped, tag = 'scoped memory for dcefm_forward.5']
    %20 = vsyncpa [#allocation3], 0
    %21 = vsyncpa [#allocation5], 0
    // Predicated region
    $region2: #{dcefm_forward.5} parent=1 // pred_check
      _
    $region3: #{dcefm_forward.5} parent=1 // pred_check_branch
      %23 = sbr.rel (0) target = $region5
    $region4: #{dcefm_forward.5} parent=1 // pred_region
      _
    $region5: #{dcefm_forward.5} parent=1 // pred_fallthru
      _
    // Predicated region
    $region6: #{dcefm_forward.5} parent=1 // pred_check
      _
    $region7: #{dcefm_forward.5} parent=1 // pred_check_branch
      %25 = sbr.rel (0) target = $region9
    $region8: #{dcefm_forward.5} parent=1 // pred_region
      _
    $region9: #{dcefm_forward.5} parent=1 // pred_fallthru
      _
    // Predicated region
    $region10: #{dcefm_forward.5} parent=1 // pred_check
      _
    $region11: #{dcefm_forward.5} parent=1 // pred_check_branch
      %27 = sbr.rel (0) target = $region13
    $region12: #{dcefm_forward.5} parent=1 // pred_region
      _
    $region13: #{dcefm_forward.5} parent=1 // pred_fallthru
      _
    // Predicated region
    $region14: #{dcefm_forward.5} parent=1 // pred_check
      _
    $region15: #{dcefm_forward.5} parent=1 // pred_check_branch
      %29 = sbr.rel (0) target = $region17
    $region16: #{dcefm_forward.5} parent=1 // pred_region
      _
    $region17: #{dcefm_forward.5} parent=1 // pred_fallthru
      _
    // Predicated region
    $region18: #{dcefm_forward.5} parent=1 // pred_check
      _
    $region19: #{dcefm_forward.5} parent=1 // pred_check_branch
      %31 = sbr.rel (0) target = $region21
    $region20: #{dcefm_forward.5} parent=1 // pred_region
      _
    $region21: #{dcefm_forward.5} parent=1 // pred_fallthru
      _
    // Predicated region
    $region22: #{dcefm_forward.5} parent=1 // pred_check
      _
    $region23: #{dcefm_forward.5} parent=1 // pred_check_branch
      %33 = sbr.rel (0) target = $region25
    $region24: #{dcefm_forward.5} parent=1 // pred_region
      _
    $region25: #{dcefm_forward.5} parent=1 // pred_fallthru
      _
    // Predicated region
    $region26: #{dcefm_forward.5} parent=1 // pred_check
      _
    $region27: #{dcefm_forward.5} parent=1 // pred_check_branch
      %35 = sbr.rel (0) target = $region29
    $region28: #{dcefm_forward.5} parent=1 // pred_region
      _
    $region29: #{dcefm_forward.5} parent=1 // pred_fallthru
      _
    // Predicated region
    $region30: #{dcefm_forward.5} parent=1 // pred_check
      _
    $region31: #{dcefm_forward.5} parent=1 // pred_check_branch
      %37 = sbr.rel (0) target = $region33
    $region32: #{dcefm_forward.5} parent=1 // pred_region
      _
    $region33: #{dcefm_forward.5} parent=1 // pred_fallthru
      _
    // Predicated region
    $region34: #{dcefm_forward.5} parent=1 // pred_check
      _
    $region35: #{dcefm_forward.5} parent=1 // pred_check_branch
      %39 = sbr.rel (0) target = $region37
    $region36: #{dcefm_forward.5} parent=1 // pred_region
      _
    $region37: #{dcefm_forward.5} parent=1 // pred_fallthru
      _
    // Predicated region
    $region38: #{dcefm_forward.5} parent=1 // pred_check
      _
    $region39: #{dcefm_forward.5} parent=1 // pred_check_branch
      %41 = sbr.rel (0) target = $region41
    $region40: #{dcefm_forward.5} parent=1 // pred_region
      _
    $region41: #{dcefm_forward.5} parent=1 // pred_fallthru
      _
    // Predicated region
    $region42: #{dcefm_forward.5} parent=1 // pred_check
      _
    $region43: #{dcefm_forward.5} parent=1 // pred_check_branch
      %43 = sbr.rel (0) target = $region45
    $region44: #{dcefm_forward.5} parent=1 // pred_region
      _
    $region45: #{dcefm_forward.5} parent=1 // pred_fallthru
      _
    // Predicated region
    $region46: #{dcefm_forward.5} parent=1 // pred_check
      _
    $region47: #{dcefm_forward.5} parent=1 // pred_check_branch
      %45 = sbr.rel (0) target = $region49
    $region48: #{dcefm_forward.5} parent=1 // pred_region
      _
    $region49: #{dcefm_forward.5} parent=1 // pred_fallthru
      _
    %v47 = vld [vmem:[%s0] sm:$0xff]
    %v48 = vld [vmem:[%s0 + $0x8] sm:$0xff]
    %v49 = vld [vmem:[%s0 + $0x10] sm:$0xff]
    %v50 = vld [vmem:[%s0 + $0x18] sm:$0xff]
    %v51 = vld [vmem:[%s0 + $0x20] sm:$0xff]
    %v52 = vld [vmem:[%s0 + $0x28] sm:$0xff]
    %v53 = vld [vmem:[%s0 + $0x30] sm:$0xff]
    %v54 = vld [vmem:[%s0 + $0x38] sm:$0xff]
    %v55 = vld [vmem:[%s0 + $0x40] sm:$0x11]
    %v56 = vld [vmem:[%s0 + $0x48] sm:$0x11]
    %v57 = vld [vmem:[%s0 + $0x50] sm:$0x11]
    %v58 = vld [vmem:[%s0 + $0x58] sm:$0x11]
    %v59 = vld [vmem:[%s0 + $0x60] sm:$0x11]
    %v60 = vld [vmem:[%s0 + $0x68] sm:$0x11]
    %v61 = vld [vmem:[%s0 + $0x70] sm:$0x11]
    %v62 = vld [vmem:[%s0 + $0x78] sm:$0x11]
    %v63 = vld [vmem:[%s2] sm:$0xf]
    %v64 = vld [vmem:[%s2 + $0x4] sm:$0xf]
    %v65 = vld [vmem:[%s2 + $0x8] sm:$0xf]
    %v66 = vld [vmem:[%s2 + $0xc] sm:$0xf]
    %v67 = vld [vmem:[%s2 + $0x10] sm:$0xf]
    %v68 = vld [vmem:[%s2 + $0x14] sm:$0xf]
    %v69 = vld [vmem:[%s2 + $0x18] sm:$0xf]
    %v70 = vld [vmem:[%s2 + $0x1c] sm:$0xf]
    %v71 = vld [vmem:[%s2 + $0x20] sm:$0xf]
    %v72 = vld [vmem:[%s2 + $0x24] sm:$0xf]
    %v73 = vld [vmem:[%s2 + $0x28] sm:$0xf]
    %v74 = vld [vmem:[%s2 + $0x2c] sm:$0xf]
    %v75 = vld [vmem:[%s2 + $0x30] sm:$0xf]
    %v76 = vld [vmem:[%s2 + $0x34] sm:$0xf]
    %v77 = vld [vmem:[%s2 + $0x38] sm:$0xf]
    %v78 = vld [vmem:[%s2 + $0x3c] sm:$0xf]
    %v79 = vld [vmem:[%s2 + $0x40] sm:$0xf]
    %v80 = vld [vmem:[%s2 + $0x44] sm:$0xf]
    %v81 = vld [vmem:[%s2 + $0x48] sm:$0xf]
    %v82 = vld [vmem:[%s2 + $0x4c] sm:$0xf]
    %v83 = vld [vmem:[%s2 + $0x50] sm:$0xf]
    %v84 = vld [vmem:[%s2 + $0x54] sm:$0xf]
    %v85 = vld [vmem:[%s2 + $0x58] sm:$0xf]
    %v86 = vld [vmem:[%s2 + $0x5c] sm:$0xf]
    %v87 = vld [vmem:[%s2 + $0x60] sm:$0xf]
    %v88 = vld [vmem:[%s2 + $0x64] sm:$0xf]
    %v89 = vld [vmem:[%s2 + $0x68] sm:$0xf]
    %v90 = vld [vmem:[%s2 + $0x6c] sm:$0xf]
    %v91 = vld [vmem:[%s2 + $0x70] sm:$0xf]
    %v92 = vld [vmem:[%s2 + $0x74] sm:$0xf]
    %v93 = vld [vmem:[%s2 + $0x78] sm:$0xf]
    %v94 = vld [vmem:[%s2 + $0x7c] sm:$0xf]
    %v95 = vld [vmem:[%s2 + $0x80] sm:$0xf]
    %v96 = vld [vmem:[%s2 + $0x84] sm:$0xf]
    %v97 = vld [vmem:[%s2 + $0x88] sm:$0xf]
    %v98 = vld [vmem:[%s2 + $0x8c] sm:$0xf]
    %v99 = vld [vmem:[%s2 + $0x90] sm:$0xf]
    %v100 = vld [vmem:[%s2 + $0x94] sm:$0xf]
    %v101 = vld [vmem:[%s2 + $0x98] sm:$0xf]
    %v102 = vld [vmem:[%s2 + $0x9c] sm:$0xf]
    %v103 = vld [vmem:[%s2 + $0xa0] sm:$0xf]
    %v104 = vld [vmem:[%s2 + $0xa4] sm:$0xf]
    %v105 = vld [vmem:[%s2 + $0xa8] sm:$0xf]
    %v106 = vld [vmem:[%s2 + $0xac] sm:$0xf]
    %v107 = vld [vmem:[%s2 + $0xb0] sm:$0xf]
    %v108 = vld [vmem:[%s2 + $0xb4] sm:$0xf]
    %v109 = vld [vmem:[%s2 + $0xb8] sm:$0xf]
    %v110 = vld [vmem:[%s2 + $0xbc] sm:$0xf]
    %v111 = vld [vmem:[%s2 + $0xc0] sm:$0xf]
    %v112 = vld [vmem:[%s2 + $0xc4] sm:$0xf]
    %v113 = vld [vmem:[%s2 + $0xc8] sm:$0xf]
    %v114 = vld [vmem:[%s2 + $0xcc] sm:$0xf]
    %v115 = vld [vmem:[%s2 + $0xd0] sm:$0xf]
    %v116 = vld [vmem:[%s2 + $0xd4] sm:$0xf]
    %v117 = vld [vmem:[%s2 + $0xd8] sm:$0xf]
    %v118 = vld [vmem:[%s2 + $0xdc] sm:$0xf]
    %v119 = vld [vmem:[%s2 + $0xe0] sm:$0xf]
    %v120 = vld [vmem:[%s2 + $0xe4] sm:$0xf]
    %v121 = vld [vmem:[%s2 + $0xe8] sm:$0xf]
    %v122 = vld [vmem:[%s2 + $0xec] sm:$0xf]
    %v123 = vld [vmem:[%s2 + $0xf0] sm:$0xf]
    %v124 = vld [vmem:[%s2 + $0xf4] sm:$0xf]
    %v125 = vld [vmem:[%s2 + $0xf8] sm:$0xf]
    %v126 = vld [vmem:[%s2 + $0xfc] sm:$0xf]
    %v127 = vld [vmem:[%s2 + $0x100] sm:$0xf]
    %v128 = vld [vmem:[%s2 + $0x104] sm:$0xf]
    %v129 = vld [vmem:[%s2 + $0x108] sm:$0xf]
    %v130 = vld [vmem:[%s2 + $0x10c] sm:$0xf]
    %v131 = vld [vmem:[%s2 + $0x110] sm:$0xf]
    %v132 = vld [vmem:[%s2 + $0x114] sm:$0xf]
    %v133 = vld [vmem:[%s2 + $0x118] sm:$0xf]
    %v134 = vld [vmem:[%s2 + $0x11c] sm:$0xf]
    %v135 = vld [vmem:[%s2 + $0x120] sm:$0xf]
    %v136 = vld [vmem:[%s2 + $0x124] sm:$0xf]
    %v137 = vld [vmem:[%s2 + $0x128] sm:$0xf]
    %v138 = vld [vmem:[%s2 + $0x12c] sm:$0xf]
    %v139 = vld [vmem:[%s2 + $0x130] sm:$0xf]
    %v140 = vld [vmem:[%s2 + $0x134] sm:$0xf]
    %v141 = vld [vmem:[%s2 + $0x138] sm:$0xf]
    %v142 = vld [vmem:[%s2 + $0x13c] sm:$0xf]
    %v143 = vld [vmem:[%s2 + $0x140] sm:$0xf]
    %v144 = vld [vmem:[%s2 + $0x144] sm:$0xf]
    %v145 = vld [vmem:[%s2 + $0x148] sm:$0xf]
    %v146 = vld [vmem:[%s2 + $0x14c] sm:$0xf]
    %v147 = vld [vmem:[%s2 + $0x150] sm:$0xf]
    %v148 = vld [vmem:[%s2 + $0x154] sm:$0xf]
    %v149 = vld [vmem:[%s2 + $0x158] sm:$0xf]
    %v150 = vld [vmem:[%s2 + $0x15c] sm:$0xf]
    %v151 = vld [vmem:[%s2 + $0x160] sm:$0xf]
    %v152 = vld [vmem:[%s2 + $0x164] sm:$0xf]
    %v153 = vld [vmem:[%s2 + $0x168] sm:$0xf]
    %v154 = vld [vmem:[%s2 + $0x16c] sm:$0xf]
    %v155 = vld [vmem:[%s2 + $0x170] sm:$0xf]
    %v156 = vld [vmem:[%s2 + $0x174] sm:$0xf]
    %v157 = vld [vmem:[%s2 + $0x178] sm:$0xf]
    %v158 = vld [vmem:[%s2 + $0x17c] sm:$0xf]
    %v159 = vld [vmem:[%s2 + $0x180] sm:$0xf]
    %v160 = vld [vmem:[%s2 + $0x184] sm:$0xf]
    %v161 = vld [vmem:[%s2 + $0x188] sm:$0xf]
    %v162 = vld [vmem:[%s2 + $0x18c] sm:$0xf]
    %v163 = vld [vmem:[%s2 + $0x190] sm:$0xf]
    %v164 = vld [vmem:[%s2 + $0x194] sm:$0xf]
    %v165 = vld [vmem:[%s2 + $0x198] sm:$0xf]
    %v166 = vld [vmem:[%s2 + $0x19c] sm:$0xf]
    %v167 = vld [vmem:[%s2 + $0x1a0] sm:$0xf]
    %v168 = vld [vmem:[%s2 + $0x1a4] sm:$0xf]
    %v169 = vld [vmem:[%s2 + $0x1a8] sm:$0xf]
    %v170 = vld [vmem:[%s2 + $0x1ac] sm:$0xf]
    %v171 = vld [vmem:[%s2 + $0x1b0] sm:$0xf]
    %v172 = vld [vmem:[%s2 + $0x1b4] sm:$0xf]
    %v173 = vld [vmem:[%s2 + $0x1b8] sm:$0xf]
    %v174 = vld [vmem:[%s2 + $0x1bc] sm:$0xf]
    %v175 = vld [vmem:[%s2 + $0x1c0] sm:$0xf]
    %v176 = vld [vmem:[%s2 + $0x1c4] sm:$0xf]
    %v177 = vld [vmem:[%s2 + $0x1c8] sm:$0xf]
    %v178 = vld [vmem:[%s2 + $0x1cc] sm:$0xf]
    %v179 = vld [vmem:[%s2 + $0x1d0] sm:$0xf]
    %v180 = vld [vmem:[%s2 + $0x1d4] sm:$0xf]
    %v181 = vld [vmem:[%s2 + $0x1d8] sm:$0xf]
    %v182 = vld [vmem:[%s2 + $0x1dc] sm:$0xf]
    %v183 = vld [vmem:[%s2 + $0x1e0] sm:$0xf]
    %v184 = vld [vmem:[%s2 + $0x1e4] sm:$0xf]
    %v185 = vld [vmem:[%s2 + $0x1e8] sm:$0xf]
    %v186 = vld [vmem:[%s2 + $0x1ec] sm:$0xf]
    %v187 = vld [vmem:[%s2 + $0x1f0] sm:$0xf]
    %v188 = vld [vmem:[%s2 + $0x1f4] sm:$0xf]
    %v189 = vld [vmem:[%s2 + $0x1f8] sm:$0xf]
    %v190 = vld [vmem:[%s2 + $0x1fc] sm:$0xf]
    %v191 = vld [vmem:[%s2 + $0x200] sm:$0xf]
    %v192 = vld [vmem:[%s2 + $0x204] sm:$0xf]
    %v193 = vld [vmem:[%s2 + $0x208] sm:$0xf]
    %v194 = vld [vmem:[%s2 + $0x20c] sm:$0xf]
    %v195 = vld [vmem:[%s2 + $0x210] sm:$0xf]
    %v196 = vld [vmem:[%s2 + $0x214] sm:$0xf]
    %v197 = vld [vmem:[%s2 + $0x218] sm:$0xf]
    %v198 = vld [vmem:[%s2 + $0x21c] sm:$0xf]
    %v199 = vld [vmem:[%s2 + $0x220] sm:$0xf]
    %v200 = vld [vmem:[%s2 + $0x224] sm:$0xf]
    %v201 = vld [vmem:[%s2 + $0x228] sm:$0xf]
    %v202 = vld [vmem:[%s2 + $0x22c] sm:$0xf]
    %v203 = vld [vmem:[%s2 + $0x230] sm:$0xf]
    %v204 = vld [vmem:[%s2 + $0x234] sm:$0xf]
    %v205 = vld [vmem:[%s2 + $0x238] sm:$0xf]
    %v206 = vld [vmem:[%s2 + $0x23c] sm:$0xf]
    %v207 = vld [vmem:[%s2 + $0x240] sm:$0xf]
    %v208 = vld [vmem:[%s2 + $0x244] sm:$0xf]
    %v209 = vld [vmem:[%s2 + $0x248] sm:$0xf]
    %v210 = vld [vmem:[%s2 + $0x24c] sm:$0xf]
    %v211 = vld [vmem:[%s2 + $0x250] sm:$0xf]
    %v212 = vld [vmem:[%s2 + $0x254] sm:$0xf]
    %v213 = vld [vmem:[%s2 + $0x258] sm:$0xf]
    %v214 = vld [vmem:[%s2 + $0x25c] sm:$0xf]
    %v215 = vld [vmem:[%s2 + $0x260] sm:$0xf]
    %v216 = vld [vmem:[%s2 + $0x264] sm:$0xf]
    %v217 = vld [vmem:[%s2 + $0x268] sm:$0xf]
    %v218 = vld [vmem:[%s2 + $0x26c] sm:$0xf]
    %v219 = vld [vmem:[%s2 + $0x270] sm:$0xf]
    %v220 = vld [vmem:[%s2 + $0x274] sm:$0xf]
    %v221 = vld [vmem:[%s2 + $0x278] sm:$0xf]
    %v222 = vld [vmem:[%s2 + $0x27c] sm:$0xf]
    %v223 = vld [vmem:[%s2 + $0x280] sm:$0xf]
    %v224 = vld [vmem:[%s2 + $0x284] sm:$0xf]
    %v225 = vld [vmem:[%s2 + $0x288] sm:$0xf]
    %v226 = vld [vmem:[%s2 + $0x28c] sm:$0xf]
    %v227 = vld [vmem:[%s2 + $0x290] sm:$0xf]
    %v228 = vld [vmem:[%s2 + $0x294] sm:$0xf]
    %v229 = vld [vmem:[%s2 + $0x298] sm:$0xf]
    %v230 = vld [vmem:[%s2 + $0x29c] sm:$0xf]
    %v231 = vld [vmem:[%s2 + $0x2a0] sm:$0xf]
    %v232 = vld [vmem:[%s2 + $0x2a4] sm:$0xf]
    %v233 = vld [vmem:[%s2 + $0x2a8] sm:$0xf]
    %v234 = vld [vmem:[%s2 + $0x2ac] sm:$0xf]
    %v235 = vld [vmem:[%s2 + $0x2b0] sm:$0xf]
    %v236 = vld [vmem:[%s2 + $0x2b4] sm:$0xf]
    %v237 = vld [vmem:[%s2 + $0x2b8] sm:$0xf]
    %v238 = vld [vmem:[%s2 + $0x2bc] sm:$0xf]
    %v239 = vld [vmem:[%s2 + $0x2c0] sm:$0xf]
    %v240 = vld [vmem:[%s2 + $0x2c4] sm:$0xf]
    %v241 = vld [vmem:[%s2 + $0x2c8] sm:$0xf]
    %v242 = vld [vmem:[%s2 + $0x2cc] sm:$0xf]
    %v243 = vld [vmem:[%s2 + $0x2d0] sm:$0xf]
    %v244 = vld [vmem:[%s2 + $0x2d4] sm:$0xf]
    %v245 = vld [vmem:[%s2 + $0x2d8] sm:$0xf]
    %v246 = vld [vmem:[%s2 + $0x2dc] sm:$0xf]
    %v247 = vld [vmem:[%s2 + $0x2e0] sm:$0xf]
    %v248 = vld [vmem:[%s2 + $0x2e4] sm:$0xf]
    %v249 = vld [vmem:[%s2 + $0x2e8] sm:$0xf]
    %v250 = vld [vmem:[%s2 + $0x2ec] sm:$0xf]
    %v251 = vld [vmem:[%s2 + $0x2f0] sm:$0xf]
    %v252 = vld [vmem:[%s2 + $0x2f4] sm:$0xf]
    %v253 = vld [vmem:[%s2 + $0x2f8] sm:$0xf]
    %v254 = vld [vmem:[%s2 + $0x2fc] sm:$0xf]
    %v255 = vld [vmem:[%s2 + $0x300] sm:$0xf]
    %v256 = vld [vmem:[%s2 + $0x304] sm:$0xf]
    %v257 = vld [vmem:[%s2 + $0x308] sm:$0xf]
    %v258 = vld [vmem:[%s2 + $0x30c] sm:$0xf]
    %v259 = vld [vmem:[%s2 + $0x310] sm:$0xf]
    %v260 = vld [vmem:[%s2 + $0x314] sm:$0xf]
    %v261 = vld [vmem:[%s2 + $0x318] sm:$0xf]
    %v262 = vld [vmem:[%s2 + $0x31c] sm:$0xf]
    %v263 = vld [vmem:[%s2 + $0x320] sm:$0xf]
    %v264 = vld [vmem:[%s2 + $0x324] sm:$0xf]
    %v265 = vld [vmem:[%s2 + $0x328] sm:$0xf]
    %v266 = vld [vmem:[%s2 + $0x32c] sm:$0xf]
    %v267 = vld [vmem:[%s2 + $0x330] sm:$0xf]
    %v268 = vld [vmem:[%s2 + $0x334] sm:$0xf]
    %v269 = vld [vmem:[%s2 + $0x338] sm:$0xf]
    %v270 = vld [vmem:[%s2 + $0x33c] sm:$0xf]
    %v271 = vld [vmem:[%s2 + $0x340] sm:$0xf]
    %v272 = vld [vmem:[%s2 + $0x344] sm:$0xf]
    %v273 = vld [vmem:[%s2 + $0x348] sm:$0xf]
    %v274 = vld [vmem:[%s2 + $0x34c] sm:$0xf]
    %v275 = vld [vmem:[%s2 + $0x350] sm:$0xf]
    %v276 = vld [vmem:[%s2 + $0x354] sm:$0xf]
    %v277 = vld [vmem:[%s2 + $0x358] sm:$0xf]
    %v278 = vld [vmem:[%s2 + $0x35c] sm:$0xf]
    %v279 = vld [vmem:[%s2 + $0x360] sm:$0xf]
    %v280 = vld [vmem:[%s2 + $0x364] sm:$0xf]
    %v281 = vld [vmem:[%s2 + $0x368] sm:$0xf]
    %v282 = vld [vmem:[%s2 + $0x36c] sm:$0xf]
    %v283 = vld [vmem:[%s2 + $0x370] sm:$0xf]
    %v284 = vld [vmem:[%s2 + $0x374] sm:$0xf]
    %v285 = vld [vmem:[%s2 + $0x378] sm:$0xf]
    %v286 = vld [vmem:[%s2 + $0x37c] sm:$0xf]
    %v287 = vld [vmem:[%s2 + $0x380] sm:$0xf]
    %v288 = vld [vmem:[%s2 + $0x384] sm:$0xf]
    %v289 = vld [vmem:[%s2 + $0x388] sm:$0xf]
    %v290 = vld [vmem:[%s2 + $0x38c] sm:$0xf]
    %v291 = vld [vmem:[%s2 + $0x390] sm:$0xf]
    %v292 = vld [vmem:[%s2 + $0x394] sm:$0xf]
    %v293 = vld [vmem:[%s2 + $0x398] sm:$0xf]
    %v294 = vld [vmem:[%s2 + $0x39c] sm:$0xf]
    %v295 = vld [vmem:[%s2 + $0x3a0] sm:$0xf]
    %v296 = vld [vmem:[%s2 + $0x3a4] sm:$0xf]
    %v297 = vld [vmem:[%s2 + $0x3a8] sm:$0xf]
    %v298 = vld [vmem:[%s2 + $0x3ac] sm:$0xf]
    %v299 = vld [vmem:[%s2 + $0x3b0] sm:$0xf]
    %v300 = vld [vmem:[%s2 + $0x3b4] sm:$0xf]
    %v301 = vld [vmem:[%s2 + $0x3b8] sm:$0xf]
    %v302 = vld [vmem:[%s2 + $0x3bc] sm:$0xf]
    %v303 = vld [vmem:[%s2 + $0x3c0] sm:$0xf]
    %v304 = vld [vmem:[%s2 + $0x3c4] sm:$0xf]
    %v305 = vld [vmem:[%s2 + $0x3c8] sm:$0xf]
    %v306 = vld [vmem:[%s2 + $0x3cc] sm:$0xf]
    %v307 = vld [vmem:[%s2 + $0x3d0] sm:$0xf]
    %v308 = vld [vmem:[%s2 + $0x3d4] sm:$0xf]
    %v309 = vld [vmem:[%s2 + $0x3d8] sm:$0xf]
    %v310 = vld [vmem:[%s2 + $0x3dc] sm:$0xf]
    %v311 = vld [vmem:[%s2 + $0x3e0] sm:$0xf]
    %v312 = vld [vmem:[%s2 + $0x3e4] sm:$0xf]
    %v313 = vld [vmem:[%s2 + $0x3e8] sm:$0xf]
    %v314 = vld [vmem:[%s2 + $0x3ec] sm:$0xf]
    %v315 = vld [vmem:[%s2 + $0x3f0] sm:$0xf]
    %v316 = vld [vmem:[%s2 + $0x3f4] sm:$0xf]
    %v317 = vld [vmem:[%s2 + $0x3f8] sm:$0xf]
    %v318 = vld [vmem:[%s2 + $0x3fc] sm:$0xf]
    %v319 = vld [vmem:[%s3] sm:$0x1]
    %v321 = vlaneseq
    %v322 = vshrl.u32 %v321, 7
    %v323 = vsub.s32 0, %v322
    %v324 = vrot.slane %v319, %v323
    %v342 = vunpack.c.l.b16 %v47
    %v343 = vunpack.c.h.b16 %v47
    %v344 = vunpack.c.l.b16 %v48
    %v345 = vunpack.c.h.b16 %v48
    %v346 = vunpack.c.l.b16 %v49
    %v347 = vunpack.c.h.b16 %v49
    %v348 = vunpack.c.l.b16 %v50
    %v349 = vunpack.c.h.b16 %v50
    %v350 = vunpack.c.l.b16 %v51
    %v351 = vunpack.c.h.b16 %v51
    %v352 = vunpack.c.l.b16 %v52
    %v353 = vunpack.c.h.b16 %v52
    %v354 = vunpack.c.l.b16 %v53
    %v355 = vunpack.c.h.b16 %v53
    %v356 = vunpack.c.l.b16 %v54
    %v357 = vunpack.c.h.b16 %v54
    %v358 = vunpack.c.l.b16 %v55
    %v359 = vunpack.c.h.b16 %v55
    %v360 = vunpack.c.l.b16 %v56
    %v361 = vunpack.c.h.b16 %v56
    %v362 = vunpack.c.l.b16 %v57
    %v363 = vunpack.c.h.b16 %v57
    %v364 = vunpack.c.l.b16 %v58
    %v365 = vunpack.c.h.b16 %v58
    %v366 = vunpack.c.l.b16 %v59
    %v367 = vunpack.c.h.b16 %v59
    %v368 = vunpack.c.l.b16 %v60
    %v369 = vunpack.c.h.b16 %v60
    %v370 = vunpack.c.l.b16 %v61
    %v371 = vunpack.c.h.b16 %v61
    %v372 = vunpack.c.l.b16 %v62
    %v373 = vunpack.c.h.b16 %v62
    %v374 = vpack.c.b16 %v358, %v342
    %v375 = vpack.c.b16 %v359, %v343
    %v376 = vpack.c.b16 %v360, %v344
    %v377 = vpack.c.b16 %v361, %v345
    %v378 = vpack.c.b16 %v362, %v346
    %v379 = vpack.c.b16 %v363, %v347
    %v380 = vpack.c.b16 %v364, %v348
    %v381 = vpack.c.b16 %v365, %v349
    %v382 = vpack.c.b16 %v366, %v350
    %v383 = vpack.c.b16 %v367, %v351
    %v384 = vpack.c.b16 %v368, %v352
    %v385 = vpack.c.b16 %v369, %v353
    %v386 = vpack.c.b16 %v370, %v354
    %v387 = vpack.c.b16 %v371, %v355
    %v388 = vpack.c.b16 %v372, %v356
    %v389 = vpack.c.b16 %v373, %v357
    %v662 = vunpack.c.l.b16 %v63
    %v663 = vunpack.c.l.b16 %v64
    %v664 = vunpack.c.l.b16 %v65
    %v665 = vunpack.c.l.b16 %v66
    %v666 = vunpack.c.l.b16 %v67
    %v667 = vunpack.c.l.b16 %v68
    %v668 = vunpack.c.l.b16 %v69
    %v669 = vunpack.c.l.b16 %v70
    %v670 = vunpack.c.l.b16 %v71
    %v671 = vunpack.c.l.b16 %v72
    %v672 = vunpack.c.l.b16 %v73
    %v673 = vunpack.c.l.b16 %v74
    %v674 = vunpack.c.l.b16 %v75
    %v675 = vunpack.c.l.b16 %v76
    %v676 = vunpack.c.l.b16 %v77
    %v677 = vunpack.c.l.b16 %v78
    %v678 = vunpack.c.l.b16 %v79
    %v679 = vunpack.c.l.b16 %v80
    %v680 = vunpack.c.l.b16 %v81
    %v681 = vunpack.c.l.b16 %v82
    %v682 = vunpack.c.l.b16 %v83
    %v683 = vunpack.c.l.b16 %v84
    %v684 = vunpack.c.l.b16 %v85
    %v685 = vunpack.c.l.b16 %v86
    %v686 = vunpack.c.l.b16 %v87
    %v687 = vunpack.c.l.b16 %v88
    %v688 = vunpack.c.l.b16 %v89
    %v689 = vunpack.c.l.b16 %v90
    %v690 = vunpack.c.l.b16 %v91
    %v691 = vunpack.c.l.b16 %v92
    %v692 = vunpack.c.l.b16 %v93
    %v693 = vunpack.c.l.b16 %v94
    %v694 = vunpack.c.l.b16 %v95
    %v695 = vunpack.c.l.b16 %v96
    %v696 = vunpack.c.l.b16 %v97
    %v697 = vunpack.c.l.b16 %v98
    %v698 = vunpack.c.l.b16 %v99
    %v699 = vunpack.c.l.b16 %v100
    %v700 = vunpack.c.l.b16 %v101
    %v701 = vunpack.c.l.b16 %v102
    %v702 = vunpack.c.l.b16 %v103
    %v703 = vunpack.c.l.b16 %v104
    %v704 = vunpack.c.l.b16 %v105
    %v705 = vunpack.c.l.b16 %v106
    %v706 = vunpack.c.l.b16 %v107
    %v707 = vunpack.c.l.b16 %v108
    %v708 = vunpack.c.l.b16 %v109
    %v709 = vunpack.c.l.b16 %v110
    %v710 = vunpack.c.l.b16 %v111
    %v711 = vunpack.c.l.b16 %v112
    %v712 = vunpack.c.l.b16 %v113
    %v713 = vunpack.c.l.b16 %v114
    %v714 = vunpack.c.l.b16 %v115
    %v715 = vunpack.c.l.b16 %v116
    %v716 = vunpack.c.l.b16 %v117
    %v717 = vunpack.c.l.b16 %v118
    %v718 = vunpack.c.l.b16 %v119
    %v719 = vunpack.c.l.b16 %v120
    %v720 = vunpack.c.l.b16 %v121
    %v721 = vunpack.c.l.b16 %v122
    %v722 = vunpack.c.l.b16 %v123
    %v723 = vunpack.c.l.b16 %v124
    %v724 = vunpack.c.l.b16 %v125
    %v725 = vunpack.c.l.b16 %v126
    %v726 = vunpack.c.l.b16 %v127
    %v727 = vunpack.c.l.b16 %v128
    %v728 = vunpack.c.l.b16 %v129
    %v729 = vunpack.c.l.b16 %v130
    %v730 = vunpack.c.l.b16 %v131
    %v731 = vunpack.c.l.b16 %v132
    %v732 = vunpack.c.l.b16 %v133
    %v733 = vunpack.c.l.b16 %v134
    %v734 = vunpack.c.l.b16 %v135
    %v735 = vunpack.c.l.b16 %v136
    %v736 = vunpack.c.l.b16 %v137
    %v737 = vunpack.c.l.b16 %v138
    %v738 = vunpack.c.l.b16 %v139
    %v739 = vunpack.c.l.b16 %v140
    %v740 = vunpack.c.l.b16 %v141
    %v741 = vunpack.c.l.b16 %v142
    %v742 = vunpack.c.l.b16 %v143
    %v743 = vunpack.c.l.b16 %v144
    %v744 = vunpack.c.l.b16 %v145
    %v745 = vunpack.c.l.b16 %v146
    %v746 = vunpack.c.l.b16 %v147
    %v747 = vunpack.c.l.b16 %v148
    %v748 = vunpack.c.l.b16 %v149
    %v749 = vunpack.c.l.b16 %v150
    %v750 = vunpack.c.l.b16 %v151
    %v751 = vunpack.c.l.b16 %v152
    %v752 = vunpack.c.l.b16 %v153
    %v753 = vunpack.c.l.b16 %v154
    %v754 = vunpack.c.l.b16 %v155
    %v755 = vunpack.c.l.b16 %v156
    %v756 = vunpack.c.l.b16 %v157
    %v757 = vunpack.c.l.b16 %v158
    %v758 = vunpack.c.l.b16 %v159
    %v759 = vunpack.c.l.b16 %v160
    %v760 = vunpack.c.l.b16 %v161
    %v761 = vunpack.c.l.b16 %v162
    %v762 = vunpack.c.l.b16 %v163
    %v763 = vunpack.c.l.b16 %v164
    %v764 = vunpack.c.l.b16 %v165
    %v765 = vunpack.c.l.b16 %v166
    %v766 = vunpack.c.l.b16 %v167
    %v767 = vunpack.c.l.b16 %v168
    %v768 = vunpack.c.l.b16 %v169
    %v769 = vunpack.c.l.b16 %v170
    %v770 = vunpack.c.l.b16 %v171
    %v771 = vunpack.c.l.b16 %v172
    %v772 = vunpack.c.l.b16 %v173
    %v773 = vunpack.c.l.b16 %v174
    %v774 = vunpack.c.l.b16 %v175
    %v775 = vunpack.c.l.b16 %v176
    %v776 = vunpack.c.l.b16 %v177
    %v777 = vunpack.c.l.b16 %v178
    %v778 = vunpack.c.l.b16 %v179
    %v779 = vunpack.c.l.b16 %v180
    %v780 = vunpack.c.l.b16 %v181
    %v781 = vunpack.c.l.b16 %v182
    %v782 = vunpack.c.l.b16 %v183
    %v783 = vunpack.c.l.b16 %v184
    %v784 = vunpack.c.l.b16 %v185
    %v785 = vunpack.c.l.b16 %v186
    %v786 = vunpack.c.l.b16 %v187
    %v787 = vunpack.c.l.b16 %v188
    %v788 = vunpack.c.l.b16 %v189
    %v789 = vunpack.c.l.b16 %v190
    %v790 = vunpack.c.l.b16 %v191
    %v791 = vunpack.c.l.b16 %v192
    %v792 = vunpack.c.l.b16 %v193
    %v793 = vunpack.c.l.b16 %v194
    %v794 = vunpack.c.l.b16 %v195
    %v795 = vunpack.c.l.b16 %v196
    %v796 = vunpack.c.l.b16 %v197
    %v797 = vunpack.c.l.b16 %v198
    %v798 = vunpack.c.l.b16 %v199
    %v799 = vunpack.c.l.b16 %v200
    %v800 = vunpack.c.l.b16 %v201
    %v801 = vunpack.c.l.b16 %v202
    %v802 = vunpack.c.l.b16 %v203
    %v803 = vunpack.c.l.b16 %v204
    %v804 = vunpack.c.l.b16 %v205
    %v805 = vunpack.c.l.b16 %v206
    %v806 = vunpack.c.l.b16 %v207
    %v807 = vunpack.c.l.b16 %v208
    %v808 = vunpack.c.l.b16 %v209
    %v809 = vunpack.c.l.b16 %v210
    %v810 = vunpack.c.l.b16 %v211
    %v811 = vunpack.c.l.b16 %v212
    %v812 = vunpack.c.l.b16 %v213
    %v813 = vunpack.c.l.b16 %v214
    %v814 = vunpack.c.l.b16 %v215
    %v815 = vunpack.c.l.b16 %v216
    %v816 = vunpack.c.l.b16 %v217
    %v817 = vunpack.c.l.b16 %v218
    %v818 = vunpack.c.l.b16 %v219
    %v819 = vunpack.c.l.b16 %v220
    %v820 = vunpack.c.l.b16 %v221
    %v821 = vunpack.c.l.b16 %v222
    %v822 = vunpack.c.l.b16 %v223
    %v823 = vunpack.c.l.b16 %v224
    %v824 = vunpack.c.l.b16 %v225
    %v825 = vunpack.c.l.b16 %v226
    %v826 = vunpack.c.l.b16 %v227
    %v827 = vunpack.c.l.b16 %v228
    %v828 = vunpack.c.l.b16 %v229
    %v829 = vunpack.c.l.b16 %v230
    %v830 = vunpack.c.l.b16 %v231
    %v831 = vunpack.c.l.b16 %v232
    %v832 = vunpack.c.l.b16 %v233
    %v833 = vunpack.c.l.b16 %v234
    %v834 = vunpack.c.l.b16 %v235
    %v835 = vunpack.c.l.b16 %v236
    %v836 = vunpack.c.l.b16 %v237
    %v837 = vunpack.c.l.b16 %v238
    %v838 = vunpack.c.l.b16 %v239
    %v839 = vunpack.c.l.b16 %v240
    %v840 = vunpack.c.l.b16 %v241
    %v841 = vunpack.c.l.b16 %v242
    %v842 = vunpack.c.l.b16 %v243
    %v843 = vunpack.c.l.b16 %v244
    %v844 = vunpack.c.l.b16 %v245
    %v845 = vunpack.c.l.b16 %v246
    %v846 = vunpack.c.l.b16 %v247
    %v847 = vunpack.c.l.b16 %v248
    %v848 = vunpack.c.l.b16 %v249
    %v849 = vunpack.c.l.b16 %v250
    %v850 = vunpack.c.l.b16 %v251
    %v851 = vunpack.c.l.b16 %v252
    %v852 = vunpack.c.l.b16 %v253
    %v853 = vunpack.c.l.b16 %v254
    %v854 = vunpack.c.l.b16 %v255
    %v855 = vunpack.c.l.b16 %v256
    %v856 = vunpack.c.l.b16 %v257
    %v857 = vunpack.c.l.b16 %v258
    %v858 = vunpack.c.l.b16 %v259
    %v859 = vunpack.c.l.b16 %v260
    %v860 = vunpack.c.l.b16 %v261
    %v861 = vunpack.c.l.b16 %v262
    %v862 = vunpack.c.l.b16 %v263
    %v863 = vunpack.c.l.b16 %v264
    %v864 = vunpack.c.l.b16 %v265
    %v865 = vunpack.c.l.b16 %v266
    %v866 = vunpack.c.l.b16 %v267
    %v867 = vunpack.c.l.b16 %v268
    %v868 = vunpack.c.l.b16 %v269
    %v869 = vunpack.c.l.b16 %v270
    %v870 = vunpack.c.l.b16 %v271
    %v871 = vunpack.c.l.b16 %v272
    %v872 = vunpack.c.l.b16 %v273
    %v873 = vunpack.c.l.b16 %v274
    %v874 = vunpack.c.l.b16 %v275
    %v875 = vunpack.c.l.b16 %v276
    %v876 = vunpack.c.l.b16 %v277
    %v877 = vunpack.c.l.b16 %v278
    %v878 = vunpack.c.l.b16 %v279
    %v879 = vunpack.c.l.b16 %v280
    %v880 = vunpack.c.l.b16 %v281
    %v881 = vunpack.c.l.b16 %v282
    %v882 = vunpack.c.l.b16 %v283
    %v883 = vunpack.c.l.b16 %v284
    %v884 = vunpack.c.l.b16 %v285
    %v885 = vunpack.c.l.b16 %v286
    %v886 = vunpack.c.l.b16 %v287
    %v887 = vunpack.c.l.b16 %v288
    %v888 = vunpack.c.l.b16 %v289
    %v889 = vunpack.c.l.b16 %v290
    %v890 = vunpack.c.l.b16 %v291
    %v891 = vunpack.c.l.b16 %v292
    %v892 = vunpack.c.l.b16 %v293
    %v893 = vunpack.c.l.b16 %v294
    %v894 = vunpack.c.l.b16 %v295
    %v895 = vunpack.c.l.b16 %v296
    %v896 = vunpack.c.l.b16 %v297
    %v897 = vunpack.c.l.b16 %v298
    %v898 = vunpack.c.l.b16 %v299
    %v899 = vunpack.c.l.b16 %v300
    %v900 = vunpack.c.l.b16 %v301
    %v901 = vunpack.c.l.b16 %v302
    %v902 = vunpack.c.l.b16 %v303
    %v903 = vunpack.c.l.b16 %v304
    %v904 = vunpack.c.l.b16 %v305
    %v905 = vunpack.c.l.b16 %v306
    %v906 = vunpack.c.l.b16 %v307
    %v907 = vunpack.c.l.b16 %v308
    %v908 = vunpack.c.l.b16 %v309
    %v909 = vunpack.c.l.b16 %v310
    %v910 = vunpack.c.l.b16 %v311
    %v911 = vunpack.c.l.b16 %v312
    %v912 = vunpack.c.l.b16 %v313
    %v913 = vunpack.c.l.b16 %v314
    %v914 = vunpack.c.l.b16 %v315
    %v915 = vunpack.c.l.b16 %v316
    %v916 = vunpack.c.l.b16 %v317
    %v917 = vunpack.c.l.b16 %v318
    %v918 = vpack.c.b16 %v663, %v662
    %v919 = vpack.c.b16 %v665, %v664
    %v920 = vpack.c.b16 %v667, %v666
    %v921 = vpack.c.b16 %v669, %v668
    %v922 = vpack.c.b16 %v671, %v670
    %v923 = vpack.c.b16 %v673, %v672
    %v924 = vpack.c.b16 %v675, %v674
    %v925 = vpack.c.b16 %v677, %v676
    %v926 = vpack.c.b16 %v679, %v678
    %v927 = vpack.c.b16 %v681, %v680
    %v928 = vpack.c.b16 %v683, %v682
    %v929 = vpack.c.b16 %v685, %v684
    %v930 = vpack.c.b16 %v687, %v686
    %v931 = vpack.c.b16 %v689, %v688
    %v932 = vpack.c.b16 %v691, %v690
    %v933 = vpack.c.b16 %v693, %v692
    %v934 = vpack.c.b16 %v695, %v694
    %v935 = vpack.c.b16 %v697, %v696
    %v936 = vpack.c.b16 %v699, %v698
    %v937 = vpack.c.b16 %v701, %v700
    %v938 = vpack.c.b16 %v703, %v702
    %v939 = vpack.c.b16 %v705, %v704
    %v940 = vpack.c.b16 %v707, %v706
    %v941 = vpack.c.b16 %v709, %v708
    %v942 = vpack.c.b16 %v711, %v710
    %v943 = vpack.c.b16 %v713, %v712
    %v944 = vpack.c.b16 %v715, %v714
    %v945 = vpack.c.b16 %v717, %v716
    %v946 = vpack.c.b16 %v719, %v718
    %v947 = vpack.c.b16 %v721, %v720
    %v948 = vpack.c.b16 %v723, %v722
    %v949 = vpack.c.b16 %v725, %v724
    %v950 = vpack.c.b16 %v727, %v726
    %v951 = vpack.c.b16 %v729, %v728
    %v952 = vpack.c.b16 %v731, %v730
    %v953 = vpack.c.b16 %v733, %v732
    %v954 = vpack.c.b16 %v735, %v734
    %v955 = vpack.c.b16 %v737, %v736
    %v956 = vpack.c.b16 %v739, %v738
    %v957 = vpack.c.b16 %v741, %v740
    %v958 = vpack.c.b16 %v743, %v742
    %v959 = vpack.c.b16 %v745, %v744
    %v960 = vpack.c.b16 %v747, %v746
    %v961 = vpack.c.b16 %v749, %v748
    %v962 = vpack.c.b16 %v751, %v750
    %v963 = vpack.c.b16 %v753, %v752
    %v964 = vpack.c.b16 %v755, %v754
    %v965 = vpack.c.b16 %v757, %v756
    %v966 = vpack.c.b16 %v759, %v758
    %v967 = vpack.c.b16 %v761, %v760
    %v968 = vpack.c.b16 %v763, %v762
    %v969 = vpack.c.b16 %v765, %v764
    %v970 = vpack.c.b16 %v767, %v766
    %v971 = vpack.c.b16 %v769, %v768
    %v972 = vpack.c.b16 %v771, %v770
    %v973 = vpack.c.b16 %v773, %v772
    %v974 = vpack.c.b16 %v775, %v774
    %v975 = vpack.c.b16 %v777, %v776
    %v976 = vpack.c.b16 %v779, %v778
    %v977 = vpack.c.b16 %v781, %v780
    %v978 = vpack.c.b16 %v783, %v782
    %v979 = vpack.c.b16 %v785, %v784
    %v980 = vpack.c.b16 %v787, %v786
    %v981 = vpack.c.b16 %v789, %v788
    %v982 = vpack.c.b16 %v791, %v790
    %v983 = vpack.c.b16 %v793, %v792
    %v984 = vpack.c.b16 %v795, %v794
    %v985 = vpack.c.b16 %v797, %v796
    %v986 = vpack.c.b16 %v799, %v798
    %v987 = vpack.c.b16 %v801, %v800
    %v988 = vpack.c.b16 %v803, %v802
    %v989 = vpack.c.b16 %v805, %v804
    %v990 = vpack.c.b16 %v807, %v806
    %v991 = vpack.c.b16 %v809, %v808
    %v992 = vpack.c.b16 %v811, %v810
    %v993 = vpack.c.b16 %v813, %v812
    %v994 = vpack.c.b16 %v815, %v814
    %v995 = vpack.c.b16 %v817, %v816
    %v996 = vpack.c.b16 %v819, %v818
    %v997 = vpack.c.b16 %v821, %v820
    %v998 = vpack.c.b16 %v823, %v822
    %v999 = vpack.c.b16 %v825, %v824
    %v1000 = vpack.c.b16 %v827, %v826
    %v1001 = vpack.c.b16 %v829, %v828
    %v1002 = vpack.c.b16 %v831, %v830
    %v1003 = vpack.c.b16 %v833, %v832
    %v1004 = vpack.c.b16 %v835, %v834
    %v1005 = vpack.c.b16 %v837, %v836
    %v1006 = vpack.c.b16 %v839, %v838
    %v1007 = vpack.c.b16 %v841, %v840
    %v1008 = vpack.c.b16 %v843, %v842
    %v1009 = vpack.c.b16 %v845, %v844
    %v1010 = vpack.c.b16 %v847, %v846
    %v1011 = vpack.c.b16 %v849, %v848
    %v1012 = vpack.c.b16 %v851, %v850
    %v1013 = vpack.c.b16 %v853, %v852
    %v1014 = vpack.c.b16 %v855, %v854
    %v1015 = vpack.c.b16 %v857, %v856
    %v1016 = vpack.c.b16 %v859, %v858
    %v1017 = vpack.c.b16 %v861, %v860
    %v1018 = vpack.c.b16 %v863, %v862
    %v1019 = vpack.c.b16 %v865, %v864
    %v1020 = vpack.c.b16 %v867, %v866
    %v1021 = vpack.c.b16 %v869, %v868
    %v1022 = vpack.c.b16 %v871, %v870
    %v1023 = vpack.c.b16 %v873, %v872
    %v1024 = vpack.c.b16 %v875, %v874
    %v1025 = vpack.c.b16 %v877, %v876
    %v1026 = vpack.c.b16 %v879, %v878
    %v1027 = vpack.c.b16 %v881, %v880
    %v1028 = vpack.c.b16 %v883, %v882
    %v1029 = vpack.c.b16 %v885, %v884
    %v1030 = vpack.c.b16 %v887, %v886
    %v1031 = vpack.c.b16 %v889, %v888
    %v1032 = vpack.c.b16 %v891, %v890
    %v1033 = vpack.c.b16 %v893, %v892
    %v1034 = vpack.c.b16 %v895, %v894
    %v1035 = vpack.c.b16 %v897, %v896
    %v1036 = vpack.c.b16 %v899, %v898
    %v1037 = vpack.c.b16 %v901, %v900
    %v1038 = vpack.c.b16 %v903, %v902
    %v1039 = vpack.c.b16 %v905, %v904
    %v1040 = vpack.c.b16 %v907, %v906
    %v1041 = vpack.c.b16 %v909, %v908
    %v1042 = vpack.c.b16 %v911, %v910
    %v1043 = vpack.c.b16 %v913, %v912
    %v1044 = vpack.c.b16 %v915, %v914
    %v1045 = vpack.c.b16 %v917, %v916
    %1174 = vmatprep.subr.bf16.mxu0 0
    %1175 = vmatpush1.bf16.msra.mxu0 %v918
    %1176 = vmatprep.subr.bf16.mxu0 0
    %1177 = vmatpush1.bf16.msra.mxu0 %v919
    %1178 = vmatprep.subr.bf16.mxu0 0
    %1179 = vmatpush1.bf16.msra.mxu0 %v920
    %1180 = vmatprep.subr.bf16.mxu0 0
    %1181 = vmatpush1.bf16.msra.mxu0 %v921
    %1182 = vmatprep.subr.bf16.mxu0 0
    %1183 = vmatpush1.bf16.msra.mxu0 %v922
    %1184 = vmatprep.subr.bf16.mxu0 0
    %1185 = vmatpush1.bf16.msra.mxu0 %v923
    %1186 = vmatprep.subr.bf16.mxu0 0
    %1187 = vmatpush1.bf16.msra.mxu0 %v924
    %1188 = vmatprep.subr.bf16.mxu0 0
    %1189 = vmatpush1.bf16.msra.mxu0 %v925
    %1190 = vmatprep.subr.bf16.mxu0 0
    %1191 = vmatpush1.bf16.msra.mxu0 %v926
    %1192 = vmatprep.subr.bf16.mxu0 0
    %1193 = vmatpush1.bf16.msra.mxu0 %v927
    %1194 = vmatprep.subr.bf16.mxu0 0
    %1195 = vmatpush1.bf16.msra.mxu0 %v928
    %1196 = vmatprep.subr.bf16.mxu0 0
    %1197 = vmatpush1.bf16.msra.mxu0 %v929
    %1198 = vmatprep.subr.bf16.mxu0 0
    %1199 = vmatpush1.bf16.msra.mxu0 %v930
    %1200 = vmatprep.subr.bf16.mxu0 0
    %1201 = vmatpush1.bf16.msra.mxu0 %v931
    %1202 = vmatprep.subr.bf16.mxu0 0
    %1203 = vmatpush1.bf16.msra.mxu0 %v932
    %1204 = vmatprep.subr.bf16.mxu0 0
    %1205 = vmatpush1.bf16.msra.mxu0 %v933
    %1206 = vmatprep.mubr.bf16.mxu0 %v375
    %1207 = vmatmul.mubr.bf16.gmra.mrb[0].mxu0 %v374
    %v1208 = vpop.f32.mrb[0].mxu0
    %v1209 = vadd.f32 %v324, %v1208
    %v1210 = vpop.f32.mrb[0].mxu0
    %v1211 = vpop.f32.mrb[0].mxu0
    %v1212 = vadd.f32 %v324, %v1211
    %v1213 = vpop.f32.mrb[0].mxu0
    %1214 = vdwg.mxu0
    %1215 = vmatprep.subr.bf16.mxu0 0
    %1216 = vmatpush1.bf16.msra.mxu0 %v934
    %1217 = vmatprep.subr.bf16.mxu0 0
    %1218 = vmatpush1.bf16.msra.mxu0 %v935
    %1219 = vmatprep.subr.bf16.mxu0 0
    %1220 = vmatpush1.bf16.msra.mxu0 %v936
    %1221 = vmatprep.subr.bf16.mxu0 0
    %1222 = vmatpush1.bf16.msra.mxu0 %v937
    %1223 = vmatprep.subr.bf16.mxu0 0
    %1224 = vmatpush1.bf16.msra.mxu0 %v938
    %1225 = vmatprep.subr.bf16.mxu0 0
    %1226 = vmatpush1.bf16.msra.mxu0 %v939
    %1227 = vmatprep.subr.bf16.mxu0 0
    %1228 = vmatpush1.bf16.msra.mxu0 %v940
    %1229 = vmatprep.subr.bf16.mxu0 0
    %1230 = vmatpush1.bf16.msra.mxu0 %v941
    %1231 = vmatprep.subr.bf16.mxu0 0
    %1232 = vmatpush1.bf16.msra.mxu0 %v942
    %1233 = vmatprep.subr.bf16.mxu0 0
    %1234 = vmatpush1.bf16.msra.mxu0 %v943
    %1235 = vmatprep.subr.bf16.mxu0 0
    %1236 = vmatpush1.bf16.msra.mxu0 %v944
    %1237 = vmatprep.subr.bf16.mxu0 0
    %1238 = vmatpush1.bf16.msra.mxu0 %v945
    %1239 = vmatprep.subr.bf16.mxu0 0
    %1240 = vmatpush1.bf16.msra.mxu0 %v946
    %1241 = vmatprep.subr.bf16.mxu0 0
    %1242 = vmatpush1.bf16.msra.mxu0 %v947
    %1243 = vmatprep.subr.bf16.mxu0 0
    %1244 = vmatpush1.bf16.msra.mxu0 %v948
    %1245 = vmatprep.subr.bf16.mxu0 0
    %1246 = vmatpush1.bf16.msra.mxu0 %v949
    %1247 = vmatprep.mubr.bf16.mxu0 %v377
    %1248 = vmatmul.mubr.bf16.gmra.mrb[0].mxu0 %v376
    %v1249 = vpop.f32.mrb[0].mxu0
    %v1250 = vadd.f32 %v1209, %v1249
    %v1251 = vpop.f32.mrb[0].mxu0
    %v1252 = vpop.f32.mrb[0].mxu0
    %v1253 = vadd.f32 %v1212, %v1252
    %v1254 = vpop.f32.mrb[0].mxu0
    %1255 = vdwg.mxu0
    %1256 = vmatprep.subr.bf16.mxu0 0
    %1257 = vmatpush1.bf16.msra.mxu0 %v950
    %1258 = vmatprep.subr.bf16.mxu0 0
    %1259 = vmatpush1.bf16.msra.mxu0 %v951
    %1260 = vmatprep.subr.bf16.mxu0 0
    %1261 = vmatpush1.bf16.msra.mxu0 %v952
    %1262 = vmatprep.subr.bf16.mxu0 0
    %1263 = vmatpush1.bf16.msra.mxu0 %v953
    %1264 = vmatprep.subr.bf16.mxu0 0
    %1265 = vmatpush1.bf16.msra.mxu0 %v954
    %1266 = vmatprep.subr.bf16.mxu0 0
    %1267 = vmatpush1.bf16.msra.mxu0 %v955
    %1268 = vmatprep.subr.bf16.mxu0 0
    %1269 = vmatpush1.bf16.msra.mxu0 %v956
    %1270 = vmatprep.subr.bf16.mxu0 0
    %1271 = vmatpush1.bf16.msra.mxu0 %v957
    %1272 = vmatprep.subr.bf16.mxu0 0
    %1273 = vmatpush1.bf16.msra.mxu0 %v958
    %1274 = vmatprep.subr.bf16.mxu0 0
    %1275 = vmatpush1.bf16.msra.mxu0 %v959
    %1276 = vmatprep.subr.bf16.mxu0 0
    %1277 = vmatpush1.bf16.msra.mxu0 %v960
    %1278 = vmatprep.subr.bf16.mxu0 0
    %1279 = vmatpush1.bf16.msra.mxu0 %v961
    %1280 = vmatprep.subr.bf16.mxu0 0
    %1281 = vmatpush1.bf16.msra.mxu0 %v962
    %1282 = vmatprep.subr.bf16.mxu0 0
    %1283 = vmatpush1.bf16.msra.mxu0 %v963
    %1284 = vmatprep.subr.bf16.mxu0 0
    %1285 = vmatpush1.bf16.msra.mxu0 %v964
    %1286 = vmatprep.subr.bf16.mxu0 0
    %1287 = vmatpush1.bf16.msra.mxu0 %v965
    %1288 = vmatprep.mubr.bf16.mxu0 %v379
    %1289 = vmatmul.mubr.bf16.gmra.mrb[0].mxu0 %v378
    %v1290 = vpop.f32.mrb[0].mxu0
    %v1291 = vadd.f32 %v1250, %v1290
    %v1292 = vpop.f32.mrb[0].mxu0
    %v1293 = vpop.f32.mrb[0].mxu0
    %v1294 = vadd.f32 %v1253, %v1293
    %v1295 = vpop.f32.mrb[0].mxu0
    %1296 = vdwg.mxu0
    %1297 = vmatprep.subr.bf16.mxu0 0
    %1298 = vmatpush1.bf16.msra.mxu0 %v966
    %1299 = vmatprep.subr.bf16.mxu0 0
    %1300 = vmatpush1.bf16.msra.mxu0 %v967
    %1301 = vmatprep.subr.bf16.mxu0 0
    %1302 = vmatpush1.bf16.msra.mxu0 %v968
    %1303 = vmatprep.subr.bf16.mxu0 0
    %1304 = vmatpush1.bf16.msra.mxu0 %v969
    %1305 = vmatprep.subr.bf16.mxu0 0
    %1306 = vmatpush1.bf16.msra.mxu0 %v970
    %1307 = vmatprep.subr.bf16.mxu0 0
    %1308 = vmatpush1.bf16.msra.mxu0 %v971
    %1309 = vmatprep.subr.bf16.mxu0 0
    %1310 = vmatpush1.bf16.msra.mxu0 %v972
    %1311 = vmatprep.subr.bf16.mxu0 0
    %1312 = vmatpush1.bf16.msra.mxu0 %v973
    %1313 = vmatprep.subr.bf16.mxu0 0
    %1314 = vmatpush1.bf16.msra.mxu0 %v974
    %1315 = vmatprep.subr.bf16.mxu0 0
    %1316 = vmatpush1.bf16.msra.mxu0 %v975
    %1317 = vmatprep.subr.bf16.mxu0 0
    %1318 = vmatpush1.bf16.msra.mxu0 %v976
    %1319 = vmatprep.subr.bf16.mxu0 0
    %1320 = vmatpush1.bf16.msra.mxu0 %v977
    %1321 = vmatprep.subr.bf16.mxu0 0
    %1322 = vmatpush1.bf16.msra.mxu0 %v978
    %1323 = vmatprep.subr.bf16.mxu0 0
    %1324 = vmatpush1.bf16.msra.mxu0 %v979
    %1325 = vmatprep.subr.bf16.mxu0 0
    %1326 = vmatpush1.bf16.msra.mxu0 %v980
    %1327 = vmatprep.subr.bf16.mxu0 0
    %1328 = vmatpush1.bf16.msra.mxu0 %v981
    %1329 = vmatprep.mubr.bf16.mxu0 %v381
    %1330 = vmatmul.mubr.bf16.gmra.mrb[0].mxu0 %v380
    %v1331 = vpop.f32.mrb[0].mxu0
    %v1332 = vadd.f32 %v1291, %v1331
    %v1333 = vpop.f32.mrb[0].mxu0
    %v1334 = vpop.f32.mrb[0].mxu0
    %v1335 = vadd.f32 %v1294, %v1334
    %v1336 = vpop.f32.mrb[0].mxu0
    %1337 = vdwg.mxu0
    %1338 = vmatprep.subr.bf16.mxu0 0
    %1339 = vmatpush1.bf16.msra.mxu0 %v982
    %1340 = vmatprep.subr.bf16.mxu0 0
    %1341 = vmatpush1.bf16.msra.mxu0 %v983
    %1342 = vmatprep.subr.bf16.mxu0 0
    %1343 = vmatpush1.bf16.msra.mxu0 %v984
    %1344 = vmatprep.subr.bf16.mxu0 0
    %1345 = vmatpush1.bf16.msra.mxu0 %v985
    %1346 = vmatprep.subr.bf16.mxu0 0
    %1347 = vmatpush1.bf16.msra.mxu0 %v986
    %1348 = vmatprep.subr.bf16.mxu0 0
    %1349 = vmatpush1.bf16.msra.mxu0 %v987
    %1350 = vmatprep.subr.bf16.mxu0 0
    %1351 = vmatpush1.bf16.msra.mxu0 %v988
    %1352 = vmatprep.subr.bf16.mxu0 0
    %1353 = vmatpush1.bf16.msra.mxu0 %v989
    %1354 = vmatprep.subr.bf16.mxu0 0
    %1355 = vmatpush1.bf16.msra.mxu0 %v990
    %1356 = vmatprep.subr.bf16.mxu0 0
    %1357 = vmatpush1.bf16.msra.mxu0 %v991
    %1358 = vmatprep.subr.bf16.mxu0 0
    %1359 = vmatpush1.bf16.msra.mxu0 %v992
    %1360 = vmatprep.subr.bf16.mxu0 0
    %1361 = vmatpush1.bf16.msra.mxu0 %v993
    %1362 = vmatprep.subr.bf16.mxu0 0
    %1363 = vmatpush1.bf16.msra.mxu0 %v994
    %1364 = vmatprep.subr.bf16.mxu0 0
    %1365 = vmatpush1.bf16.msra.mxu0 %v995
    %1366 = vmatprep.subr.bf16.mxu0 0
    %1367 = vmatpush1.bf16.msra.mxu0 %v996
    %1368 = vmatprep.subr.bf16.mxu0 0
    %1369 = vmatpush1.bf16.msra.mxu0 %v997
    %1370 = vmatprep.mubr.bf16.mxu0 %v383
    %1371 = vmatmul.mubr.bf16.gmra.mrb[0].mxu0 %v382
    %v1372 = vpop.f32.mrb[0].mxu0
    %v1373 = vadd.f32 %v1332, %v1372
    %v1374 = vpop.f32.mrb[0].mxu0
    %v1375 = vpop.f32.mrb[0].mxu0
    %v1376 = vadd.f32 %v1335, %v1375
    %v1377 = vpop.f32.mrb[0].mxu0
    %1378 = vdwg.mxu0
    %1379 = vmatprep.subr.bf16.mxu0 0
    %1380 = vmatpush1.bf16.msra.mxu0 %v998
    %1381 = vmatprep.subr.bf16.mxu0 0
    %1382 = vmatpush1.bf16.msra.mxu0 %v999
    %1383 = vmatprep.subr.bf16.mxu0 0
    %1384 = vmatpush1.bf16.msra.mxu0 %v1000
    %1385 = vmatprep.subr.bf16.mxu0 0
    %1386 = vmatpush1.bf16.msra.mxu0 %v1001
    %1387 = vmatprep.subr.bf16.mxu0 0
    %1388 = vmatpush1.bf16.msra.mxu0 %v1002
    %1389 = vmatprep.subr.bf16.mxu0 0
    %1390 = vmatpush1.bf16.msra.mxu0 %v1003
    %1391 = vmatprep.subr.bf16.mxu0 0
    %1392 = vmatpush1.bf16.msra.mxu0 %v1004
    %1393 = vmatprep.subr.bf16.mxu0 0
    %1394 = vmatpush1.bf16.msra.mxu0 %v1005
    %1395 = vmatprep.subr.bf16.mxu0 0
    %1396 = vmatpush1.bf16.msra.mxu0 %v1006
    %1397 = vmatprep.subr.bf16.mxu0 0
    %1398 = vmatpush1.bf16.msra.mxu0 %v1007
    %1399 = vmatprep.subr.bf16.mxu0 0
    %1400 = vmatpush1.bf16.msra.mxu0 %v1008
    %1401 = vmatprep.subr.bf16.mxu0 0
    %1402 = vmatpush1.bf16.msra.mxu0 %v1009
    %1403 = vmatprep.subr.bf16.mxu0 0
    %1404 = vmatpush1.bf16.msra.mxu0 %v1010
    %1405 = vmatprep.subr.bf16.mxu0 0
    %1406 = vmatpush1.bf16.msra.mxu0 %v1011
    %1407 = vmatprep.subr.bf16.mxu0 0
    %1408 = vmatpush1.bf16.msra.mxu0 %v1012
    %1409 = vmatprep.subr.bf16.mxu0 0
    %1410 = vmatpush1.bf16.msra.mxu0 %v1013
    %1411 = vmatprep.mubr.bf16.mxu0 %v385
    %1412 = vmatmul.mubr.bf16.gmra.mrb[0].mxu0 %v384
    %v1413 = vpop.f32.mrb[0].mxu0
    %v1414 = vadd.f32 %v1373, %v1413
    %v1415 = vpop.f32.mrb[0].mxu0
    %v1416 = vpop.f32.mrb[0].mxu0
    %v1417 = vadd.f32 %v1376, %v1416
    %v1418 = vpop.f32.mrb[0].mxu0
    %1419 = vdwg.mxu0
    %1420 = vmatprep.subr.bf16.mxu0 0
    %1421 = vmatpush1.bf16.msra.mxu0 %v1014
    %1422 = vmatprep.subr.bf16.mxu0 0
    %1423 = vmatpush1.bf16.msra.mxu0 %v1015
    %1424 = vmatprep.subr.bf16.mxu0 0
    %1425 = vmatpush1.bf16.msra.mxu0 %v1016
    %1426 = vmatprep.subr.bf16.mxu0 0
    %1427 = vmatpush1.bf16.msra.mxu0 %v1017
    %1428 = vmatprep.subr.bf16.mxu0 0
    %1429 = vmatpush1.bf16.msra.mxu0 %v1018
    %1430 = vmatprep.subr.bf16.mxu0 0
    %1431 = vmatpush1.bf16.msra.mxu0 %v1019
    %1432 = vmatprep.subr.bf16.mxu0 0
    %1433 = vmatpush1.bf16.msra.mxu0 %v1020
    %1434 = vmatprep.subr.bf16.mxu0 0
    %1435 = vmatpush1.bf16.msra.mxu0 %v1021
    %1436 = vmatprep.subr.bf16.mxu0 0
    %1437 = vmatpush1.bf16.msra.mxu0 %v1022
    %1438 = vmatprep.subr.bf16.mxu0 0
    %1439 = vmatpush1.bf16.msra.mxu0 %v1023
    %1440 = vmatprep.subr.bf16.mxu0 0
    %1441 = vmatpush1.bf16.msra.mxu0 %v1024
    %1442 = vmatprep.subr.bf16.mxu0 0
    %1443 = vmatpush1.bf16.msra.mxu0 %v1025
    %1444 = vmatprep.subr.bf16.mxu0 0
    %1445 = vmatpush1.bf16.msra.mxu0 %v1026
    %1446 = vmatprep.subr.bf16.mxu0 0
    %1447 = vmatpush1.bf16.msra.mxu0 %v1027
    %1448 = vmatprep.subr.bf16.mxu0 0
    %1449 = vmatpush1.bf16.msra.mxu0 %v1028
    %1450 = vmatprep.subr.bf16.mxu0 0
    %1451 = vmatpush1.bf16.msra.mxu0 %v1029
    %1452 = vmatprep.mubr.bf16.mxu0 %v387
    %1453 = vmatmul.mubr.bf16.gmra.mrb[0].mxu0 %v386
    %v1454 = vpop.f32.mrb[0].mxu0
    %v1455 = vadd.f32 %v1414, %v1454
    %v1456 = vpop.f32.mrb[0].mxu0
    %v1457 = vpop.f32.mrb[0].mxu0
    %v1458 = vadd.f32 %v1417, %v1457
    %v1459 = vpop.f32.mrb[0].mxu0
    %1460 = vdwg.mxu0
    %1461 = vmatprep.subr.bf16.mxu0 0
    %1462 = vmatpush1.bf16.msra.mxu0 %v1030
    %1463 = vmatprep.subr.bf16.mxu0 0
    %1464 = vmatpush1.bf16.msra.mxu0 %v1031
    %1465 = vmatprep.subr.bf16.mxu0 0
    %1466 = vmatpush1.bf16.msra.mxu0 %v1032
    %1467 = vmatprep.subr.bf16.mxu0 0
    %1468 = vmatpush1.bf16.msra.mxu0 %v1033
    %1469 = vmatprep.subr.bf16.mxu0 0
    %1470 = vmatpush1.bf16.msra.mxu0 %v1034
    %1471 = vmatprep.subr.bf16.mxu0 0
    %1472 = vmatpush1.bf16.msra.mxu0 %v1035
    %1473 = vmatprep.subr.bf16.mxu0 0
    %1474 = vmatpush1.bf16.msra.mxu0 %v1036
    %1475 = vmatprep.subr.bf16.mxu0 0
    %1476 = vmatpush1.bf16.msra.mxu0 %v1037
    %1477 = vmatprep.subr.bf16.mxu0 0
    %1478 = vmatpush1.bf16.msra.mxu0 %v1038
    %1479 = vmatprep.subr.bf16.mxu0 0
    %1480 = vmatpush1.bf16.msra.mxu0 %v1039
    %1481 = vmatprep.subr.bf16.mxu0 0
    %1482 = vmatpush1.bf16.msra.mxu0 %v1040
    %1483 = vmatprep.subr.bf16.mxu0 0
    %1484 = vmatpush1.bf16.msra.mxu0 %v1041
    %1485 = vmatprep.subr.bf16.mxu0 0
    %1486 = vmatpush1.bf16.msra.mxu0 %v1042
    %1487 = vmatprep.subr.bf16.mxu0 0
    %1488 = vmatpush1.bf16.msra.mxu0 %v1043
    %1489 = vmatprep.subr.bf16.mxu0 0
    %1490 = vmatpush1.bf16.msra.mxu0 %v1044
    %1491 = vmatprep.subr.bf16.mxu0 0
    %1492 = vmatpush1.bf16.msra.mxu0 %v1045
    %1493 = vmatprep.mubr.bf16.mxu0 %v389
    %1494 = vmatmul.mubr.bf16.gmra.mrb[0].mxu0 %v388
    %v1495 = vpop.f32.mrb[0].mxu0
    %v1496 = vadd.f32 %v1455, %v1495
    %v1497 = vpop.f32.mrb[0].mxu0
    %v1498 = vpop.f32.mrb[0].mxu0
    %v1499 = vadd.f32 %v1458, %v1498
    %v1500 = vpop.f32.mrb[0].mxu0
    %1501 = vdwg.mxu0
    %v1502 = vld [vmem:[%s1] sm:$0xff]
    %v1503 = vld [vmem:[%s1 + $0x8] sm:$0xff]
    %v1504 = vld [vmem:[%s4] sm:$0xf]
    %v1505 = vld [vmem:[%s4 + $0x4] sm:$0xf]
    %v1506 = vld [vmem:[%s4 + $0x8] sm:$0xf]
    %v1507 = vld [vmem:[%s4 + $0xc] sm:$0xf]
    %v1508 = vld [vmem:[%s4 + $0x10] sm:$0xf]
    %v1509 = vld [vmem:[%s4 + $0x14] sm:$0xf]
    %v1510 = vld [vmem:[%s4 + $0x18] sm:$0xf]
    %v1511 = vld [vmem:[%s4 + $0x1c] sm:$0xf]
    %v1512 = vld [vmem:[%s4 + $0x20] sm:$0xf]
    %v1513 = vld [vmem:[%s4 + $0x24] sm:$0xf]
    %v1514 = vld [vmem:[%s4 + $0x28] sm:$0xf]
    %v1515 = vld [vmem:[%s4 + $0x2c] sm:$0xf]
    %v1516 = vld [vmem:[%s4 + $0x30] sm:$0xf]
    %v1517 = vld [vmem:[%s4 + $0x34] sm:$0xf]
    %v1518 = vld [vmem:[%s4 + $0x38] sm:$0xf]
    %v1519 = vld [vmem:[%s4 + $0x3c] sm:$0xf]
    %v1520 = vld [vmem:[%s4 + $0x40] sm:$0xf]
    %v1521 = vld [vmem:[%s4 + $0x44] sm:$0xf]
    %v1522 = vld [vmem:[%s4 + $0x48] sm:$0xf]
    %v1523 = vld [vmem:[%s4 + $0x4c] sm:$0xf]
    %v1524 = vld [vmem:[%s4 + $0x50] sm:$0xf]
    %v1525 = vld [vmem:[%s4 + $0x54] sm:$0xf]
    %v1526 = vld [vmem:[%s4 + $0x58] sm:$0xf]
    %v1527 = vld [vmem:[%s4 + $0x5c] sm:$0xf]
    %v1528 = vld [vmem:[%s4 + $0x60] sm:$0xf]
    %v1529 = vld [vmem:[%s4 + $0x64] sm:$0xf]
    %v1530 = vld [vmem:[%s4 + $0x68] sm:$0xf]
    %v1531 = vld [vmem:[%s4 + $0x6c] sm:$0xf]
    %v1532 = vld [vmem:[%s4 + $0x70] sm:$0xf]
    %v1533 = vld [vmem:[%s4 + $0x74] sm:$0xf]
    %v1534 = vld [vmem:[%s4 + $0x78] sm:$0xf]
    %v1535 = vld [vmem:[%s4 + $0x7c] sm:$0xf]
    %v1536 = vld [vmem:[%s4 + $0x80] sm:$0xf]
    %v1537 = vld [vmem:[%s4 + $0x84] sm:$0xf]
    %v1538 = vld [vmem:[%s4 + $0x88] sm:$0xf]
    %v1539 = vld [vmem:[%s4 + $0x8c] sm:$0xf]
    %v1540 = vld [vmem:[%s4 + $0x90] sm:$0xf]
    %v1541 = vld [vmem:[%s4 + $0x94] sm:$0xf]
    %v1542 = vld [vmem:[%s4 + $0x98] sm:$0xf]
    %v1543 = vld [vmem:[%s4 + $0x9c] sm:$0xf]
    %v1544 = vld [vmem:[%s4 + $0xa0] sm:$0xf]
    %v1545 = vld [vmem:[%s4 + $0xa4] sm:$0xf]
    %v1546 = vld [vmem:[%s4 + $0xa8] sm:$0xf]
    %v1547 = vld [vmem:[%s4 + $0xac] sm:$0xf]
    %v1548 = vld [vmem:[%s4 + $0xb0] sm:$0xf]
    %v1549 = vld [vmem:[%s4 + $0xb4] sm:$0xf]
    %v1550 = vld [vmem:[%s4 + $0xb8] sm:$0xf]
    %v1551 = vld [vmem:[%s4 + $0xbc] sm:$0xf]
    %v1552 = vld [vmem:[%s4 + $0xc0] sm:$0xf]
    %v1553 = vld [vmem:[%s4 + $0xc4] sm:$0xf]
    %v1554 = vld [vmem:[%s4 + $0xc8] sm:$0xf]
    %v1555 = vld [vmem:[%s4 + $0xcc] sm:$0xf]
    %v1556 = vld [vmem:[%s4 + $0xd0] sm:$0xf]
    %v1557 = vld [vmem:[%s4 + $0xd4] sm:$0xf]
    %v1558 = vld [vmem:[%s4 + $0xd8] sm:$0xf]
    %v1559 = vld [vmem:[%s4 + $0xdc] sm:$0xf]
    %v1560 = vld [vmem:[%s4 + $0xe0] sm:$0xf]
    %v1561 = vld [vmem:[%s4 + $0xe4] sm:$0xf]
    %v1562 = vld [vmem:[%s4 + $0xe8] sm:$0xf]
    %v1563 = vld [vmem:[%s4 + $0xec] sm:$0xf]
    %v1564 = vld [vmem:[%s4 + $0xf0] sm:$0xf]
    %v1565 = vld [vmem:[%s4 + $0xf4] sm:$0xf]
    %v1566 = vld [vmem:[%s4 + $0xf8] sm:$0xf]
    %v1567 = vld [vmem:[%s4 + $0xfc] sm:$0xf]
    %v1568 = vld [vmem:[%s4 + $0x100] sm:$0xf]
    %v1569 = vld [vmem:[%s4 + $0x104] sm:$0xf]
    %v1570 = vld [vmem:[%s4 + $0x108] sm:$0xf]
    %v1571 = vld [vmem:[%s4 + $0x10c] sm:$0xf]
    %v1572 = vld [vmem:[%s4 + $0x110] sm:$0xf]
    %v1573 = vld [vmem:[%s4 + $0x114] sm:$0xf]
    %v1574 = vld [vmem:[%s4 + $0x118] sm:$0xf]
    %v1575 = vld [vmem:[%s4 + $0x11c] sm:$0xf]
    %v1576 = vld [vmem:[%s4 + $0x120] sm:$0xf]
    %v1577 = vld [vmem:[%s4 + $0x124] sm:$0xf]
    %v1578 = vld [vmem:[%s4 + $0x128] sm:$0xf]
    %v1579 = vld [vmem:[%s4 + $0x12c] sm:$0xf]
    %v1580 = vld [vmem:[%s4 + $0x130] sm:$0xf]
    %v1581 = vld [vmem:[%s4 + $0x134] sm:$0xf]
    %v1582 = vld [vmem:[%s4 + $0x138] sm:$0xf]
    %v1583 = vld [vmem:[%s4 + $0x13c] sm:$0xf]
    %v1584 = vld [vmem:[%s4 + $0x140] sm:$0xf]
    %v1585 = vld [vmem:[%s4 + $0x144] sm:$0xf]
    %v1586 = vld [vmem:[%s4 + $0x148] sm:$0xf]
    %v1587 = vld [vmem:[%s4 + $0x14c] sm:$0xf]
    %v1588 = vld [vmem:[%s4 + $0x150] sm:$0xf]
    %v1589 = vld [vmem:[%s4 + $0x154] sm:$0xf]
    %v1590 = vld [vmem:[%s4 + $0x158] sm:$0xf]
    %v1591 = vld [vmem:[%s4 + $0x15c] sm:$0xf]
    %v1592 = vld [vmem:[%s4 + $0x160] sm:$0xf]
    %v1593 = vld [vmem:[%s4 + $0x164] sm:$0xf]
    %v1594 = vld [vmem:[%s4 + $0x168] sm:$0xf]
    %v1595 = vld [vmem:[%s4 + $0x16c] sm:$0xf]
    %v1596 = vld [vmem:[%s4 + $0x170] sm:$0xf]
    %v1597 = vld [vmem:[%s4 + $0x174] sm:$0xf]
    %v1598 = vld [vmem:[%s4 + $0x178] sm:$0xf]
    %v1599 = vld [vmem:[%s4 + $0x17c] sm:$0xf]
    %v1600 = vld [vmem:[%s4 + $0x180] sm:$0xf]
    %v1601 = vld [vmem:[%s4 + $0x184] sm:$0xf]
    %v1602 = vld [vmem:[%s4 + $0x188] sm:$0xf]
    %v1603 = vld [vmem:[%s4 + $0x18c] sm:$0xf]
    %v1604 = vld [vmem:[%s4 + $0x190] sm:$0xf]
    %v1605 = vld [vmem:[%s4 + $0x194] sm:$0xf]
    %v1606 = vld [vmem:[%s4 + $0x198] sm:$0xf]
    %v1607 = vld [vmem:[%s4 + $0x19c] sm:$0xf]
    %v1608 = vld [vmem:[%s4 + $0x1a0] sm:$0xf]
    %v1609 = vld [vmem:[%s4 + $0x1a4] sm:$0xf]
    %v1610 = vld [vmem:[%s4 + $0x1a8] sm:$0xf]
    %v1611 = vld [vmem:[%s4 + $0x1ac] sm:$0xf]
    %v1612 = vld [vmem:[%s4 + $0x1b0] sm:$0xf]
    %v1613 = vld [vmem:[%s4 + $0x1b4] sm:$0xf]
    %v1614 = vld [vmem:[%s4 + $0x1b8] sm:$0xf]
    %v1615 = vld [vmem:[%s4 + $0x1bc] sm:$0xf]
    %v1616 = vld [vmem:[%s4 + $0x1c0] sm:$0xf]
    %v1617 = vld [vmem:[%s4 + $0x1c4] sm:$0xf]
    %v1618 = vld [vmem:[%s4 + $0x1c8] sm:$0xf]
    %v1619 = vld [vmem:[%s4 + $0x1cc] sm:$0xf]
    %v1620 = vld [vmem:[%s4 + $0x1d0] sm:$0xf]
    %v1621 = vld [vmem:[%s4 + $0x1d4] sm:$0xf]
    %v1622 = vld [vmem:[%s4 + $0x1d8] sm:$0xf]
    %v1623 = vld [vmem:[%s4 + $0x1dc] sm:$0xf]
    %v1624 = vld [vmem:[%s4 + $0x1e0] sm:$0xf]
    %v1625 = vld [vmem:[%s4 + $0x1e4] sm:$0xf]
    %v1626 = vld [vmem:[%s4 + $0x1e8] sm:$0xf]
    %v1627 = vld [vmem:[%s4 + $0x1ec] sm:$0xf]
    %v1628 = vld [vmem:[%s4 + $0x1f0] sm:$0xf]
    %v1629 = vld [vmem:[%s4 + $0x1f4] sm:$0xf]
    %v1630 = vld [vmem:[%s4 + $0x1f8] sm:$0xf]
    %v1631 = vld [vmem:[%s4 + $0x1fc] sm:$0xf]
    %v1632 = vld [vmem:[%s4 + $0x200] sm:$0xf]
    %v1633 = vld [vmem:[%s4 + $0x204] sm:$0xf]
    %v1634 = vld [vmem:[%s4 + $0x208] sm:$0xf]
    %v1635 = vld [vmem:[%s4 + $0x20c] sm:$0xf]
    %v1636 = vld [vmem:[%s4 + $0x210] sm:$0xf]
    %v1637 = vld [vmem:[%s4 + $0x214] sm:$0xf]
    %v1638 = vld [vmem:[%s4 + $0x218] sm:$0xf]
    %v1639 = vld [vmem:[%s4 + $0x21c] sm:$0xf]
    %v1640 = vld [vmem:[%s4 + $0x220] sm:$0xf]
    %v1641 = vld [vmem:[%s4 + $0x224] sm:$0xf]
    %v1642 = vld [vmem:[%s4 + $0x228] sm:$0xf]
    %v1643 = vld [vmem:[%s4 + $0x22c] sm:$0xf]
    %v1644 = vld [vmem:[%s4 + $0x230] sm:$0xf]
    %v1645 = vld [vmem:[%s4 + $0x234] sm:$0xf]
    %v1646 = vld [vmem:[%s4 + $0x238] sm:$0xf]
    %v1647 = vld [vmem:[%s4 + $0x23c] sm:$0xf]
    %v1648 = vld [vmem:[%s4 + $0x240] sm:$0xf]
    %v1649 = vld [vmem:[%s4 + $0x244] sm:$0xf]
    %v1650 = vld [vmem:[%s4 + $0x248] sm:$0xf]
    %v1651 = vld [vmem:[%s4 + $0x24c] sm:$0xf]
    %v1652 = vld [vmem:[%s4 + $0x250] sm:$0xf]
    %v1653 = vld [vmem:[%s4 + $0x254] sm:$0xf]
    %v1654 = vld [vmem:[%s4 + $0x258] sm:$0xf]
    %v1655 = vld [vmem:[%s4 + $0x25c] sm:$0xf]
    %v1656 = vld [vmem:[%s4 + $0x260] sm:$0xf]
    %v1657 = vld [vmem:[%s4 + $0x264] sm:$0xf]
    %v1658 = vld [vmem:[%s4 + $0x268] sm:$0xf]
    %v1659 = vld [vmem:[%s4 + $0x26c] sm:$0xf]
    %v1660 = vld [vmem:[%s4 + $0x270] sm:$0xf]
    %v1661 = vld [vmem:[%s4 + $0x274] sm:$0xf]
    %v1662 = vld [vmem:[%s4 + $0x278] sm:$0xf]
    %v1663 = vld [vmem:[%s4 + $0x27c] sm:$0xf]
    %v1664 = vld [vmem:[%s4 + $0x280] sm:$0xf]
    %v1665 = vld [vmem:[%s4 + $0x284] sm:$0xf]
    %v1666 = vld [vmem:[%s4 + $0x288] sm:$0xf]
    %v1667 = vld [vmem:[%s4 + $0x28c] sm:$0xf]
    %v1668 = vld [vmem:[%s4 + $0x290] sm:$0xf]
    %v1669 = vld [vmem:[%s4 + $0x294] sm:$0xf]
    %v1670 = vld [vmem:[%s4 + $0x298] sm:$0xf]
    %v1671 = vld [vmem:[%s4 + $0x29c] sm:$0xf]
    %v1672 = vld [vmem:[%s4 + $0x2a0] sm:$0xf]
    %v1673 = vld [vmem:[%s4 + $0x2a4] sm:$0xf]
    %v1674 = vld [vmem:[%s4 + $0x2a8] sm:$0xf]
    %v1675 = vld [vmem:[%s4 + $0x2ac] sm:$0xf]
    %v1676 = vld [vmem:[%s4 + $0x2b0] sm:$0xf]
    %v1677 = vld [vmem:[%s4 + $0x2b4] sm:$0xf]
    %v1678 = vld [vmem:[%s4 + $0x2b8] sm:$0xf]
    %v1679 = vld [vmem:[%s4 + $0x2bc] sm:$0xf]
    %v1680 = vld [vmem:[%s4 + $0x2c0] sm:$0xf]
    %v1681 = vld [vmem:[%s4 + $0x2c4] sm:$0xf]
    %v1682 = vld [vmem:[%s4 + $0x2c8] sm:$0xf]
    %v1683 = vld [vmem:[%s4 + $0x2cc] sm:$0xf]
    %v1684 = vld [vmem:[%s4 + $0x2d0] sm:$0xf]
    %v1685 = vld [vmem:[%s4 + $0x2d4] sm:$0xf]
    %v1686 = vld [vmem:[%s4 + $0x2d8] sm:$0xf]
    %v1687 = vld [vmem:[%s4 + $0x2dc] sm:$0xf]
    %v1688 = vld [vmem:[%s4 + $0x2e0] sm:$0xf]
    %v1689 = vld [vmem:[%s4 + $0x2e4] sm:$0xf]
    %v1690 = vld [vmem:[%s4 + $0x2e8] sm:$0xf]
    %v1691 = vld [vmem:[%s4 + $0x2ec] sm:$0xf]
    %v1692 = vld [vmem:[%s4 + $0x2f0] sm:$0xf]
    %v1693 = vld [vmem:[%s4 + $0x2f4] sm:$0xf]
    %v1694 = vld [vmem:[%s4 + $0x2f8] sm:$0xf]
    %v1695 = vld [vmem:[%s4 + $0x2fc] sm:$0xf]
    %v1696 = vld [vmem:[%s4 + $0x300] sm:$0xf]
    %v1697 = vld [vmem:[%s4 + $0x304] sm:$0xf]
    %v1698 = vld [vmem:[%s4 + $0x308] sm:$0xf]
    %v1699 = vld [vmem:[%s4 + $0x30c] sm:$0xf]
    %v1700 = vld [vmem:[%s4 + $0x310] sm:$0xf]
    %v1701 = vld [vmem:[%s4 + $0x314] sm:$0xf]
    %v1702 = vld [vmem:[%s4 + $0x318] sm:$0xf]
    %v1703 = vld [vmem:[%s4 + $0x31c] sm:$0xf]
    %v1704 = vld [vmem:[%s4 + $0x320] sm:$0xf]
    %v1705 = vld [vmem:[%s4 + $0x324] sm:$0xf]
    %v1706 = vld [vmem:[%s4 + $0x328] sm:$0xf]
    %v1707 = vld [vmem:[%s4 + $0x32c] sm:$0xf]
    %v1708 = vld [vmem:[%s4 + $0x330] sm:$0xf]
    %v1709 = vld [vmem:[%s4 + $0x334] sm:$0xf]
    %v1710 = vld [vmem:[%s4 + $0x338] sm:$0xf]
    %v1711 = vld [vmem:[%s4 + $0x33c] sm:$0xf]
    %v1712 = vld [vmem:[%s4 + $0x340] sm:$0xf]
    %v1713 = vld [vmem:[%s4 + $0x344] sm:$0xf]
    %v1714 = vld [vmem:[%s4 + $0x348] sm:$0xf]
    %v1715 = vld [vmem:[%s4 + $0x34c] sm:$0xf]
    %v1716 = vld [vmem:[%s4 + $0x350] sm:$0xf]
    %v1717 = vld [vmem:[%s4 + $0x354] sm:$0xf]
    %v1718 = vld [vmem:[%s4 + $0x358] sm:$0xf]
    %v1719 = vld [vmem:[%s4 + $0x35c] sm:$0xf]
    %v1720 = vld [vmem:[%s4 + $0x360] sm:$0xf]
    %v1721 = vld [vmem:[%s4 + $0x364] sm:$0xf]
    %v1722 = vld [vmem:[%s4 + $0x368] sm:$0xf]
    %v1723 = vld [vmem:[%s4 + $0x36c] sm:$0xf]
    %v1724 = vld [vmem:[%s4 + $0x370] sm:$0xf]
    %v1725 = vld [vmem:[%s4 + $0x374] sm:$0xf]
    %v1726 = vld [vmem:[%s4 + $0x378] sm:$0xf]
    %v1727 = vld [vmem:[%s4 + $0x37c] sm:$0xf]
    %v1728 = vld [vmem:[%s4 + $0x380] sm:$0xf]
    %v1729 = vld [vmem:[%s4 + $0x384] sm:$0xf]
    %v1730 = vld [vmem:[%s4 + $0x388] sm:$0xf]
    %v1731 = vld [vmem:[%s4 + $0x38c] sm:$0xf]
    %v1732 = vld [vmem:[%s4 + $0x390] sm:$0xf]
    %v1733 = vld [vmem:[%s4 + $0x394] sm:$0xf]
    %v1734 = vld [vmem:[%s4 + $0x398] sm:$0xf]
    %v1735 = vld [vmem:[%s4 + $0x39c] sm:$0xf]
    %v1736 = vld [vmem:[%s4 + $0x3a0] sm:$0xf]
    %v1737 = vld [vmem:[%s4 + $0x3a4] sm:$0xf]
    %v1738 = vld [vmem:[%s4 + $0x3a8] sm:$0xf]
    %v1739 = vld [vmem:[%s4 + $0x3ac] sm:$0xf]
    %v1740 = vld [vmem:[%s4 + $0x3b0] sm:$0xf]
    %v1741 = vld [vmem:[%s4 + $0x3b4] sm:$0xf]
    %v1742 = vld [vmem:[%s4 + $0x3b8] sm:$0xf]
    %v1743 = vld [vmem:[%s4 + $0x3bc] sm:$0xf]
    %v1744 = vld [vmem:[%s4 + $0x3c0] sm:$0xf]
    %v1745 = vld [vmem:[%s4 + $0x3c4] sm:$0xf]
    %v1746 = vld [vmem:[%s4 + $0x3c8] sm:$0xf]
    %v1747 = vld [vmem:[%s4 + $0x3cc] sm:$0xf]
    %v1748 = vld [vmem:[%s4 + $0x3d0] sm:$0xf]
    %v1749 = vld [vmem:[%s4 + $0x3d4] sm:$0xf]
    %v1750 = vld [vmem:[%s4 + $0x3d8] sm:$0xf]
    %v1751 = vld [vmem:[%s4 + $0x3dc] sm:$0xf]
    %v1752 = vld [vmem:[%s4 + $0x3e0] sm:$0xf]
    %v1753 = vld [vmem:[%s4 + $0x3e4] sm:$0xf]
    %v1754 = vld [vmem:[%s4 + $0x3e8] sm:$0xf]
    %v1755 = vld [vmem:[%s4 + $0x3ec] sm:$0xf]
    %v1756 = vld [vmem:[%s4 + $0x3f0] sm:$0xf]
    %v1757 = vld [vmem:[%s4 + $0x3f4] sm:$0xf]
    %v1758 = vld [vmem:[%s4 + $0x3f8] sm:$0xf]
    %v1759 = vld [vmem:[%s4 + $0x3fc] sm:$0xf]
    %v1760 = vld [vmem:[%s5] sm:$0x1]
    %v1762 = vlaneseq
    %v1763 = vshrl.u32 %v1762, 7
    %v1764 = vsub.s32 0, %v1763
    %v1765 = vrot.slane %v1760, %v1764
    %v1769 = vcombine.high %v1502, %v1502
    %v1771 = vunpack.c.l.s4 1966171168
    %v1772 = vunpack.c.0.s8 %v1771
    %v1773 = vlaneseq
    %v1774 = vshrl.u32 %v1773, 7
    %v1775 = vsub.s32 %v1772, %v1774
    %v1776 = vrot.slane %v1502, %v1775
    %v1778 = vunpack.c.l.s4 1966171168
    %v1779 = vunpack.c.0.s8 %v1778
    %v1780 = vlaneseq
    %v1781 = vshrl.u32 %v1780, 7
    %v1782 = vsub.s32 %v1779, %v1781
    %v1783 = vrot.slane %v1769, %v1782
    %v1784 = vcombine.high %v1776, %v1776
    %v1785 = vcombine.high %v1783, %v1783
    %v1787 = vunpack.c.l.s4 1966171168
    %v1788 = vunpack.c.0.s8 %v1787
    %v1789 = vlaneseq
    %v1790 = vshrl.u32 %v1789, 7
    %v1791 = vsub.s32 %v1788, %v1790
    %v1792 = vrot.slane %v1776, %v1791
    %v1794 = vunpack.c.l.s4 1966171168
    %v1795 = vunpack.c.0.s8 %v1794
    %v1796 = vlaneseq
    %v1797 = vshrl.u32 %v1796, 7
    %v1798 = vsub.s32 %v1795, %v1797
    %v1799 = vrot.slane %v1783, %v1798
    %v1801 = vunpack.c.l.s4 1966171168
    %v1802 = vunpack.c.0.s8 %v1801
    %v1803 = vlaneseq
    %v1804 = vshrl.u32 %v1803, 7
    %v1805 = vsub.s32 %v1802, %v1804
    %v1806 = vrot.slane %v1784, %v1805
    %v1808 = vunpack.c.l.s4 1966171168
    %v1809 = vunpack.c.0.s8 %v1808
    %v1810 = vlaneseq
    %v1811 = vshrl.u32 %v1810, 7
    %v1812 = vsub.s32 %v1809, %v1811
    %v1813 = vrot.slane %v1785, %v1812
    %v1814 = vcombine.high %v1792, %v1792
    %v1815 = vcombine.high %v1799, %v1799
    %v1816 = vcombine.high %v1806, %v1806
    %v1817 = vcombine.high %v1813, %v1813
    %v1818 = vcombine.high %v1503, %v1503
    %v1820 = vunpack.c.l.s4 1966171168
    %v1821 = vunpack.c.0.s8 %v1820
    %v1822 = vlaneseq
    %v1823 = vshrl.u32 %v1822, 7
    %v1824 = vsub.s32 %v1821, %v1823
    %v1825 = vrot.slane %v1503, %v1824
    %v1827 = vunpack.c.l.s4 1966171168
    %v1828 = vunpack.c.0.s8 %v1827
    %v1829 = vlaneseq
    %v1830 = vshrl.u32 %v1829, 7
    %v1831 = vsub.s32 %v1828, %v1830
    %v1832 = vrot.slane %v1818, %v1831
    %v1833 = vcombine.high %v1825, %v1825
    %v1834 = vcombine.high %v1832, %v1832
    %v1836 = vunpack.c.l.s4 1966171168
    %v1837 = vunpack.c.0.s8 %v1836
    %v1838 = vlaneseq
    %v1839 = vshrl.u32 %v1838, 7
    %v1840 = vsub.s32 %v1837, %v1839
    %v1841 = vrot.slane %v1825, %v1840
    %v1843 = vunpack.c.l.s4 1966171168
    %v1844 = vunpack.c.0.s8 %v1843
    %v1845 = vlaneseq
    %v1846 = vshrl.u32 %v1845, 7
    %v1847 = vsub.s32 %v1844, %v1846
    %v1848 = vrot.slane %v1832, %v1847
    %v1850 = vunpack.c.l.s4 1966171168
    %v1851 = vunpack.c.0.s8 %v1850
    %v1852 = vlaneseq
    %v1853 = vshrl.u32 %v1852, 7
    %v1854 = vsub.s32 %v1851, %v1853
    %v1855 = vrot.slane %v1833, %v1854
    %v1857 = vunpack.c.l.s4 1966171168
    %v1858 = vunpack.c.0.s8 %v1857
    %v1859 = vlaneseq
    %v1860 = vshrl.u32 %v1859, 7
    %v1861 = vsub.s32 %v1858, %v1860
    %v1862 = vrot.slane %v1834, %v1861
    %v1863 = vcombine.high %v1841, %v1841
    %v1864 = vcombine.high %v1848, %v1848
    %v1865 = vcombine.high %v1855, %v1855
    %v1866 = vcombine.high %v1862, %v1862
    %v2139 = vunpack.c.l.b16 %v1504
    %v2140 = vunpack.c.l.b16 %v1505
    %v2141 = vunpack.c.l.b16 %v1506
    %v2142 = vunpack.c.l.b16 %v1507
    %v2143 = vunpack.c.l.b16 %v1508
    %v2144 = vunpack.c.l.b16 %v1509
    %v2145 = vunpack.c.l.b16 %v1510
    %v2146 = vunpack.c.l.b16 %v1511
    %v2147 = vunpack.c.l.b16 %v1512
    %v2148 = vunpack.c.l.b16 %v1513
    %v2149 = vunpack.c.l.b16 %v1514
    %v2150 = vunpack.c.l.b16 %v1515
    %v2151 = vunpack.c.l.b16 %v1516
    %v2152 = vunpack.c.l.b16 %v1517
    %v2153 = vunpack.c.l.b16 %v1518
    %v2154 = vunpack.c.l.b16 %v1519
    %v2155 = vunpack.c.l.b16 %v1520
    %v2156 = vunpack.c.l.b16 %v1521
    %v2157 = vunpack.c.l.b16 %v1522
    %v2158 = vunpack.c.l.b16 %v1523
    %v2159 = vunpack.c.l.b16 %v1524
    %v2160 = vunpack.c.l.b16 %v1525
    %v2161 = vunpack.c.l.b16 %v1526
    %v2162 = vunpack.c.l.b16 %v1527
    %v2163 = vunpack.c.l.b16 %v1528
    %v2164 = vunpack.c.l.b16 %v1529
    %v2165 = vunpack.c.l.b16 %v1530
    %v2166 = vunpack.c.l.b16 %v1531
    %v2167 = vunpack.c.l.b16 %v1532
    %v2168 = vunpack.c.l.b16 %v1533
    %v2169 = vunpack.c.l.b16 %v1534
    %v2170 = vunpack.c.l.b16 %v1535
    %v2171 = vunpack.c.l.b16 %v1536
    %v2172 = vunpack.c.l.b16 %v1537
    %v2173 = vunpack.c.l.b16 %v1538
    %v2174 = vunpack.c.l.b16 %v1539
    %v2175 = vunpack.c.l.b16 %v1540
    %v2176 = vunpack.c.l.b16 %v1541
    %v2177 = vunpack.c.l.b16 %v1542
    %v2178 = vunpack.c.l.b16 %v1543
    %v2179 = vunpack.c.l.b16 %v1544
    %v2180 = vunpack.c.l.b16 %v1545
    %v2181 = vunpack.c.l.b16 %v1546
    %v2182 = vunpack.c.l.b16 %v1547
    %v2183 = vunpack.c.l.b16 %v1548
    %v2184 = vunpack.c.l.b16 %v1549
    %v2185 = vunpack.c.l.b16 %v1550
    %v2186 = vunpack.c.l.b16 %v1551
    %v2187 = vunpack.c.l.b16 %v1552
    %v2188 = vunpack.c.l.b16 %v1553
    %v2189 = vunpack.c.l.b16 %v1554
    %v2190 = vunpack.c.l.b16 %v1555
    %v2191 = vunpack.c.l.b16 %v1556
    %v2192 = vunpack.c.l.b16 %v1557
    %v2193 = vunpack.c.l.b16 %v1558
    %v2194 = vunpack.c.l.b16 %v1559
    %v2195 = vunpack.c.l.b16 %v1560
    %v2196 = vunpack.c.l.b16 %v1561
    %v2197 = vunpack.c.l.b16 %v1562
    %v2198 = vunpack.c.l.b16 %v1563
    %v2199 = vunpack.c.l.b16 %v1564
    %v2200 = vunpack.c.l.b16 %v1565
    %v2201 = vunpack.c.l.b16 %v1566
    %v2202 = vunpack.c.l.b16 %v1567
    %v2203 = vunpack.c.l.b16 %v1568
    %v2204 = vunpack.c.l.b16 %v1569
    %v2205 = vunpack.c.l.b16 %v1570
    %v2206 = vunpack.c.l.b16 %v1571
    %v2207 = vunpack.c.l.b16 %v1572
    %v2208 = vunpack.c.l.b16 %v1573
    %v2209 = vunpack.c.l.b16 %v1574
    %v2210 = vunpack.c.l.b16 %v1575
    %v2211 = vunpack.c.l.b16 %v1576
    %v2212 = vunpack.c.l.b16 %v1577
    %v2213 = vunpack.c.l.b16 %v1578
    %v2214 = vunpack.c.l.b16 %v1579
    %v2215 = vunpack.c.l.b16 %v1580
    %v2216 = vunpack.c.l.b16 %v1581
    %v2217 = vunpack.c.l.b16 %v1582
    %v2218 = vunpack.c.l.b16 %v1583
    %v2219 = vunpack.c.l.b16 %v1584
    %v2220 = vunpack.c.l.b16 %v1585
    %v2221 = vunpack.c.l.b16 %v1586
    %v2222 = vunpack.c.l.b16 %v1587
    %v2223 = vunpack.c.l.b16 %v1588
    %v2224 = vunpack.c.l.b16 %v1589
    %v2225 = vunpack.c.l.b16 %v1590
    %v2226 = vunpack.c.l.b16 %v1591
    %v2227 = vunpack.c.l.b16 %v1592
    %v2228 = vunpack.c.l.b16 %v1593
    %v2229 = vunpack.c.l.b16 %v1594
    %v2230 = vunpack.c.l.b16 %v1595
    %v2231 = vunpack.c.l.b16 %v1596
    %v2232 = vunpack.c.l.b16 %v1597
    %v2233 = vunpack.c.l.b16 %v1598
    %v2234 = vunpack.c.l.b16 %v1599
    %v2235 = vunpack.c.l.b16 %v1600
    %v2236 = vunpack.c.l.b16 %v1601
    %v2237 = vunpack.c.l.b16 %v1602
    %v2238 = vunpack.c.l.b16 %v1603
    %v2239 = vunpack.c.l.b16 %v1604
    %v2240 = vunpack.c.l.b16 %v1605
    %v2241 = vunpack.c.l.b16 %v1606
    %v2242 = vunpack.c.l.b16 %v1607
    %v2243 = vunpack.c.l.b16 %v1608
    %v2244 = vunpack.c.l.b16 %v1609
    %v2245 = vunpack.c.l.b16 %v1610
    %v2246 = vunpack.c.l.b16 %v1611
    %v2247 = vunpack.c.l.b16 %v1612
    %v2248 = vunpack.c.l.b16 %v1613
    %v2249 = vunpack.c.l.b16 %v1614
    %v2250 = vunpack.c.l.b16 %v1615
    %v2251 = vunpack.c.l.b16 %v1616
    %v2252 = vunpack.c.l.b16 %v1617
    %v2253 = vunpack.c.l.b16 %v1618
    %v2254 = vunpack.c.l.b16 %v1619
    %v2255 = vunpack.c.l.b16 %v1620
    %v2256 = vunpack.c.l.b16 %v1621
    %v2257 = vunpack.c.l.b16 %v1622
    %v2258 = vunpack.c.l.b16 %v1623
    %v2259 = vunpack.c.l.b16 %v1624
    %v2260 = vunpack.c.l.b16 %v1625
    %v2261 = vunpack.c.l.b16 %v1626
    %v2262 = vunpack.c.l.b16 %v1627
    %v2263 = vunpack.c.l.b16 %v1628
    %v2264 = vunpack.c.l.b16 %v1629
    %v2265 = vunpack.c.l.b16 %v1630
    %v2266 = vunpack.c.l.b16 %v1631
    %v2267 = vunpack.c.l.b16 %v1632
    %v2268 = vunpack.c.l.b16 %v1633
    %v2269 = vunpack.c.l.b16 %v1634
    %v2270 = vunpack.c.l.b16 %v1635
    %v2271 = vunpack.c.l.b16 %v1636
    %v2272 = vunpack.c.l.b16 %v1637
    %v2273 = vunpack.c.l.b16 %v1638
    %v2274 = vunpack.c.l.b16 %v1639
    %v2275 = vunpack.c.l.b16 %v1640
    %v2276 = vunpack.c.l.b16 %v1641
    %v2277 = vunpack.c.l.b16 %v1642
    %v2278 = vunpack.c.l.b16 %v1643
    %v2279 = vunpack.c.l.b16 %v1644
    %v2280 = vunpack.c.l.b16 %v1645
    %v2281 = vunpack.c.l.b16 %v1646
    %v2282 = vunpack.c.l.b16 %v1647
    %v2283 = vunpack.c.l.b16 %v1648
    %v2284 = vunpack.c.l.b16 %v1649
    %v2285 = vunpack.c.l.b16 %v1650
    %v2286 = vunpack.c.l.b16 %v1651
    %v2287 = vunpack.c.l.b16 %v1652
    %v2288 = vunpack.c.l.b16 %v1653
    %v2289 = vunpack.c.l.b16 %v1654
    %v2290 = vunpack.c.l.b16 %v1655
    %v2291 = vunpack.c.l.b16 %v1656
    %v2292 = vunpack.c.l.b16 %v1657
    %v2293 = vunpack.c.l.b16 %v1658
    %v2294 = vunpack.c.l.b16 %v1659
    %v2295 = vunpack.c.l.b16 %v1660
    %v2296 = vunpack.c.l.b16 %v1661
    %v2297 = vunpack.c.l.b16 %v1662
    %v2298 = vunpack.c.l.b16 %v1663
    %v2299 = vunpack.c.l.b16 %v1664
    %v2300 = vunpack.c.l.b16 %v1665
    %v2301 = vunpack.c.l.b16 %v1666
    %v2302 = vunpack.c.l.b16 %v1667
    %v2303 = vunpack.c.l.b16 %v1668
    %v2304 = vunpack.c.l.b16 %v1669
    %v2305 = vunpack.c.l.b16 %v1670
    %v2306 = vunpack.c.l.b16 %v1671
    %v2307 = vunpack.c.l.b16 %v1672
    %v2308 = vunpack.c.l.b16 %v1673
    %v2309 = vunpack.c.l.b16 %v1674
    %v2310 = vunpack.c.l.b16 %v1675
    %v2311 = vunpack.c.l.b16 %v1676
    %v2312 = vunpack.c.l.b16 %v1677
    %v2313 = vunpack.c.l.b16 %v1678
    %v2314 = vunpack.c.l.b16 %v1679
    %v2315 = vunpack.c.l.b16 %v1680
    %v2316 = vunpack.c.l.b16 %v1681
    %v2317 = vunpack.c.l.b16 %v1682
    %v2318 = vunpack.c.l.b16 %v1683
    %v2319 = vunpack.c.l.b16 %v1684
    %v2320 = vunpack.c.l.b16 %v1685
    %v2321 = vunpack.c.l.b16 %v1686
    %v2322 = vunpack.c.l.b16 %v1687
    %v2323 = vunpack.c.l.b16 %v1688
    %v2324 = vunpack.c.l.b16 %v1689
    %v2325 = vunpack.c.l.b16 %v1690
    %v2326 = vunpack.c.l.b16 %v1691
    %v2327 = vunpack.c.l.b16 %v1692
    %v2328 = vunpack.c.l.b16 %v1693
    %v2329 = vunpack.c.l.b16 %v1694
    %v2330 = vunpack.c.l.b16 %v1695
    %v2331 = vunpack.c.l.b16 %v1696
    %v2332 = vunpack.c.l.b16 %v1697
    %v2333 = vunpack.c.l.b16 %v1698
    %v2334 = vunpack.c.l.b16 %v1699
    %v2335 = vunpack.c.l.b16 %v1700
    %v2336 = vunpack.c.l.b16 %v1701
    %v2337 = vunpack.c.l.b16 %v1702
    %v2338 = vunpack.c.l.b16 %v1703
    %v2339 = vunpack.c.l.b16 %v1704
    %v2340 = vunpack.c.l.b16 %v1705
    %v2341 = vunpack.c.l.b16 %v1706
    %v2342 = vunpack.c.l.b16 %v1707
    %v2343 = vunpack.c.l.b16 %v1708
    %v2344 = vunpack.c.l.b16 %v1709
    %v2345 = vunpack.c.l.b16 %v1710
    %v2346 = vunpack.c.l.b16 %v1711
    %v2347 = vunpack.c.l.b16 %v1712
    %v2348 = vunpack.c.l.b16 %v1713
    %v2349 = vunpack.c.l.b16 %v1714
    %v2350 = vunpack.c.l.b16 %v1715
    %v2351 = vunpack.c.l.b16 %v1716
    %v2352 = vunpack.c.l.b16 %v1717
    %v2353 = vunpack.c.l.b16 %v1718
    %v2354 = vunpack.c.l.b16 %v1719
    %v2355 = vunpack.c.l.b16 %v1720
    %v2356 = vunpack.c.l.b16 %v1721
    %v2357 = vunpack.c.l.b16 %v1722
    %v2358 = vunpack.c.l.b16 %v1723
    %v2359 = vunpack.c.l.b16 %v1724
    %v2360 = vunpack.c.l.b16 %v1725
    %v2361 = vunpack.c.l.b16 %v1726
    %v2362 = vunpack.c.l.b16 %v1727
    %v2363 = vunpack.c.l.b16 %v1728
    %v2364 = vunpack.c.l.b16 %v1729
    %v2365 = vunpack.c.l.b16 %v1730
    %v2366 = vunpack.c.l.b16 %v1731
    %v2367 = vunpack.c.l.b16 %v1732
    %v2368 = vunpack.c.l.b16 %v1733
    %v2369 = vunpack.c.l.b16 %v1734
    %v2370 = vunpack.c.l.b16 %v1735
    %v2371 = vunpack.c.l.b16 %v1736
    %v2372 = vunpack.c.l.b16 %v1737
    %v2373 = vunpack.c.l.b16 %v1738
    %v2374 = vunpack.c.l.b16 %v1739
    %v2375 = vunpack.c.l.b16 %v1740
    %v2376 = vunpack.c.l.b16 %v1741
    %v2377 = vunpack.c.l.b16 %v1742
    %v2378 = vunpack.c.l.b16 %v1743
    %v2379 = vunpack.c.l.b16 %v1744
    %v2380 = vunpack.c.l.b16 %v1745
    %v2381 = vunpack.c.l.b16 %v1746
    %v2382 = vunpack.c.l.b16 %v1747
    %v2383 = vunpack.c.l.b16 %v1748
    %v2384 = vunpack.c.l.b16 %v1749
    %v2385 = vunpack.c.l.b16 %v1750
    %v2386 = vunpack.c.l.b16 %v1751
    %v2387 = vunpack.c.l.b16 %v1752
    %v2388 = vunpack.c.l.b16 %v1753
    %v2389 = vunpack.c.l.b16 %v1754
    %v2390 = vunpack.c.l.b16 %v1755
    %v2391 = vunpack.c.l.b16 %v1756
    %v2392 = vunpack.c.l.b16 %v1757
    %v2393 = vunpack.c.l.b16 %v1758
    %v2394 = vunpack.c.l.b16 %v1759
    %v2395 = vpack.c.b16 %v2140, %v2139
    %v2396 = vpack.c.b16 %v2142, %v2141
    %v2397 = vpack.c.b16 %v2144, %v2143
    %v2398 = vpack.c.b16 %v2146, %v2145
    %v2399 = vpack.c.b16 %v2148, %v2147
    %v2400 = vpack.c.b16 %v2150, %v2149
    %v2401 = vpack.c.b16 %v2152, %v2151
    %v2402 = vpack.c.b16 %v2154, %v2153
    %v2403 = vpack.c.b16 %v2156, %v2155
    %v2404 = vpack.c.b16 %v2158, %v2157
    %v2405 = vpack.c.b16 %v2160, %v2159
    %v2406 = vpack.c.b16 %v2162, %v2161
    %v2407 = vpack.c.b16 %v2164, %v2163
    %v2408 = vpack.c.b16 %v2166, %v2165
    %v2409 = vpack.c.b16 %v2168, %v2167
    %v2410 = vpack.c.b16 %v2170, %v2169
    %v2411 = vpack.c.b16 %v2172, %v2171
    %v2412 = vpack.c.b16 %v2174, %v2173
    %v2413 = vpack.c.b16 %v2176, %v2175
    %v2414 = vpack.c.b16 %v2178, %v2177
    %v2415 = vpack.c.b16 %v2180, %v2179
    %v2416 = vpack.c.b16 %v2182, %v2181
    %v2417 = vpack.c.b16 %v2184, %v2183
    %v2418 = vpack.c.b16 %v2186, %v2185
    %v2419 = vpack.c.b16 %v2188, %v2187
    %v2420 = vpack.c.b16 %v2190, %v2189
    %v2421 = vpack.c.b16 %v2192, %v2191
    %v2422 = vpack.c.b16 %v2194, %v2193
    %v2423 = vpack.c.b16 %v2196, %v2195
    %v2424 = vpack.c.b16 %v2198, %v2197
    %v2425 = vpack.c.b16 %v2200, %v2199
    %v2426 = vpack.c.b16 %v2202, %v2201
    %v2427 = vpack.c.b16 %v2204, %v2203
    %v2428 = vpack.c.b16 %v2206, %v2205
    %v2429 = vpack.c.b16 %v2208, %v2207
    %v2430 = vpack.c.b16 %v2210, %v2209
    %v2431 = vpack.c.b16 %v2212, %v2211
    %v2432 = vpack.c.b16 %v2214, %v2213
    %v2433 = vpack.c.b16 %v2216, %v2215
    %v2434 = vpack.c.b16 %v2218, %v2217
    %v2435 = vpack.c.b16 %v2220, %v2219
    %v2436 = vpack.c.b16 %v2222, %v2221
    %v2437 = vpack.c.b16 %v2224, %v2223
    %v2438 = vpack.c.b16 %v2226, %v2225
    %v2439 = vpack.c.b16 %v2228, %v2227
    %v2440 = vpack.c.b16 %v2230, %v2229
    %v2441 = vpack.c.b16 %v2232, %v2231
    %v2442 = vpack.c.b16 %v2234, %v2233
    %v2443 = vpack.c.b16 %v2236, %v2235
    %v2444 = vpack.c.b16 %v2238, %v2237
    %v2445 = vpack.c.b16 %v2240, %v2239
    %v2446 = vpack.c.b16 %v2242, %v2241
    %v2447 = vpack.c.b16 %v2244, %v2243
    %v2448 = vpack.c.b16 %v2246, %v2245
    %v2449 = vpack.c.b16 %v2248, %v2247
    %v2450 = vpack.c.b16 %v2250, %v2249
    %v2451 = vpack.c.b16 %v2252, %v2251
    %v2452 = vpack.c.b16 %v2254, %v2253
    %v2453 = vpack.c.b16 %v2256, %v2255
    %v2454 = vpack.c.b16 %v2258, %v2257
    %v2455 = vpack.c.b16 %v2260, %v2259
    %v2456 = vpack.c.b16 %v2262, %v2261
    %v2457 = vpack.c.b16 %v2264, %v2263
    %v2458 = vpack.c.b16 %v2266, %v2265
    %v2459 = vpack.c.b16 %v2268, %v2267
    %v2460 = vpack.c.b16 %v2270, %v2269
    %v2461 = vpack.c.b16 %v2272, %v2271
    %v2462 = vpack.c.b16 %v2274, %v2273
    %v2463 = vpack.c.b16 %v2276, %v2275
    %v2464 = vpack.c.b16 %v2278, %v2277
    %v2465 = vpack.c.b16 %v2280, %v2279
    %v2466 = vpack.c.b16 %v2282, %v2281
    %v2467 = vpack.c.b16 %v2284, %v2283
    %v2468 = vpack.c.b16 %v2286, %v2285
    %v2469 = vpack.c.b16 %v2288, %v2287
    %v2470 = vpack.c.b16 %v2290, %v2289
    %v2471 = vpack.c.b16 %v2292, %v2291
    %v2472 = vpack.c.b16 %v2294, %v2293
    %v2473 = vpack.c.b16 %v2296, %v2295
    %v2474 = vpack.c.b16 %v2298, %v2297
    %v2475 = vpack.c.b16 %v2300, %v2299
    %v2476 = vpack.c.b16 %v2302, %v2301
    %v2477 = vpack.c.b16 %v2304, %v2303
    %v2478 = vpack.c.b16 %v2306, %v2305
    %v2479 = vpack.c.b16 %v2308, %v2307
    %v2480 = vpack.c.b16 %v2310, %v2309
    %v2481 = vpack.c.b16 %v2312, %v2311
    %v2482 = vpack.c.b16 %v2314, %v2313
    %v2483 = vpack.c.b16 %v2316, %v2315
    %v2484 = vpack.c.b16 %v2318, %v2317
    %v2485 = vpack.c.b16 %v2320, %v2319
    %v2486 = vpack.c.b16 %v2322, %v2321
    %v2487 = vpack.c.b16 %v2324, %v2323
    %v2488 = vpack.c.b16 %v2326, %v2325
    %v2489 = vpack.c.b16 %v2328, %v2327
    %v2490 = vpack.c.b16 %v2330, %v2329
    %v2491 = vpack.c.b16 %v2332, %v2331
    %v2492 = vpack.c.b16 %v2334, %v2333
    %v2493 = vpack.c.b16 %v2336, %v2335
    %v2494 = vpack.c.b16 %v2338, %v2337
    %v2495 = vpack.c.b16 %v2340, %v2339
    %v2496 = vpack.c.b16 %v2342, %v2341
    %v2497 = vpack.c.b16 %v2344, %v2343
    %v2498 = vpack.c.b16 %v2346, %v2345
    %v2499 = vpack.c.b16 %v2348, %v2347
    %v2500 = vpack.c.b16 %v2350, %v2349
    %v2501 = vpack.c.b16 %v2352, %v2351
    %v2502 = vpack.c.b16 %v2354, %v2353
    %v2503 = vpack.c.b16 %v2356, %v2355
    %v2504 = vpack.c.b16 %v2358, %v2357
    %v2505 = vpack.c.b16 %v2360, %v2359
    %v2506 = vpack.c.b16 %v2362, %v2361
    %v2507 = vpack.c.b16 %v2364, %v2363
    %v2508 = vpack.c.b16 %v2366, %v2365
    %v2509 = vpack.c.b16 %v2368, %v2367
    %v2510 = vpack.c.b16 %v2370, %v2369
    %v2511 = vpack.c.b16 %v2372, %v2371
    %v2512 = vpack.c.b16 %v2374, %v2373
    %v2513 = vpack.c.b16 %v2376, %v2375
    %v2514 = vpack.c.b16 %v2378, %v2377
    %v2515 = vpack.c.b16 %v2380, %v2379
    %v2516 = vpack.c.b16 %v2382, %v2381
    %v2517 = vpack.c.b16 %v2384, %v2383
    %v2518 = vpack.c.b16 %v2386, %v2385
    %v2519 = vpack.c.b16 %v2388, %v2387
    %v2520 = vpack.c.b16 %v2390, %v2389
    %v2521 = vpack.c.b16 %v2392, %v2391
    %v2522 = vpack.c.b16 %v2394, %v2393
    %2651 = vmatprep.subr.bf16.mxu0 0
    %2652 = vmatpush1.bf16.msra.mxu0 %v2395
    %2653 = vmatprep.subr.bf16.mxu0 0
    %2654 = vmatpush1.bf16.msra.mxu0 %v2396
    %2655 = vmatprep.subr.bf16.mxu0 0
    %2656 = vmatpush1.bf16.msra.mxu0 %v2397
    %2657 = vmatprep.subr.bf16.mxu0 0
    %2658 = vmatpush1.bf16.msra.mxu0 %v2398
    %2659 = vmatprep.subr.bf16.mxu0 0
    %2660 = vmatpush1.bf16.msra.mxu0 %v2399
    %2661 = vmatprep.subr.bf16.mxu0 0
    %2662 = vmatpush1.bf16.msra.mxu0 %v2400
    %2663 = vmatprep.subr.bf16.mxu0 0
    %2664 = vmatpush1.bf16.msra.mxu0 %v2401
    %2665 = vmatprep.subr.bf16.mxu0 0
    %2666 = vmatpush1.bf16.msra.mxu0 %v2402
    %2667 = vmatprep.subr.bf16.mxu0 0
    %2668 = vmatpush1.bf16.msra.mxu0 %v2403
    %2669 = vmatprep.subr.bf16.mxu0 0
    %2670 = vmatpush1.bf16.msra.mxu0 %v2404
    %2671 = vmatprep.subr.bf16.mxu0 0
    %2672 = vmatpush1.bf16.msra.mxu0 %v2405
    %2673 = vmatprep.subr.bf16.mxu0 0
    %2674 = vmatpush1.bf16.msra.mxu0 %v2406
    %2675 = vmatprep.subr.bf16.mxu0 0
    %2676 = vmatpush1.bf16.msra.mxu0 %v2407
    %2677 = vmatprep.subr.bf16.mxu0 0
    %2678 = vmatpush1.bf16.msra.mxu0 %v2408
    %2679 = vmatprep.subr.bf16.mxu0 0
    %2680 = vmatpush1.bf16.msra.mxu0 %v2409
    %2681 = vmatprep.subr.bf16.mxu0 0
    %2682 = vmatpush1.bf16.msra.mxu0 %v2410
    %2683 = vmatprep.mubr.bf16.mxu0 %v1806
    %2684 = vmatmul.mubr.bf16.gmra.mrb[0].mxu0 %v1792
    %v2685 = vpop.f32.mrb[0].mxu0
    %v2686 = vadd.f32 %v1765, %v2685
    %v2687 = vpop.f32.mrb[0].mxu0
    %v2688 = vpop.f32.mrb[0].mxu0
    %v2689 = vpop.f32.mrb[0].mxu0
    %2690 = vdwg.mxu0
    %2691 = vmatprep.subr.bf16.mxu0 0
    %2692 = vmatpush1.bf16.msra.mxu0 %v2411
    %2693 = vmatprep.subr.bf16.mxu0 0
    %2694 = vmatpush1.bf16.msra.mxu0 %v2412
    %2695 = vmatprep.subr.bf16.mxu0 0
    %2696 = vmatpush1.bf16.msra.mxu0 %v2413
    %2697 = vmatprep.subr.bf16.mxu0 0
    %2698 = vmatpush1.bf16.msra.mxu0 %v2414
    %2699 = vmatprep.subr.bf16.mxu0 0
    %2700 = vmatpush1.bf16.msra.mxu0 %v2415
    %2701 = vmatprep.subr.bf16.mxu0 0
    %2702 = vmatpush1.bf16.msra.mxu0 %v2416
    %2703 = vmatprep.subr.bf16.mxu0 0
    %2704 = vmatpush1.bf16.msra.mxu0 %v2417
    %2705 = vmatprep.subr.bf16.mxu0 0
    %2706 = vmatpush1.bf16.msra.mxu0 %v2418
    %2707 = vmatprep.subr.bf16.mxu0 0
    %2708 = vmatpush1.bf16.msra.mxu0 %v2419
    %2709 = vmatprep.subr.bf16.mxu0 0
    %2710 = vmatpush1.bf16.msra.mxu0 %v2420
    %2711 = vmatprep.subr.bf16.mxu0 0
    %2712 = vmatpush1.bf16.msra.mxu0 %v2421
    %2713 = vmatprep.subr.bf16.mxu0 0
    %2714 = vmatpush1.bf16.msra.mxu0 %v2422
    %2715 = vmatprep.subr.bf16.mxu0 0
    %2716 = vmatpush1.bf16.msra.mxu0 %v2423
    %2717 = vmatprep.subr.bf16.mxu0 0
    %2718 = vmatpush1.bf16.msra.mxu0 %v2424
    %2719 = vmatprep.subr.bf16.mxu0 0
    %2720 = vmatpush1.bf16.msra.mxu0 %v2425
    %2721 = vmatprep.subr.bf16.mxu0 0
    %2722 = vmatpush1.bf16.msra.mxu0 %v2426
    %2723 = vmatprep.mubr.bf16.mxu0 %v1816
    %2724 = vmatmul.mubr.bf16.gmra.mrb[0].mxu0 %v1814
    %v2725 = vpop.f32.mrb[0].mxu0
    %v2726 = vadd.f32 %v2686, %v2725
    %v2727 = vpop.f32.mrb[0].mxu0
    %v2728 = vpop.f32.mrb[0].mxu0
    %v2729 = vpop.f32.mrb[0].mxu0
    %2730 = vdwg.mxu0
    %2731 = vmatprep.subr.bf16.mxu0 0
    %2732 = vmatpush1.bf16.msra.mxu0 %v2427
    %2733 = vmatprep.subr.bf16.mxu0 0
    %2734 = vmatpush1.bf16.msra.mxu0 %v2428
    %2735 = vmatprep.subr.bf16.mxu0 0
    %2736 = vmatpush1.bf16.msra.mxu0 %v2429
    %2737 = vmatprep.subr.bf16.mxu0 0
    %2738 = vmatpush1.bf16.msra.mxu0 %v2430
    %2739 = vmatprep.subr.bf16.mxu0 0
    %2740 = vmatpush1.bf16.msra.mxu0 %v2431
    %2741 = vmatprep.subr.bf16.mxu0 0
    %2742 = vmatpush1.bf16.msra.mxu0 %v2432
    %2743 = vmatprep.subr.bf16.mxu0 0
    %2744 = vmatpush1.bf16.msra.mxu0 %v2433
    %2745 = vmatprep.subr.bf16.mxu0 0
    %2746 = vmatpush1.bf16.msra.mxu0 %v2434
    %2747 = vmatprep.subr.bf16.mxu0 0
    %2748 = vmatpush1.bf16.msra.mxu0 %v2435
    %2749 = vmatprep.subr.bf16.mxu0 0
    %2750 = vmatpush1.bf16.msra.mxu0 %v2436
    %2751 = vmatprep.subr.bf16.mxu0 0
    %2752 = vmatpush1.bf16.msra.mxu0 %v2437
    %2753 = vmatprep.subr.bf16.mxu0 0
    %2754 = vmatpush1.bf16.msra.mxu0 %v2438
    %2755 = vmatprep.subr.bf16.mxu0 0
    %2756 = vmatpush1.bf16.msra.mxu0 %v2439
    %2757 = vmatprep.subr.bf16.mxu0 0
    %2758 = vmatpush1.bf16.msra.mxu0 %v2440
    %2759 = vmatprep.subr.bf16.mxu0 0
    %2760 = vmatpush1.bf16.msra.mxu0 %v2441
    %2761 = vmatprep.subr.bf16.mxu0 0
    %2762 = vmatpush1.bf16.msra.mxu0 %v2442
    %2763 = vmatprep.mubr.bf16.mxu0 %v1813
    %2764 = vmatmul.mubr.bf16.gmra.mrb[0].mxu0 %v1799
    %v2765 = vpop.f32.mrb[0].mxu0
    %v2766 = vadd.f32 %v2726, %v2765
    %v2767 = vpop.f32.mrb[0].mxu0
    %v2768 = vpop.f32.mrb[0].mxu0
    %v2769 = vpop.f32.mrb[0].mxu0
    %2770 = vdwg.mxu0
    %2771 = vmatprep.subr.bf16.mxu0 0
    %2772 = vmatpush1.bf16.msra.mxu0 %v2443
    %2773 = vmatprep.subr.bf16.mxu0 0
    %2774 = vmatpush1.bf16.msra.mxu0 %v2444
    %2775 = vmatprep.subr.bf16.mxu0 0
    %2776 = vmatpush1.bf16.msra.mxu0 %v2445
    %2777 = vmatprep.subr.bf16.mxu0 0
    %2778 = vmatpush1.bf16.msra.mxu0 %v2446
    %2779 = vmatprep.subr.bf16.mxu0 0
    %2780 = vmatpush1.bf16.msra.mxu0 %v2447
    %2781 = vmatprep.subr.bf16.mxu0 0
    %2782 = vmatpush1.bf16.msra.mxu0 %v2448
    %2783 = vmatprep.subr.bf16.mxu0 0
    %2784 = vmatpush1.bf16.msra.mxu0 %v2449
    %2785 = vmatprep.subr.bf16.mxu0 0
    %2786 = vmatpush1.bf16.msra.mxu0 %v2450
    %2787 = vmatprep.subr.bf16.mxu0 0
    %2788 = vmatpush1.bf16.msra.mxu0 %v2451
    %2789 = vmatprep.subr.bf16.mxu0 0
    %2790 = vmatpush1.bf16.msra.mxu0 %v2452
    %2791 = vmatprep.subr.bf16.mxu0 0
    %2792 = vmatpush1.bf16.msra.mxu0 %v2453
    %2793 = vmatprep.subr.bf16.mxu0 0
    %2794 = vmatpush1.bf16.msra.mxu0 %v2454
    %2795 = vmatprep.subr.bf16.mxu0 0
    %2796 = vmatpush1.bf16.msra.mxu0 %v2455
    %2797 = vmatprep.subr.bf16.mxu0 0
    %2798 = vmatpush1.bf16.msra.mxu0 %v2456
    %2799 = vmatprep.subr.bf16.mxu0 0
    %2800 = vmatpush1.bf16.msra.mxu0 %v2457
    %2801 = vmatprep.subr.bf16.mxu0 0
    %2802 = vmatpush1.bf16.msra.mxu0 %v2458
    %2803 = vmatprep.mubr.bf16.mxu0 %v1817
    %2804 = vmatmul.mubr.bf16.gmra.mrb[0].mxu0 %v1815
    %v2805 = vpop.f32.mrb[0].mxu0
    %v2806 = vadd.f32 %v2766, %v2805
    %v2807 = vpop.f32.mrb[0].mxu0
    %v2808 = vpop.f32.mrb[0].mxu0
    %v2809 = vpop.f32.mrb[0].mxu0
    %2810 = vdwg.mxu0
    %2811 = vmatprep.subr.bf16.mxu0 0
    %2812 = vmatpush1.bf16.msra.mxu0 %v2459
    %2813 = vmatprep.subr.bf16.mxu0 0
    %2814 = vmatpush1.bf16.msra.mxu0 %v2460
    %2815 = vmatprep.subr.bf16.mxu0 0
    %2816 = vmatpush1.bf16.msra.mxu0 %v2461
    %2817 = vmatprep.subr.bf16.mxu0 0
    %2818 = vmatpush1.bf16.msra.mxu0 %v2462
    %2819 = vmatprep.subr.bf16.mxu0 0
    %2820 = vmatpush1.bf16.msra.mxu0 %v2463
    %2821 = vmatprep.subr.bf16.mxu0 0
    %2822 = vmatpush1.bf16.msra.mxu0 %v2464
    %2823 = vmatprep.subr.bf16.mxu0 0
    %2824 = vmatpush1.bf16.msra.mxu0 %v2465
    %2825 = vmatprep.subr.bf16.mxu0 0
    %2826 = vmatpush1.bf16.msra.mxu0 %v2466
    %2827 = vmatprep.subr.bf16.mxu0 0
    %2828 = vmatpush1.bf16.msra.mxu0 %v2467
    %2829 = vmatprep.subr.bf16.mxu0 0
    %2830 = vmatpush1.bf16.msra.mxu0 %v2468
    %2831 = vmatprep.subr.bf16.mxu0 0
    %2832 = vmatpush1.bf16.msra.mxu0 %v2469
    %2833 = vmatprep.subr.bf16.mxu0 0
    %2834 = vmatpush1.bf16.msra.mxu0 %v2470
    %2835 = vmatprep.subr.bf16.mxu0 0
    %2836 = vmatpush1.bf16.msra.mxu0 %v2471
    %2837 = vmatprep.subr.bf16.mxu0 0
    %2838 = vmatpush1.bf16.msra.mxu0 %v2472
    %2839 = vmatprep.subr.bf16.mxu0 0
    %2840 = vmatpush1.bf16.msra.mxu0 %v2473
    %2841 = vmatprep.subr.bf16.mxu0 0
    %2842 = vmatpush1.bf16.msra.mxu0 %v2474
    %2843 = vmatprep.mubr.bf16.mxu0 %v1855
    %2844 = vmatmul.mubr.bf16.gmra.mrb[0].mxu0 %v1841
    %v2845 = vpop.f32.mrb[0].mxu0
    %v2846 = vadd.f32 %v2806, %v2845
    %v2847 = vpop.f32.mrb[0].mxu0
    %v2848 = vpop.f32.mrb[0].mxu0
    %v2849 = vpop.f32.mrb[0].mxu0
    %2850 = vdwg.mxu0
    %2851 = vmatprep.subr.bf16.mxu0 0
    %2852 = vmatpush1.bf16.msra.mxu0 %v2475
    %2853 = vmatprep.subr.bf16.mxu0 0
    %2854 = vmatpush1.bf16.msra.mxu0 %v2476
    %2855 = vmatprep.subr.bf16.mxu0 0
    %2856 = vmatpush1.bf16.msra.mxu0 %v2477
    %2857 = vmatprep.subr.bf16.mxu0 0
    %2858 = vmatpush1.bf16.msra.mxu0 %v2478
    %2859 = vmatprep.subr.bf16.mxu0 0
    %2860 = vmatpush1.bf16.msra.mxu0 %v2479
    %2861 = vmatprep.subr.bf16.mxu0 0
    %2862 = vmatpush1.bf16.msra.mxu0 %v2480
    %2863 = vmatprep.subr.bf16.mxu0 0
    %2864 = vmatpush1.bf16.msra.mxu0 %v2481
    %2865 = vmatprep.subr.bf16.mxu0 0
    %2866 = vmatpush1.bf16.msra.mxu0 %v2482
    %2867 = vmatprep.subr.bf16.mxu0 0
    %2868 = vmatpush1.bf16.msra.mxu0 %v2483
    %2869 = vmatprep.subr.bf16.mxu0 0
    %2870 = vmatpush1.bf16.msra.mxu0 %v2484
    %2871 = vmatprep.subr.bf16.mxu0 0
    %2872 = vmatpush1.bf16.msra.mxu0 %v2485
    %2873 = vmatprep.subr.bf16.mxu0 0
    %2874 = vmatpush1.bf16.msra.mxu0 %v2486
    %2875 = vmatprep.subr.bf16.mxu0 0
    %2876 = vmatpush1.bf16.msra.mxu0 %v2487
    %2877 = vmatprep.subr.bf16.mxu0 0
    %2878 = vmatpush1.bf16.msra.mxu0 %v2488
    %2879 = vmatprep.subr.bf16.mxu0 0
    %2880 = vmatpush1.bf16.msra.mxu0 %v2489
    %2881 = vmatprep.subr.bf16.mxu0 0
    %2882 = vmatpush1.bf16.msra.mxu0 %v2490
    %2883 = vmatprep.mubr.bf16.mxu0 %v1865
    %2884 = vmatmul.mubr.bf16.gmra.mrb[0].mxu0 %v1863
    %v2885 = vpop.f32.mrb[0].mxu0
    %v2886 = vadd.f32 %v2846, %v2885
    %v2887 = vpop.f32.mrb[0].mxu0
    %v2888 = vpop.f32.mrb[0].mxu0
    %v2889 = vpop.f32.mrb[0].mxu0
    %2890 = vdwg.mxu0
    %2891 = vmatprep.subr.bf16.mxu0 0
    %2892 = vmatpush1.bf16.msra.mxu0 %v2491
    %2893 = vmatprep.subr.bf16.mxu0 0
    %2894 = vmatpush1.bf16.msra.mxu0 %v2492
    %2895 = vmatprep.subr.bf16.mxu0 0
    %2896 = vmatpush1.bf16.msra.mxu0 %v2493
    %2897 = vmatprep.subr.bf16.mxu0 0
    %2898 = vmatpush1.bf16.msra.mxu0 %v2494
    %2899 = vmatprep.subr.bf16.mxu0 0
    %2900 = vmatpush1.bf16.msra.mxu0 %v2495
    %2901 = vmatprep.subr.bf16.mxu0 0
    %2902 = vmatpush1.bf16.msra.mxu0 %v2496
    %2903 = vmatprep.subr.bf16.mxu0 0
    %2904 = vmatpush1.bf16.msra.mxu0 %v2497
    %2905 = vmatprep.subr.bf16.mxu0 0
    %2906 = vmatpush1.bf16.msra.mxu0 %v2498
    %2907 = vmatprep.subr.bf16.mxu0 0
    %2908 = vmatpush1.bf16.msra.mxu0 %v2499
    %2909 = vmatprep.subr.bf16.mxu0 0
    %2910 = vmatpush1.bf16.msra.mxu0 %v2500
    %2911 = vmatprep.subr.bf16.mxu0 0
    %2912 = vmatpush1.bf16.msra.mxu0 %v2501
    %2913 = vmatprep.subr.bf16.mxu0 0
    %2914 = vmatpush1.bf16.msra.mxu0 %v2502
    %2915 = vmatprep.subr.bf16.mxu0 0
    %2916 = vmatpush1.bf16.msra.mxu0 %v2503
    %2917 = vmatprep.subr.bf16.mxu0 0
    %2918 = vmatpush1.bf16.msra.mxu0 %v2504
    %2919 = vmatprep.subr.bf16.mxu0 0
    %2920 = vmatpush1.bf16.msra.mxu0 %v2505
    %2921 = vmatprep.subr.bf16.mxu0 0
    %2922 = vmatpush1.bf16.msra.mxu0 %v2506
    %2923 = vmatprep.mubr.bf16.mxu0 %v1862
    %2924 = vmatmul.mubr.bf16.gmra.mrb[0].mxu0 %v1848
    %v2925 = vpop.f32.mrb[0].mxu0
    %v2926 = vadd.f32 %v2886, %v2925
    %v2927 = vpop.f32.mrb[0].mxu0
    %v2928 = vpop.f32.mrb[0].mxu0
    %v2929 = vpop.f32.mrb[0].mxu0
    %2930 = vdwg.mxu0
    %2931 = vmatprep.subr.bf16.mxu0 0
    %2932 = vmatpush1.bf16.msra.mxu0 %v2507
    %2933 = vmatprep.subr.bf16.mxu0 0
    %2934 = vmatpush1.bf16.msra.mxu0 %v2508
    %2935 = vmatprep.subr.bf16.mxu0 0
    %2936 = vmatpush1.bf16.msra.mxu0 %v2509
    %2937 = vmatprep.subr.bf16.mxu0 0
    %2938 = vmatpush1.bf16.msra.mxu0 %v2510
    %2939 = vmatprep.subr.bf16.mxu0 0
    %2940 = vmatpush1.bf16.msra.mxu0 %v2511
    %2941 = vmatprep.subr.bf16.mxu0 0
    %2942 = vmatpush1.bf16.msra.mxu0 %v2512
    %2943 = vmatprep.subr.bf16.mxu0 0
    %2944 = vmatpush1.bf16.msra.mxu0 %v2513
    %2945 = vmatprep.subr.bf16.mxu0 0
    %2946 = vmatpush1.bf16.msra.mxu0 %v2514
    %2947 = vmatprep.subr.bf16.mxu0 0
    %2948 = vmatpush1.bf16.msra.mxu0 %v2515
    %2949 = vmatprep.subr.bf16.mxu0 0
    %2950 = vmatpush1.bf16.msra.mxu0 %v2516
    %2951 = vmatprep.subr.bf16.mxu0 0
    %2952 = vmatpush1.bf16.msra.mxu0 %v2517
    %2953 = vmatprep.subr.bf16.mxu0 0
    %2954 = vmatpush1.bf16.msra.mxu0 %v2518
    %2955 = vmatprep.subr.bf16.mxu0 0
    %2956 = vmatpush1.bf16.msra.mxu0 %v2519
    %2957 = vmatprep.subr.bf16.mxu0 0
    %2958 = vmatpush1.bf16.msra.mxu0 %v2520
    %2959 = vmatprep.subr.bf16.mxu0 0
    %2960 = vmatpush1.bf16.msra.mxu0 %v2521
    %2961 = vmatprep.subr.bf16.mxu0 0
    %2962 = vmatpush1.bf16.msra.mxu0 %v2522
    %2963 = vmatprep.mubr.bf16.mxu0 %v1866
    %2964 = vmatmul.mubr.bf16.gmra.mrb[0].mxu0 %v1864
    %v2965 = vpop.f32.mrb[0].mxu0
    %v2966 = vadd.f32 %v2926, %v2965
    %v2967 = vpop.f32.mrb[0].mxu0
    %v2968 = vpop.f32.mrb[0].mxu0
    %v2969 = vpop.f32.mrb[0].mxu0
    %2970 = vdwg.mxu0
    %v2971 = vpack.c.bf16 %v1496, %v1496
    %v2972 = vld [vmem:[%s7] sm:$0xf]
    %v2973 = vld [vmem:[%s7 + $0x4] sm:$0xf]
    %v2974 = vld [vmem:[%s7 + $0x8] sm:$0xf]
    %v2975 = vld [vmem:[%s7 + $0xc] sm:$0xf]
    %v2976 = vld [vmem:[%s7 + $0x10] sm:$0xf]
    %v2977 = vld [vmem:[%s7 + $0x14] sm:$0xf]
    %v2978 = vld [vmem:[%s7 + $0x18] sm:$0xf]
    %v2979 = vld [vmem:[%s7 + $0x1c] sm:$0xf]
    %v2980 = vld [vmem:[%s7 + $0x20] sm:$0xf]
    %v2981 = vld [vmem:[%s7 + $0x24] sm:$0xf]
    %v2982 = vld [vmem:[%s7 + $0x28] sm:$0xf]
    %v2983 = vld [vmem:[%s7 + $0x2c] sm:$0xf]
    %v2984 = vld [vmem:[%s7 + $0x30] sm:$0xf]
    %v2985 = vld [vmem:[%s7 + $0x34] sm:$0xf]
    %v2986 = vld [vmem:[%s7 + $0x38] sm:$0xf]
    %v2987 = vld [vmem:[%s7 + $0x3c] sm:$0xf]
    %v2988 = vld [vmem:[%s6] sm:$0x1]
    %v2989 = vld [vmem:[%s8] sm:$0xf]
    %v2990 = vld [vmem:[%s8 + $0x4] sm:$0xf]
    %v2991 = vld [vmem:[%s8 + $0x8] sm:$0xf]
    %v2992 = vld [vmem:[%s8 + $0xc] sm:$0xf]
    %v2993 = vld [vmem:[%s8 + $0x10] sm:$0xf]
    %v2994 = vld [vmem:[%s8 + $0x14] sm:$0xf]
    %v2995 = vld [vmem:[%s8 + $0x18] sm:$0xf]
    %v2996 = vld [vmem:[%s8 + $0x1c] sm:$0xf]
    %v2997 = vld [vmem:[%s8 + $0x20] sm:$0xf]
    %v2998 = vld [vmem:[%s8 + $0x24] sm:$0xf]
    %v2999 = vld [vmem:[%s8 + $0x28] sm:$0xf]
    %v3000 = vld [vmem:[%s8 + $0x2c] sm:$0xf]
    %v3001 = vld [vmem:[%s8 + $0x30] sm:$0xf]
    %v3002 = vld [vmem:[%s8 + $0x34] sm:$0xf]
    %v3003 = vld [vmem:[%s8 + $0x38] sm:$0xf]
    %v3004 = vld [vmem:[%s8 + $0x3c] sm:$0xf]
    %v3021 = vunpack.c.l.b16 %v2989
    %v3022 = vunpack.c.l.b16 %v2990
    %v3023 = vunpack.c.l.b16 %v2991
    %v3024 = vunpack.c.l.b16 %v2992
    %v3025 = vunpack.c.l.b16 %v2993
    %v3026 = vunpack.c.l.b16 %v2994
    %v3027 = vunpack.c.l.b16 %v2995
    %v3028 = vunpack.c.l.b16 %v2996
    %v3029 = vunpack.c.l.b16 %v2997
    %v3030 = vunpack.c.l.b16 %v2998
    %v3031 = vunpack.c.l.b16 %v2999
    %v3032 = vunpack.c.l.b16 %v3000
    %v3033 = vunpack.c.l.b16 %v3001
    %v3034 = vunpack.c.l.b16 %v3002
    %v3035 = vunpack.c.l.b16 %v3003
    %v3036 = vunpack.c.l.b16 %v3004
    %v3037 = vpack.c.b16 %v3022, %v3021
    %v3038 = vpack.c.b16 %v3024, %v3023
    %v3039 = vpack.c.b16 %v3026, %v3025
    %v3040 = vpack.c.b16 %v3028, %v3027
    %v3041 = vpack.c.b16 %v3030, %v3029
    %v3042 = vpack.c.b16 %v3032, %v3031
    %v3043 = vpack.c.b16 %v3034, %v3033
    %v3044 = vpack.c.b16 %v3036, %v3035
    %3053 = vmatprep.subr.bf16.mxu0 0
    %3054 = vmatpush1.bf16.msra.mxu0 %v3037
    %3055 = vmatprep.subr.bf16.mxu0 0
    %3056 = vmatpush1.bf16.msra.mxu0 %v3038
    %3057 = vmatprep.subr.bf16.mxu0 0
    %3058 = vmatpush1.bf16.msra.mxu0 %v3039
    %3059 = vmatprep.subr.bf16.mxu0 0
    %3060 = vmatpush1.bf16.msra.mxu0 %v3040
    %3061 = vmatprep.subr.bf16.mxu0 0
    %3062 = vmatpush1.bf16.msra.mxu0 %v3041
    %3063 = vmatprep.subr.bf16.mxu0 0
    %3064 = vmatpush1.bf16.msra.mxu0 %v3042
    %3065 = vmatprep.subr.bf16.mxu0 0
    %3066 = vmatpush1.bf16.msra.mxu0 %v3043
    %3067 = vmatprep.subr.bf16.mxu0 0
    %3068 = vmatpush1.bf16.msra.mxu0 %v3044
    %3069 = vmatprep.subr.bf16.mxu0 0
    %3070 = vmatpush1.bf16.msra.mxu0 0
    %3071 = vmatprep.subr.bf16.mxu0 0
    %3072 = vmatpush1.bf16.msra.mxu0 0
    %3073 = vmatprep.subr.bf16.mxu0 0
    %3074 = vmatpush1.bf16.msra.mxu0 0
    %3075 = vmatprep.subr.bf16.mxu0 0
    %3076 = vmatpush1.bf16.msra.mxu0 0
    %3077 = vmatprep.subr.bf16.mxu0 0
    %3078 = vmatpush1.bf16.msra.mxu0 0
    %3079 = vmatprep.subr.bf16.mxu0 0
    %3080 = vmatpush1.bf16.msra.mxu0 0
    %3081 = vmatprep.subr.bf16.mxu0 0
    %3082 = vmatpush1.bf16.msra.mxu0 0
    %3083 = vmatprep.subr.bf16.mxu0 0
    %3084 = vmatpush1.bf16.msra.mxu0 0
    %3085 = vmatprep.mubr.bf16.mxu0 0
    %3086 = vmatmul.mubr.bf16.gmra.mrb[0].mxu0 %v2988
    %v3087 = vpop.f32.mrb[0].mxu0
    %v3088 = vadd.f32 0.0, %v3087
    %v3089 = vpop.f32.mrb[0].mxu0
    %v3090 = vpop.f32.mrb[0].mxu0
    %v3091 = vpop.f32.mrb[0].mxu0
    %3092 = vdwg.mxu0
    %v3109 = vunpack.c.l.b16 %v2972
    %v3110 = vunpack.c.l.b16 %v2973
    %v3111 = vunpack.c.l.b16 %v2974
    %v3112 = vunpack.c.l.b16 %v2975
    %v3113 = vunpack.c.l.b16 %v2976
    %v3114 = vunpack.c.l.b16 %v2977
    %v3115 = vunpack.c.l.b16 %v2978
    %v3116 = vunpack.c.l.b16 %v2979
    %v3117 = vunpack.c.l.b16 %v2980
    %v3118 = vunpack.c.l.b16 %v2981
    %v3119 = vunpack.c.l.b16 %v2982
    %v3120 = vunpack.c.l.b16 %v2983
    %v3121 = vunpack.c.l.b16 %v2984
    %v3122 = vunpack.c.l.b16 %v2985
    %v3123 = vunpack.c.l.b16 %v2986
    %v3124 = vunpack.c.l.b16 %v2987
    %v3125 = vpack.c.b16 %v3110, %v3109
    %v3126 = vpack.c.b16 %v3112, %v3111
    %v3127 = vpack.c.b16 %v3114, %v3113
    %v3128 = vpack.c.b16 %v3116, %v3115
    %v3129 = vpack.c.b16 %v3118, %v3117
    %v3130 = vpack.c.b16 %v3120, %v3119
    %v3131 = vpack.c.b16 %v3122, %v3121
    %v3132 = vpack.c.b16 %v3124, %v3123
    %3141 = vmatprep.subr.bf16.mxu0 0
    %3142 = vmatpush1.bf16.msra.mxu0 %v3125
    %3143 = vmatprep.subr.bf16.mxu0 0
    %3144 = vmatpush1.bf16.msra.mxu0 %v3126
    %3145 = vmatprep.subr.bf16.mxu0 0
    %3146 = vmatpush1.bf16.msra.mxu0 %v3127
    %3147 = vmatprep.subr.bf16.mxu0 0
    %3148 = vmatpush1.bf16.msra.mxu0 %v3128
    %3149 = vmatprep.subr.bf16.mxu0 0
    %3150 = vmatpush1.bf16.msra.mxu0 %v3129
    %3151 = vmatprep.subr.bf16.mxu0 0
    %3152 = vmatpush1.bf16.msra.mxu0 %v3130
    %3153 = vmatprep.subr.bf16.mxu0 0
    %3154 = vmatpush1.bf16.msra.mxu0 %v3131
    %3155 = vmatprep.subr.bf16.mxu0 0
    %3156 = vmatpush1.bf16.msra.mxu0 %v3132
    %3157 = vmatprep.subr.bf16.mxu0 0
    %3158 = vmatpush1.bf16.msra.mxu0 0
    %3159 = vmatprep.subr.bf16.mxu0 0
    %3160 = vmatpush1.bf16.msra.mxu0 0
    %3161 = vmatprep.subr.bf16.mxu0 0
    %3162 = vmatpush1.bf16.msra.mxu0 0
    %3163 = vmatprep.subr.bf16.mxu0 0
    %3164 = vmatpush1.bf16.msra.mxu0 0
    %3165 = vmatprep.subr.bf16.mxu0 0
    %3166 = vmatpush1.bf16.msra.mxu0 0
    %3167 = vmatprep.subr.bf16.mxu0 0
    %3168 = vmatpush1.bf16.msra.mxu0 0
    %3169 = vmatprep.subr.bf16.mxu0 0
    %3170 = vmatpush1.bf16.msra.mxu0 0
    %3171 = vmatprep.subr.bf16.mxu0 0
    %3172 = vmatpush1.bf16.msra.mxu0 0
    %3173 = vmatprep.mubr.bf16.mxu0 0
    %3174 = vmatmul.mubr.bf16.gmra.mrb[0].mxu0 %v2971
    %v3175 = vpop.f32.mrb[0].mxu0
    %v3176 = vadd.f32 %v3088, %v3175
    %v3177 = vpop.f32.mrb[0].mxu0
    %v3178 = vpop.f32.mrb[0].mxu0
    %v3179 = vpop.f32.mrb[0].mxu0
    %3180 = vdwg.mxu0
    %v3181 = vld [vmem:[%s9] sm:$0x1]
    %v3183 = vlaneseq
    %v3184 = vshrl.u32 %v3183, 7
    %v3185 = vsub.s32 0, %v3184
    %v3186 = vrot.slane %v3181, %v3185
    %v3188 = vadd.f32 %v3176, %v3186
    %v3189 = vmax.f32 %v3188, 0.0
    %v3190 = vpack.c.bf16 %v3189, %v3189
    %v3191 = vld [vmem:[%s10] sm:$0xf]
    %v3192 = vld [vmem:[%s10 + $0x4] sm:$0xf]
    %v3193 = vld [vmem:[%s10 + $0x8] sm:$0xf]
    %v3194 = vld [vmem:[%s10 + $0xc] sm:$0xf]
    %v3195 = vld [vmem:[%s10 + $0x10] sm:$0xf]
    %v3196 = vld [vmem:[%s10 + $0x14] sm:$0xf]
    %v3197 = vld [vmem:[%s10 + $0x18] sm:$0xf]
    %v3198 = vld [vmem:[%s10 + $0x1c] sm:$0xf]
    %v3199 = vld [vmem:[%s10 + $0x20] sm:$0xf]
    %v3200 = vld [vmem:[%s10 + $0x24] sm:$0xf]
    %v3201 = vld [vmem:[%s10 + $0x28] sm:$0xf]
    %v3202 = vld [vmem:[%s10 + $0x2c] sm:$0xf]
    %v3203 = vld [vmem:[%s10 + $0x30] sm:$0xf]
    %v3204 = vld [vmem:[%s10 + $0x34] sm:$0xf]
    %v3205 = vld [vmem:[%s10 + $0x38] sm:$0xf]
    %v3206 = vld [vmem:[%s10 + $0x3c] sm:$0xf]
    %v3207 = vld [vmem:[%s11] sm:$0x1]
    %v3209 = vlaneseq
    %v3210 = vshrl.u32 %v3209, 7
    %v3211 = vsub.s32 0, %v3210
    %v3212 = vrot.slane %v3207, %v3211
    %v3230 = vunpack.c.l.b16 %v3191
    %v3231 = vunpack.c.l.b16 %v3192
    %v3232 = vunpack.c.l.b16 %v3193
    %v3233 = vunpack.c.l.b16 %v3194
    %v3234 = vunpack.c.l.b16 %v3195
    %v3235 = vunpack.c.l.b16 %v3196
    %v3236 = vunpack.c.l.b16 %v3197
    %v3237 = vunpack.c.l.b16 %v3198
    %v3238 = vunpack.c.l.b16 %v3199
    %v3239 = vunpack.c.l.b16 %v3200
    %v3240 = vunpack.c.l.b16 %v3201
    %v3241 = vunpack.c.l.b16 %v3202
    %v3242 = vunpack.c.l.b16 %v3203
    %v3243 = vunpack.c.l.b16 %v3204
    %v3244 = vunpack.c.l.b16 %v3205
    %v3245 = vunpack.c.l.b16 %v3206
    %v3246 = vpack.c.b16 %v3231, %v3230
    %v3247 = vpack.c.b16 %v3233, %v3232
    %v3248 = vpack.c.b16 %v3235, %v3234
    %v3249 = vpack.c.b16 %v3237, %v3236
    %v3250 = vpack.c.b16 %v3239, %v3238
    %v3251 = vpack.c.b16 %v3241, %v3240
    %v3252 = vpack.c.b16 %v3243, %v3242
    %v3253 = vpack.c.b16 %v3245, %v3244
    %3262 = vmatprep.subr.bf16.mxu0 0
    %3263 = vmatpush1.bf16.msra.mxu0 %v3246
    %3264 = vmatprep.subr.bf16.mxu0 0
    %3265 = vmatpush1.bf16.msra.mxu0 %v3247
    %3266 = vmatprep.subr.bf16.mxu0 0
    %3267 = vmatpush1.bf16.msra.mxu0 %v3248
    %3268 = vmatprep.subr.bf16.mxu0 0
    %3269 = vmatpush1.bf16.msra.mxu0 %v3249
    %3270 = vmatprep.subr.bf16.mxu0 0
    %3271 = vmatpush1.bf16.msra.mxu0 %v3250
    %3272 = vmatprep.subr.bf16.mxu0 0
    %3273 = vmatpush1.bf16.msra.mxu0 %v3251
    %3274 = vmatprep.subr.bf16.mxu0 0
    %3275 = vmatpush1.bf16.msra.mxu0 %v3252
    %3276 = vmatprep.subr.bf16.mxu0 0
    %3277 = vmatpush1.bf16.msra.mxu0 %v3253
    %3278 = vmatprep.subr.bf16.mxu0 0
    %3279 = vmatpush1.bf16.msra.mxu0 0
    %3280 = vmatprep.subr.bf16.mxu0 0
    %3281 = vmatpush1.bf16.msra.mxu0 0
    %3282 = vmatprep.subr.bf16.mxu0 0
    %3283 = vmatpush1.bf16.msra.mxu0 0
    %3284 = vmatprep.subr.bf16.mxu0 0
    %3285 = vmatpush1.bf16.msra.mxu0 0
    %3286 = vmatprep.subr.bf16.mxu0 0
    %3287 = vmatpush1.bf16.msra.mxu0 0
    %3288 = vmatprep.subr.bf16.mxu0 0
    %3289 = vmatpush1.bf16.msra.mxu0 0
    %3290 = vmatprep.subr.bf16.mxu0 0
    %3291 = vmatpush1.bf16.msra.mxu0 0
    %3292 = vmatprep.subr.bf16.mxu0 0
    %3293 = vmatpush1.bf16.msra.mxu0 0
    %3294 = vmatprep.mubr.bf16.mxu0 0
    %3295 = vmatmul.mubr.bf16.gmra.mrb[0].mxu0 %v3190
    %v3296 = vpop.f32.mrb[0].mxu0
    %v3297 = vadd.f32 %v3212, %v3296
    %v3298 = vpop.f32.mrb[0].mxu0
    %v3299 = vpop.f32.mrb[0].mxu0
    %v3300 = vpop.f32.mrb[0].mxu0
    %3301 = vdwg.mxu0
    %v3302 = vadd.f32 %v1496, %v3297
    %v3303 = vsub.f32 %v3302, %v2966
    %v3304 = vmul.f32 %v3303, %v3303
    %vm3305 = vcmask 1041408
    %v3306 = vsel %vm3305, %v3304, 0.0
    %3307 = vadd.xlane.f32.xlu0 %v3306
    %v3308 = vpop.xlane.xlu0 %3307
    %vm3309 = vcmask 1024
    %3310 = vst.msk [vmem:[%s12] sm:$0x3] %vm3309, %v3308
    %vm3313 = vcmask 1045504
    %v3314 = vrot.slane %v1496, 2
    %v3315 = vrot.slane %v1499, 2
    %v3316 = vsel %vm3313, %v3314, %v3315
    %3318 = vmatprep.subr.mxu0 0.0
    %3319 = vmatpush1.xpose.msra.mxu0 %v3316
    %3320 = vmatprep.subr.mxu0 0.0
    %3321 = vmatpush1.xpose.msra.mxu0 0.0
    %3322 = vmatprep.subr.mxu0 0.0
    %3323 = vmatpush1.xpose.msra.mxu0 0.0
    %3324 = vmatprep.subr.mxu0 0.0
    %3325 = vmatpush1.xpose.msra.mxu0 0.0
    %3326 = vmatprep.subr.mxu0 0.0
    %3327 = vmatpush1.xpose.msra.mxu0 0.0
    %3328 = vmatprep.subr.mxu0 0.0
    %3329 = vmatpush1.xpose.msra.mxu0 0.0
    %3330 = vmatprep.subr.mxu0 0.0
    %3331 = vmatpush1.xpose.msra.mxu0 0.0
    %3332 = vmatprep.subr.mxu0 0.0
    %3333 = vmatpush1.xpose.msra.mxu0 0.0
    %3334 = vmatprep.subr.mxu0 0.0
    %3335 = vmatpush1.xpose.msra.mxu0 0.0
    %3336 = vmatprep.subr.mxu0 0.0
    %3337 = vmatpush1.xpose.msra.mxu0 0.0
    %3338 = vmatprep.subr.mxu0 0.0
    %3339 = vmatpush1.xpose.msra.mxu0 0.0
    %3340 = vmatprep.subr.mxu0 0.0
    %3341 = vmatpush1.xpose.msra.mxu0 0.0
    %3342 = vmatprep.subr.mxu0 0.0
    %3343 = vmatpush1.xpose.msra.mxu0 0.0
    %3344 = vmatprep.subr.mxu0 0.0
    %3345 = vmatpush1.xpose.msra.mxu0 0.0
    %3346 = vmatprep.subr.mxu0 0.0
    %3347 = vmatpush1.xpose.msra.mxu0 0.0
    %3348 = vmatprep.subr.mxu0 0.0
    %3349 = vmatpush1.xpose.msra.mxu0 0.0
    %3350 = vmatprep.subr.mxu0 0.0
    %3351 = vmatpush1.xpose.msra.mxu0 0.0
    %3352 = vmatprep.subr.mxu0 0.0
    %3353 = vmatpush1.xpose.msra.mxu0 0.0
    %3354 = vmatprep.subr.mxu0 0.0
    %3355 = vmatpush1.xpose.msra.mxu0 0.0
    %3356 = vmatprep.subr.mxu0 0.0
    %3357 = vmatpush1.xpose.msra.mxu0 0.0
    %3358 = vmatprep.subr.mxu0 0.0
    %3359 = vmatpush1.xpose.msra.mxu0 0.0
    %3360 = vmatprep.subr.mxu0 0.0
    %3361 = vmatpush1.xpose.msra.mxu0 0.0
    %3362 = vmatprep.subr.mxu0 0.0
    %3363 = vmatpush1.xpose.msra.mxu0 0.0
    %3364 = vmatprep.subr.mxu0 0.0
    %3365 = vmatpush1.xpose.msra.mxu0 0.0
    %3366 = vmatprep.subr.mxu0 0.0
    %3367 = vmatpush1.xpose.msra.mxu0 0.0
    %3368 = vmatprep.subr.mxu0 0.0
    %3369 = vmatpush1.xpose.msra.mxu0 0.0
    %3370 = vmatprep.subr.mxu0 0.0
    %3371 = vmatpush1.xpose.msra.mxu0 0.0
    %3372 = vmatprep.subr.mxu0 0.0
    %3373 = vmatpush1.xpose.msra.mxu0 0.0
    %3374 = vmatprep.subr.mxu0 0.0
    %3375 = vmatpush1.xpose.msra.mxu0 0.0
    %3376 = vmatprep.subr.mxu0 0.0
    %3377 = vmatpush1.xpose.msra.mxu0 0.0
    %3378 = vmatprep.subr.mxu0 0.0
    %3379 = vmatpush1.xpose.msra.mxu0 0.0
    %3380 = vmatprep.subr.mxu0 0.0
    %3381 = vmatpush1.xpose.msra.mxu0 0.0
    %3382 = vmatprep.mubr.f32.mxu0 0.0
    %3383 = vmatmul.mubr.f32.gmra.mrb[0].mxu0 %v1496
    %v3384 = vpop.f32.mrb[0].mxu0
    %v3385 = vadd.f32 0.0, %v3384
    %v3386 = vpop.f32.mrb[0].mxu0
    %3387 = vdwg.mxu0
    %v3388 = vmul.f32 %v1496, %v1496
    %v3389 = vsel %vm3305, %v3388, 0.0
    %3390 = vadd.xlane.f32.xlu0 %v3389
    %v3391 = vpop.xlane.xlu0 %3390
    %v3392 = vmul.f32 %v1499, %v1499
    %v3395 = vrot.slane %v3388, 2
    %v3396 = vrot.slane %v3392, 2
    %v3397 = vsel %vm3313, %v3395, %v3396
    %3399 = vmatprep.subr.mxu0 0.0
    %3400 = vmatpush1.xpose.msra.mxu0 %v3397
    %3401 = vmatprep.subr.mxu0 0.0
    %3402 = vmatpush1.xpose.msra.mxu0 0.0
    %3403 = vmatprep.subr.mxu0 0.0
    %3404 = vmatpush1.xpose.msra.mxu0 0.0
    %3405 = vmatprep.subr.mxu0 0.0
    %3406 = vmatpush1.xpose.msra.mxu0 0.0
    %3407 = vmatprep.subr.mxu0 0.0
    %3408 = vmatpush1.xpose.msra.mxu0 0.0
    %3409 = vmatprep.subr.mxu0 0.0
    %3410 = vmatpush1.xpose.msra.mxu0 0.0
    %3411 = vmatprep.subr.mxu0 0.0
    %3412 = vmatpush1.xpose.msra.mxu0 0.0
    %3413 = vmatprep.subr.mxu0 0.0
    %3414 = vmatpush1.xpose.msra.mxu0 0.0
    %3415 = vmatprep.subr.mxu0 0.0
    %3416 = vmatpush1.xpose.msra.mxu0 0.0
    %3417 = vmatprep.subr.mxu0 0.0
    %3418 = vmatpush1.xpose.msra.mxu0 0.0
    %3419 = vmatprep.subr.mxu0 0.0
    %3420 = vmatpush1.xpose.msra.mxu0 0.0
    %3421 = vmatprep.subr.mxu0 0.0
    %3422 = vmatpush1.xpose.msra.mxu0 0.0
    %3423 = vmatprep.subr.mxu0 0.0
    %3424 = vmatpush1.xpose.msra.mxu0 0.0
    %3425 = vmatprep.subr.mxu0 0.0
    %3426 = vmatpush1.xpose.msra.mxu0 0.0
    %3427 = vmatprep.subr.mxu0 0.0
    %3428 = vmatpush1.xpose.msra.mxu0 0.0
    %3429 = vmatprep.subr.mxu0 0.0
    %3430 = vmatpush1.xpose.msra.mxu0 0.0
    %3431 = vmatprep.subr.mxu0 0.0
    %3432 = vmatpush1.xpose.msra.mxu0 0.0
    %3433 = vmatprep.subr.mxu0 0.0
    %3434 = vmatpush1.xpose.msra.mxu0 0.0
    %3435 = vmatprep.subr.mxu0 0.0
    %3436 = vmatpush1.xpose.msra.mxu0 0.0
    %3437 = vmatprep.subr.mxu0 0.0
    %3438 = vmatpush1.xpose.msra.mxu0 0.0
    %3439 = vmatprep.subr.mxu0 0.0
    %3440 = vmatpush1.xpose.msra.mxu0 0.0
    %3441 = vmatprep.subr.mxu0 0.0
    %3442 = vmatpush1.xpose.msra.mxu0 0.0
    %3443 = vmatprep.subr.mxu0 0.0
    %3444 = vmatpush1.xpose.msra.mxu0 0.0
    %3445 = vmatprep.subr.mxu0 0.0
    %3446 = vmatpush1.xpose.msra.mxu0 0.0
    %3447 = vmatprep.subr.mxu0 0.0
    %3448 = vmatpush1.xpose.msra.mxu0 0.0
    %3449 = vmatprep.subr.mxu0 0.0
    %3450 = vmatpush1.xpose.msra.mxu0 0.0
    %3451 = vmatprep.subr.mxu0 0.0
    %3452 = vmatpush1.xpose.msra.mxu0 0.0
    %3453 = vmatprep.subr.mxu0 0.0
    %3454 = vmatpush1.xpose.msra.mxu0 0.0
    %3455 = vmatprep.subr.mxu0 0.0
    %3456 = vmatpush1.xpose.msra.mxu0 0.0
    %3457 = vmatprep.subr.mxu0 0.0
    %3458 = vmatpush1.xpose.msra.mxu0 0.0
    %3459 = vmatprep.subr.mxu0 0.0
    %3460 = vmatpush1.xpose.msra.mxu0 0.0
    %3461 = vmatprep.subr.mxu0 0.0
    %3462 = vmatpush1.xpose.msra.mxu0 0.0
    %3463 = vmatprep.mubr.f32.mxu0 0.0
    %3464 = vmatmul.mubr.f32.gmra.mrb[0].mxu0 1.0
    %v3465 = vpop.f32.mrb[0].mxu0
    %v3466 = vadd.f32 0.0, %v3465
    %v3467 = vpop.f32.mrb[0].mxu0
    %3468 = vdwg.mxu0
    %v3469 = vlaneseq
    %v3470 = vshrl.u32 %v3469, 7
    %v3471 = vsub.s32 0, %v3470
    %v3472 = vrot.slane %v3466, %v3471
    %v3473 = vadd.f32 %v3391, %v3472
    %v3474 = vmul.f32 %v3385, 2.0
    %v3475 = vsub.f32 %v3473, %v3474
    %v3476 = vsub.f32 1.0, %v3475
    %v3477 = vmax.f32 %v3476, 0.0
    %vm3478 = vcmask 58368
    %v3479 = vsel %vm3478, %v3477, 0.0
    %3480 = vadd.xlane.f32.xlu0 %v3479
    %v3481 = vpop.xlane.xlu0 %3480
    %v3482 = vrcp.pop 8.0
    %v3483 = vmul.f32 %v3481, %v3482
    %v3484 = vsub.f32 %v1496, %v2966
    %v3485 = vmul.f32 %v3484, %v3484
    %v3486 = vsel %vm3305, %v3485, 0.0
    %3487 = vadd.xlane.f32.xlu0 %v3486
    %v3488 = vpop.xlane.xlu0 %3487
    %v3489 = vsub.f32 %v3488, 1.0
    %v3490 = vmax.f32 %v3489, 0.0
    %v3491 = vadd.f32 %v3483, %v3490
    %v3492 = vsel %vm3309, %v3491, 0.0
    %3493 = vadd.xlane.f32.xlu0 %v3492
    %v3494 = vpop.xlane.xlu0 %3493
    %v3495 = vrot.slane %v3494, 4
    %v3496 = vadd.f32 %v3494, %v3495
    %v3497 = vrot.slane %v3496, 2
    %v3498 = vadd.f32 %v3496, %v3497
    %v3499 = vrot.slane %v3498, 1
    %v3500 = vadd.f32 %v3498, %v3499
    %s3501 = vtos %v3500
    %v3502 = vstv %s3501
    %v3503 = vrcp.pop 2.0
    %v3504 = vmul.f32 %v3502, %v3503
    %vm3505 = vcmask 0
    %3506 = vst.msk [vmem:[#allocation4] sm:$0x1] %vm3505, %v3504
    %v3507 = vadd.f32 %v3308, %v3504
    %v3508 = vsel %vm3309, %v3507, 0.0
    %3509 = vadd.xlane.f32.xlu0 %v3508
    %v3510 = vpop.xlane.xlu0 %3509
    %v3511 = vrot.slane %v3510, 4
    %v3512 = vadd.f32 %v3510, %v3511
    %v3513 = vrot.slane %v3512, 2
    %v3514 = vadd.f32 %v3512, %v3513
    %v3515 = vrot.slane %v3514, 1
    %v3516 = vadd.f32 %v3514, %v3515
    %s3517 = vtos %v3516
    %v3518 = vstv %s3517
    %v3519 = vmul.f32 %v3518, %v3503
    %3520 = vst.msk [vmem:[#allocation2] sm:$0x1] %vm3505, %v3519
    // Predicated region
    $region50: #{dcefm_forward.5} parent=1 // pred_check
      _
    $region51: #{dcefm_forward.5} parent=1 // pred_check_branch
      %3522 = sbr.rel (0) target = $region53
    $region52: #{dcefm_forward.5} parent=1 // pred_region
      _
    $region53: #{dcefm_forward.5} parent=1 // pred_fallthru
      _
    // Predicated region
    $region54: #{dcefm_forward.5} parent=1 // pred_check
      _
    $region55: #{dcefm_forward.5} parent=1 // pred_check_branch
      %3524 = sbr.rel (0) target = $region57
    $region56: #{dcefm_forward.5} parent=1 // pred_region
      %s3526 = ssub.s32 16, 16
      %3527 = vsyncadd [#allocation3], %s3526
      %s3529 = sshll.u32 [#allocation2], 4
      %s3530 = int_to_ptr.vmem [resolvable:$true] %s3529
      %3532 = dma.vmem_to_hbm [thread:$0]  %s3530, 16, %s13, [#allocation3]
    $region57: #{dcefm_forward.5} parent=1 // pred_fallthru
      _
    // Predicated region
    $region58: #{dcefm_forward.5} parent=1 // pred_check
      _
    $region59: #{dcefm_forward.5} parent=1 // pred_check_branch
      %3534 = sbr.rel (0) target = $region61
    $region60: #{dcefm_forward.5} parent=1 // pred_region
      %s3536 = ssub.s32 16, 16
      %3537 = vsyncadd [#allocation5], %s3536
      %s3539 = sshll.u32 [#allocation4], 4
      %s3540 = int_to_ptr.vmem [resolvable:$true] %s3539
      %3542 = dma.vmem_to_hbm [thread:$0]  %s3540, 16, %s14, [#allocation5]
    $region61: #{dcefm_forward.5} parent=1 // pred_fallthru
      _
    // Predicated region
    $region62: #{dcefm_forward.5} parent=1 // pred_check
      _
    $region63: #{dcefm_forward.5} parent=1 // pred_check_branch
      %3544 = sbr.rel (0) target = $region65
    $region64: #{dcefm_forward.5} parent=1 // pred_region
      _
    $region65: #{dcefm_forward.5} parent=1 // pred_fallthru
      _
    // Predicated region
    $region66: #{dcefm_forward.5} parent=1 // pred_check
      _
    $region67: #{dcefm_forward.5} parent=1 // pred_check_branch
      %3546 = sbr.rel (0) target = $region69
    $region68: #{dcefm_forward.5} parent=1 // pred_region
      %3547 = dma.done [#allocation3], 16
    $region69: #{dcefm_forward.5} parent=1 // pred_fallthru
      _
    // Predicated region
    $region70: #{dcefm_forward.5} parent=1 // pred_check
      _
    $region71: #{dcefm_forward.5} parent=1 // pred_check_branch
      %3549 = sbr.rel (0) target = $region73
    $region72: #{dcefm_forward.5} parent=1 // pred_region
      %3550 = dma.done [#allocation5], 16
    $region73: #{dcefm_forward.5} parent=1 // pred_fallthru
      _
    %3551 = vsyncpa [#allocation3], 1
    %3552 = vsyncpa [#allocation5], 1

</llo_original>
